<compile_context>
chip_gen: v7x
topology: tpu7x:2x2x1
jax: 0.10.0
libtpu: 0.0.40
codegen_flags: <defaults>
</compile_context>

<pallas_src>
import jax
import jax.numpy as jnp
import numpy as np
from jax.experimental import pallas as pl
from jax.experimental.pallas import tpu as pltpu


# Architecture constants of the concrete backbone.
_C_IN, _C1, _C2, _NUM_CLASSES = 3, 16, 32, 8
_H_IN = _W_IN = 16            # input spatial
_H1 = _W1 = 8                 # after stem conv (stride 2)
_H2 = _W2 = 4                 # after block conv (stride 2)

_K1 = _C_IN * _H_IN * _W_IN   # 768  : flattened NCHW input per sample
_N1 = _H1 * _W1 * _C1         # 1024 : conv1 activation, (oy, ox, c) flattened
_N2 = _H2 * _W2 * _C2         # 512  : conv2 activation, (oy, ox, c) flattened

_BATCH_TILE = 8               # fixed per-grid-step batch tile


# ----------------------------------------------------------------------------
# Fused Pallas kernel: conv1+BN+ReLU -> conv2+BN+ReLU -> GAP+classifier
# ----------------------------------------------------------------------------
def _fused_forward_kernel(x_ref, w1_ref, b12_ref, w2_ref, wf_ref, bf_ref, o_ref):
    """Whole forward for one batch tile: three MXU dots, two bias+ReLU.

    x_ref  : (BT, 768)   raw NCHW input, flattened per sample
    w1_ref : (768, 1024) conv1-as-matmul scatter matrix (BN1 scale folded in)
    b12_ref: (2, 1024)   row 0 = tiled BN1 shift, row 1[:512] = tiled BN2 shift
    w2_ref : (1024, 512) conv2-as-matmul scatter matrix (BN2 scale folded in)
    wf_ref : (512, 8)    classifier weights tiled over spatial / 16 (GAP folded)
    bf_ref : (1, 8)      classifier bias
    o_ref  : (BT, 8)     logits (only HBM store of the forward)
    """
    f32 = jnp.float32

    # conv1 + BN1 + ReLU : single MXU dot.
    h1 = jnp.dot(x_ref[...], w1_ref[...], preferred_element_type=f32)
    h1 = jnp.maximum(h1 + b12_ref[0:1, :], 0.0)                  # (BT, 1024)

    # conv2 + BN2 + ReLU : single MXU dot.
    h2 = jnp.dot(h1, w2_ref[...], preferred_element_type=f32)
    h2 = jnp.maximum(h2 + b12_ref[1:2, :_N2], 0.0)               # (BT, 512)

    # Global-average-pool + classifier folded into one dot.
    o_ref[...] = (jnp.dot(h2, wf_ref[...], preferred_element_type=f32)
                  + bf_ref[...])


# ----------------------------------------------------------------------------
# One-time parameter preparation (weight folding; not part of the forward)
# ----------------------------------------------------------------------------
def _conv_as_matmul(w_hwio, h_in, w_in, stride, pad, out_scale, in_layout):
    """Dense matrix M such that flatten(conv(x)) = flatten(x) @ M.

    Output columns are flattened (oy, ox, co); a per-output-channel scale
    (folded BN) is baked into the columns.  `in_layout` selects whether the
    K axis is flattened (c, h, w) [raw NCHW input] or (h, w, c) [previous
    activation's column order].
    """
    w = np.asarray(w_hwio, np.float32)
    kh, kw, cin, cout = w.shape
    w = w * np.asarray(out_scale, np.float32)[None, None, None, :]
    h_out = (h_in + 2 * pad - kh) // stride + 1
    w_out = (w_in + 2 * pad - kw) // stride + 1
    m = np.zeros((cin * h_in * w_in, h_out * w_out * cout), np.float32)
    for oy in range(h_out):
        for ox in range(w_out):
            col0 = (oy * w_out + ox) * cout
            for i in range(kh):
                iy = stride * oy + i - pad
                if not 0 <= iy < h_in:
                    continue
                for j in range(kw):
                    ix = stride * ox + j - pad
                    if not 0 <= ix < w_in:
                        continue
                    for ci in range(cin):
                        if in_layout == "chw":
                            k = (ci * h_in + iy) * w_in + ix
                        else:  # "hwc"
                            k = (iy * w_in + ix) * cin + ci
                        m[k, col0:col0 + cout] = w[i, j, ci, :]
    return m


def prepare_kernel_params(params):
    """Fold convs, BN and GAP into matmul operands (done once)."""
    w1f = _conv_as_matmul(params["w1"], _H_IN, _W_IN, 2, 1,
                          params["bn1_scale"], "chw")            # (768, 1024)
    w2f = _conv_as_matmul(params["w2"], _H1, _W1, 2, 1,
                          params["bn2_scale"], "hwc")            # (1024, 512)

    b12 = np.zeros((2, _N1), np.float32)
    b12[0, :] = np.tile(np.asarray(params["bn1_shift"], np.float32), _H1 * _W1)
    b12[1, :_N2] = np.tile(np.asarray(params["bn2_shift"], np.float32), _H2 * _W2)

    wfe = np.tile(np.asarray(params["wf"], np.float32),
                  (_H2 * _W2, 1)) / float(_H2 * _W2)             # (512, 8)
    bf = np.asarray(params["bf"], np.float32).reshape(1, _NUM_CLASSES)

    return {"w1f": jnp.asarray(w1f), "w2f": jnp.asarray(w2f),
            "b12": jnp.asarray(b12), "wfe": jnp.asarray(wfe),
            "bf": jnp.asarray(bf)}


# ----------------------------------------------------------------------------
# Forward wrapper (only a free reshape + batch pad on the wrapper side)
# ----------------------------------------------------------------------------
@jax.jit
def timm_module_forward(kparams, x_nchw):
    """Equivalent of TimmModule.forward: x = self.model(x)."""
    n = x_nchw.shape[0]
    x_flat = x_nchw.reshape(n, _K1)                   # contiguous NCHW flatten
    n_pad = ((n + _BATCH_TILE - 1) // _BATCH_TILE) * _BATCH_TILE
    if n_pad != n:
        x_flat = jnp.pad(x_flat, ((0, n_pad - n), (0, 0)))

    out = pl.pallas_call(
        _fused_forward_kernel,
        out_shape=jax.ShapeDtypeStruct((n_pad, _NUM_CLASSES), jnp.float32),
        grid=(n_pad // _BATCH_TILE,),
        in_specs=[
            pl.BlockSpec((_BATCH_TILE, _K1), lambda i: (i, 0)),
            pl.BlockSpec((_K1, _N1), lambda i: (0, 0)),
            pl.BlockSpec((2, _N1), lambda i: (0, 0)),
            pl.BlockSpec((_N1, _N2), lambda i: (0, 0)),
            pl.BlockSpec((_N2, _NUM_CLASSES), lambda i: (0, 0)),
            pl.BlockSpec((1, _NUM_CLASSES), lambda i: (0, 0)),
        ],
        out_specs=pl.BlockSpec((_BATCH_TILE, _NUM_CLASSES), lambda i: (i, 0)),
        compiler_params=pltpu.CompilerParams(
            dimension_semantics=("parallel",),
            vmem_limit_bytes=32 * 1024 * 1024),
    )(x_flat, kparams["w1f"], kparams["b12"], kparams["w2f"],
      kparams["wfe"], kparams["bf"])
    return out[:n]


# ----------------------------------------------------------------------------
# Deterministic parameters + pure-JAX reference
# ----------------------------------------------------------------------------
def make_params():
    key = jax.random.PRNGKey(0)
    k1, k2, k3 = jax.random.split(key, 3)
    p = {}
    p["w1"] = 0.1 * jax.random.normal(k1, (3, 3, _C_IN, _C1), jnp.float32)   # HWIO
    p["w2"] = 0.1 * jax.random.normal(k2, (3, 3, _C1, _C2), jnp.float32)     # HWIO
    p["wf"] = 0.1 * jax.random.normal(k3, (_C2, _NUM_CLASSES), jnp.float32)
    p["bf"] = 0.05 * jnp.arange(_NUM_CLASSES, dtype=jnp.float32)

    def bn_fold(c):
        gamma = 1.0 + 0.01 * jnp.arange(c, dtype=jnp.float32)
        beta = 0.02 * jnp.arange(c, dtype=jnp.float32)
        mean = 0.01 * jnp.arange(c, dtype=jnp.float32)
        var = 1.0 + 0.05 * jnp.arange(c, dtype=jnp.float32)
        scale = gamma / jnp.sqrt(var + 1e-5)
        return scale, beta - mean * scale

    p["bn1_scale"], p["bn1_shift"] = bn_fold(_C1)
    p["bn2_scale"], p["bn2_shift"] = bn_fold(_C2)
    return p


def reference_forward(params, x_nchw):
    x = jnp.transpose(x_nchw, (0, 2, 3, 1))          # NCHW -> NHWC

    def cbr(x, w, s, b):
        y = jax.lax.conv_general_dilated(
            x, w, window_strides=(2, 2), padding=((1, 1), (1, 1)),
            dimension_numbers=("NHWC", "HWIO", "NHWC"))
        return jnp.maximum(y * s + b, 0.0)

    x = cbr(x, params["w1"], params["bn1_scale"], params["bn1_shift"])
    x = cbr(x, params["w2"], params["bn2_scale"], params["bn2_shift"])
    x = jnp.mean(x, axis=(1, 2))
    return x @ params["wf"] + params["bf"]


if __name__ == "__main__":
    params = make_params()
    kparams = prepare_kernel_params(params)
    x = jax.random.normal(jax.random.PRNGKey(0),
                          (2, _C_IN, _H_IN, _W_IN), jnp.float32)  # NCHW

    out = jax.block_until_ready(timm_module_forward(kparams, x))
    ref = jax.block_until_ready(reference_forward(params, x))

    np.testing.assert_allclose(np.asarray(out), np.asarray(ref),
                               rtol=1e-4, atol=1e-4)
    assert out.shape == (2, _NUM_CLASSES)
    print("KERNEL_OK")
</pallas_src>

<mosaic_0001>
module attributes {stable_mosaic.version = 11 : i64} {
  func.func @_fused_forward_kernel(%arg0: i32, %arg1: memref<8x768xf32, #tpu.memory_space<vmem>>, %arg2: memref<768x1024xf32, #tpu.memory_space<vmem>>, %arg3: memref<2x1024xf32, #tpu.memory_space<vmem>>, %arg4: memref<1024x512xf32, #tpu.memory_space<vmem>>, %arg5: memref<512x8xf32, #tpu.memory_space<vmem>>, %arg6: memref<1x8xf32, #tpu.memory_space<vmem>>, %arg7: memref<8x8xf32, #tpu.memory_space<vmem>>) attributes {dimension_semantics = [#tpu.dimension_semantics<parallel>], iteration_bounds = array<i64: 1>, scalar_prefetch = 0 : i64, scratch_operands = 0 : i64, tpu.core_type = #tpu.core_type<tc>, window_params = [{transform_indices = @transform_0, window_bounds = array<i64: 8, 768>}, {pipeline_mode = #tpu.pipeline_mode<synchronous>, transform_indices = @transform_1, window_bounds = array<i64: 768, 1024>}, {pipeline_mode = #tpu.pipeline_mode<synchronous>, transform_indices = @transform_2, window_bounds = array<i64: 2, 1024>}, {pipeline_mode = #tpu.pipeline_mode<synchronous>, transform_indices = @transform_3, window_bounds = array<i64: 1024, 512>}, {pipeline_mode = #tpu.pipeline_mode<synchronous>, transform_indices = @transform_4, window_bounds = array<i64: 512, 8>}, {pipeline_mode = #tpu.pipeline_mode<synchronous>, transform_indices = @transform_5, window_bounds = array<i64: 1, 8>}, {transform_indices = @transform_6, window_bounds = array<i64: 8, 8>}]} {
    %c0 = arith.constant 0 : index
    %c0_0 = arith.constant 0 : index
    %0 = vector.load %arg1[%c0, %c0_0] : memref<8x768xf32, #tpu.memory_space<vmem>>, vector<8x768xf32>
    %c0_1 = arith.constant 0 : index
    %c0_2 = arith.constant 0 : index
    %1 = vector.load %arg2[%c0_1, %c0_2] : memref<768x1024xf32, #tpu.memory_space<vmem>>, vector<768x1024xf32>
    %cst = arith.constant dense<0.000000e+00> : vector<8x1024xf32>
    %2 = tpu.matmul %0, %1, %cst {dimension_numbers = #tpu.dot_dimension_numbers<[1], [0], [0], [1], [0, 0, 1, 1], [], []>} : vector<8x768xf32>, vector<768x1024xf32>, vector<8x1024xf32> -> vector<8x1024xf32>
    %c0_3 = arith.constant 0 : index
    %c0_4 = arith.constant 0 : index
    %3 = vector.load %arg3[%c0_3, %c0_4] : memref<2x1024xf32, #tpu.memory_space<vmem>>, vector<1x1024xf32>
    %4 = vector.broadcast %3 : vector<1x1024xf32> to vector<8x1024xf32>
    %5 = arith.addf %2, %4 : vector<8x1024xf32>
    %cst_5 = arith.constant 0.000000e+00 : f32
    %6 = vector.broadcast %cst_5 : f32 to vector<8x1024xf32>
    %7 = arith.maximumf %5, %6 : vector<8x1024xf32>
    %c0_6 = arith.constant 0 : index
    %c0_7 = arith.constant 0 : index
    %8 = vector.load %arg4[%c0_6, %c0_7] : memref<1024x512xf32, #tpu.memory_space<vmem>>, vector<1024x512xf32>
    %cst_8 = arith.constant dense<0.000000e+00> : vector<8x512xf32>
    %9 = tpu.matmul %7, %8, %cst_8 {dimension_numbers = #tpu.dot_dimension_numbers<[1], [0], [0], [1], [0, 0, 1, 1], [], []>} : vector<8x1024xf32>, vector<1024x512xf32>, vector<8x512xf32> -> vector<8x512xf32>
    %c1 = arith.constant 1 : index
    %c0_9 = arith.constant 0 : index
    %10 = vector.load %arg3[%c1, %c0_9] : memref<2x1024xf32, #tpu.memory_space<vmem>>, vector<1x512xf32>
    %11 = vector.broadcast %10 : vector<1x512xf32> to vector<8x512xf32>
    %12 = arith.addf %9, %11 : vector<8x512xf32>
    %cst_10 = arith.constant 0.000000e+00 : f32
    %13 = vector.broadcast %cst_10 : f32 to vector<8x512xf32>
    %14 = arith.maximumf %12, %13 : vector<8x512xf32>
    %c0_11 = arith.constant 0 : index
    %c0_12 = arith.constant 0 : index
    %15 = vector.load %arg5[%c0_11, %c0_12] : memref<512x8xf32, #tpu.memory_space<vmem>>, vector<512x8xf32>
    %cst_13 = arith.constant dense<0.000000e+00> : vector<8x8xf32>
    %16 = tpu.matmul %14, %15, %cst_13 {dimension_numbers = #tpu.dot_dimension_numbers<[1], [0], [0], [1], [0, 0, 1, 1], [], []>} : vector<8x512xf32>, vector<512x8xf32>, vector<8x8xf32> -> vector<8x8xf32>
    %c0_14 = arith.constant 0 : index
    %c0_15 = arith.constant 0 : index
    %17 = vector.load %arg6[%c0_14, %c0_15] : memref<1x8xf32, #tpu.memory_space<vmem>>, vector<1x8xf32>
    %18 = vector.broadcast %17 : vector<1x8xf32> to vector<8x8xf32>
    %19 = arith.addf %16, %18 : vector<8x8xf32>
    %c0_16 = arith.constant 0 : index
    %c0_17 = arith.constant 0 : index
    %20 = vector.load %arg7[%c0_16, %c0_17] : memref<8x8xf32, #tpu.memory_space<vmem>>, vector<8x8xf32>
    tpu.vector_store %arg7[%c0_16, %c0_17], %19 {strides = array<i32>} : memref<8x8xf32, #tpu.memory_space<vmem>>, vector<8x8xf32>,
    return
  }
  func.func @transform_0(%arg0: i32) -> (i32, i32) {
    %c0_i32 = arith.constant 0 : i32
    %c0_i32_0 = arith.constant 0 : i32
    return %arg0, %c0_i32 : i32, i32
  }
  func.func @transform_1(%arg0: i32) -> (i32, i32) {
    %c0_i32 = arith.constant 0 : i32
    %c0_i32_0 = arith.constant 0 : i32
    %c0_i32_1 = arith.constant 0 : i32
    return %c0_i32, %c0_i32_0 : i32, i32
  }
  func.func @transform_2(%arg0: i32) -> (i32, i32) {
    %c0_i32 = arith.constant 0 : i32
    %c0_i32_0 = arith.constant 0 : i32
    %c0_i32_1 = arith.constant 0 : i32
    return %c0_i32, %c0_i32_0 : i32, i32
  }
  func.func @transform_3(%arg0: i32) -> (i32, i32) {
    %c0_i32 = arith.constant 0 : i32
    %c0_i32_0 = arith.constant 0 : i32
    %c0_i32_1 = arith.constant 0 : i32
    return %c0_i32, %c0_i32_0 : i32, i32
  }
  func.func @transform_4(%arg0: i32) -> (i32, i32) {
    %c0_i32 = arith.constant 0 : i32
    %c0_i32_0 = arith.constant 0 : i32
    %c0_i32_1 = arith.constant 0 : i32
    return %c0_i32, %c0_i32_0 : i32, i32
  }
  func.func @transform_5(%arg0: i32) -> (i32, i32) {
    %c0_i32 = arith.constant 0 : i32
    %c0_i32_0 = arith.constant 0 : i32
    %c0_i32_1 = arith.constant 0 : i32
    return %c0_i32, %c0_i32_0 : i32, i32
  }
  func.func @transform_6(%arg0: i32) -> (i32, i32) {
    %c0_i32 = arith.constant 0 : i32
    %c0_i32_0 = arith.constant 0 : i32
    return %arg0, %c0_i32 : i32, i32
  }
}

</mosaic_0001>

<llo_original>
// kernel: timm_module_forward.1
$region0: #{timm_module_forward.1}
  #allocation0 [shape = 'u32[]', space=smem, size = 0x4, offset = 0x4, fixed_abs, tag = 'smem constant byte address 0x4 - core index']
  #allocation1 [shape = 'u32[144,128]{1,0:T(1,128)}', space=vmem, size = 0x12000, scoped, tag = 'internal scratch']
  %s0 = inlined_call_operand.vmem [shape: f32[8,768], index: 0, kind: input, shape index: {}]
  %s1 = inlined_call_operand.hbm [shape: f32[768,1024], index: 1, kind: input, shape index: {}]
  %s2 = inlined_call_operand.hbm [shape: f32[2,1024], index: 2, kind: input, shape index: {}]
  %s3 = inlined_call_operand.hbm [shape: f32[1024,512], index: 3, kind: input, shape index: {}]
  %s4 = inlined_call_operand.vmem [shape: f32[512,8], index: 4, kind: input, shape index: {}]
  %s5 = inlined_call_operand.hbm [shape: f32[1,8], index: 5, kind: input, shape index: {}]
  %s6 = inlined_call_operand.vmem [shape: f32[8,8], index: 6, kind: output, shape index: {}]
  %s7 = sld [smem:[#allocation0]]
  $region50: #{timm_module_forward.1} parent=0
    _
  %s9 = ssub.s32 1, %s7
  %s10 = scalar_select 0, %s9, %s7
  $region1: #{timm_module_forward.1} parent=0
    #allocation2 [shape = 'u8[3145728]{0}', space=vmem, size = 0x300000, scoped, tag = 'input window, operand 1, single buffered']
    #allocation3 [shape = 's32[1]{0}', space=sflag, size = 0x4, scoped, tag = 'scoped memory for timm_module_forward.1']
    #allocation4 [shape = 'u8[8192]{0}', space=vmem, size = 0x2000, scoped, tag = 'input window, operand 2, single buffered']
    #allocation5 [shape = 's32[1]{0}', space=sflag, size = 0x4, scoped, tag = 'scoped memory for timm_module_forward.1']
    #allocation6 [shape = 'u8[2097152]{0}', space=vmem, size = 0x200000, scoped, tag = 'input window, operand 3, single buffered']
    #allocation7 [shape = 'u8[512]{0}', space=vmem, size = 0x400, scoped, tag = 'input window, operand 5, single buffered']
    #allocation8 [shape = 's32[1]{0}', space=sflag, size = 0x4, scoped, tag = 'scoped memory for timm_module_forward.1']
    %11 = vsyncpa [#allocation3], 0
    %12 = vsyncpa [#allocation5], 0
    %13 = vsyncpa [#allocation8], 0
    // Predicated region
    $region2: #{timm_module_forward.1} parent=1 // pred_check
      _
    $region3: #{timm_module_forward.1} parent=1 // pred_check_branch
      %15 = sbr.rel (0) target = $region5
    $region4: #{timm_module_forward.1} parent=1 // pred_region
      _
    $region5: #{timm_module_forward.1} parent=1 // pred_fallthru
      _
    // Predicated region
    $region6: #{timm_module_forward.1} parent=1 // pred_check
      _
    $region7: #{timm_module_forward.1} parent=1 // pred_check_branch
      %17 = sbr.rel (0) target = $region9
    $region8: #{timm_module_forward.1} parent=1 // pred_region
      %s19 = ssub.s32 98304, 98304
      %20 = vsyncadd [#allocation3], %s19
      %s21 = sshll.u32 [#allocation2], 4
      %s22 = int_to_ptr.vmem [resolvable:$true] %s21
      %27 = dma.hbm_to_vmem [thread:$0]  %s1, 98304, %s22, [#allocation3], 1024, 1024, 64
    $region9: #{timm_module_forward.1} parent=1 // pred_fallthru
      _
    // Predicated region
    $region10: #{timm_module_forward.1} parent=1 // pred_check
      _
    $region11: #{timm_module_forward.1} parent=1 // pred_check_branch
      %29 = sbr.rel (0) target = $region13
    $region12: #{timm_module_forward.1} parent=1 // pred_region
      %s31 = ssub.s32 256, 256
      %32 = vsyncadd [#allocation5], %s31
      %s34 = sshll.u32 [#allocation4], 4
      %s35 = int_to_ptr.vmem [resolvable:$true] %s34
      %37 = dma.hbm_to_vmem [thread:$0]  %s2, 256, %s35, [#allocation5]
    $region13: #{timm_module_forward.1} parent=1 // pred_fallthru
      _
    // Predicated region
    $region14: #{timm_module_forward.1} parent=1 // pred_check
      _
    $region15: #{timm_module_forward.1} parent=1 // pred_check_branch
      %39 = sbr.rel (0) target = $region17
    $region16: #{timm_module_forward.1} parent=1 // pred_region
      %s41 = ssub.s32 65536, 65536
      %42 = vsyncadd [#allocation5], %s41
      %s43 = sshll.u32 [#allocation6], 4
      %s44 = int_to_ptr.vmem [resolvable:$true] %s43
      %49 = dma.hbm_to_vmem [thread:$0]  %s3, 65536, %s44, [#allocation5], 512, 512, 32
    $region17: #{timm_module_forward.1} parent=1 // pred_fallthru
      _
    // Predicated region
    $region18: #{timm_module_forward.1} parent=1 // pred_check
      _
    $region19: #{timm_module_forward.1} parent=1 // pred_check_branch
      %51 = sbr.rel (0) target = $region21
    $region20: #{timm_module_forward.1} parent=1 // pred_region
      _
    $region21: #{timm_module_forward.1} parent=1 // pred_fallthru
      _
    // Predicated region
    $region22: #{timm_module_forward.1} parent=1 // pred_check
      _
    $region23: #{timm_module_forward.1} parent=1 // pred_check_branch
      %53 = sbr.rel (0) target = $region25
    $region24: #{timm_module_forward.1} parent=1 // pred_region
      %s55 = ssub.s32 16, 16
      %56 = vsyncadd [#allocation8], %s55
      %s58 = sshll.u32 [#allocation7], 4
      %s59 = int_to_ptr.vmem [resolvable:$true] %s58
      %61 = dma.hbm_to_vmem [thread:$0]  %s5, 16, %s59, [#allocation8]
    $region25: #{timm_module_forward.1} parent=1 // pred_fallthru
      _
    // Predicated region
    $region26: #{timm_module_forward.1} parent=1 // pred_check
      _
    $region27: #{timm_module_forward.1} parent=1 // pred_check_branch
      %63 = sbr.rel (0) target = $region29
    $region28: #{timm_module_forward.1} parent=1 // pred_region
      %64 = dma.done [#allocation3], 98304
    $region29: #{timm_module_forward.1} parent=1 // pred_fallthru
      _
    // Predicated region
    $region30: #{timm_module_forward.1} parent=1 // pred_check
      _
    $region31: #{timm_module_forward.1} parent=1 // pred_check_branch
      %66 = sbr.rel (0) target = $region33
    $region32: #{timm_module_forward.1} parent=1 // pred_region
      %67 = dma.done [#allocation5], 256
    $region33: #{timm_module_forward.1} parent=1 // pred_fallthru
      _
    // Predicated region
    $region34: #{timm_module_forward.1} parent=1 // pred_check
      _
    $region35: #{timm_module_forward.1} parent=1 // pred_check_branch
      %69 = sbr.rel (0) target = $region37
    $region36: #{timm_module_forward.1} parent=1 // pred_region
      %70 = dma.done [#allocation5], 65536
    $region37: #{timm_module_forward.1} parent=1 // pred_fallthru
      _
    // Predicated region
    $region38: #{timm_module_forward.1} parent=1 // pred_check
      _
    $region39: #{timm_module_forward.1} parent=1 // pred_check_branch
      %72 = sbr.rel (0) target = $region41
    $region40: #{timm_module_forward.1} parent=1 // pred_region
      %73 = dma.done [#allocation8], 16
    $region41: #{timm_module_forward.1} parent=1 // pred_fallthru
      _
    %v74 = vld [vmem:[%s0] sm:$0xff]
    %v75 = vld [vmem:[%s0 + $0x8] sm:$0xff]
    %v76 = vld [vmem:[%s0 + $0x10] sm:$0xff]
    %v77 = vld [vmem:[%s0 + $0x18] sm:$0xff]
    %v78 = vld [vmem:[%s0 + $0x20] sm:$0xff]
    %v79 = vld [vmem:[%s0 + $0x28] sm:$0xff]
    %v80 = vld [vmem:[#allocation2] sm:$0xff]
    %v81 = vld [vmem:[#allocation2 + $0x8] sm:$0xff]
    %v82 = vld [vmem:[#allocation2 + $0x10] sm:$0xff]
    %v83 = vld [vmem:[#allocation2 + $0x18] sm:$0xff]
    %v84 = vld [vmem:[#allocation2 + $0x20] sm:$0xff]
    %v85 = vld [vmem:[#allocation2 + $0x28] sm:$0xff]
    %v86 = vld [vmem:[#allocation2 + $0x30] sm:$0xff]
    %v87 = vld [vmem:[#allocation2 + $0x38] sm:$0xff]
    %v88 = vld [vmem:[#allocation2 + $0x40] sm:$0xff]
    %v89 = vld [vmem:[#allocation2 + $0x48] sm:$0xff]
    %v90 = vld [vmem:[#allocation2 + $0x50] sm:$0xff]
    %v91 = vld [vmem:[#allocation2 + $0x58] sm:$0xff]
    %v92 = vld [vmem:[#allocation2 + $0x60] sm:$0xff]
    %v93 = vld [vmem:[#allocation2 + $0x68] sm:$0xff]
    %v94 = vld [vmem:[#allocation2 + $0x70] sm:$0xff]
    %v95 = vld [vmem:[#allocation2 + $0x78] sm:$0xff]
    %v96 = vld [vmem:[#allocation2 + $0x80] sm:$0xff]
    %v97 = vld [vmem:[#allocation2 + $0x88] sm:$0xff]
    %v98 = vld [vmem:[#allocation2 + $0x90] sm:$0xff]
    %v99 = vld [vmem:[#allocation2 + $0x98] sm:$0xff]
    %v100 = vld [vmem:[#allocation2 + $0xa0] sm:$0xff]
    %v101 = vld [vmem:[#allocation2 + $0xa8] sm:$0xff]
    %v102 = vld [vmem:[#allocation2 + $0xb0] sm:$0xff]
    %v103 = vld [vmem:[#allocation2 + $0xb8] sm:$0xff]
    %v104 = vld [vmem:[#allocation2 + $0xc0] sm:$0xff]
    %v105 = vld [vmem:[#allocation2 + $0xc8] sm:$0xff]
    %v106 = vld [vmem:[#allocation2 + $0xd0] sm:$0xff]
    %v107 = vld [vmem:[#allocation2 + $0xd8] sm:$0xff]
    %v108 = vld [vmem:[#allocation2 + $0xe0] sm:$0xff]
    %v109 = vld [vmem:[#allocation2 + $0xe8] sm:$0xff]
    %v110 = vld [vmem:[#allocation2 + $0xf0] sm:$0xff]
    %v111 = vld [vmem:[#allocation2 + $0xf8] sm:$0xff]
    %v112 = vld [vmem:[#allocation2 + $0x100] sm:$0xff]
    %v113 = vld [vmem:[#allocation2 + $0x108] sm:$0xff]
    %v114 = vld [vmem:[#allocation2 + $0x110] sm:$0xff]
    %v115 = vld [vmem:[#allocation2 + $0x118] sm:$0xff]
    %v116 = vld [vmem:[#allocation2 + $0x120] sm:$0xff]
    %v117 = vld [vmem:[#allocation2 + $0x128] sm:$0xff]
    %v118 = vld [vmem:[#allocation2 + $0x130] sm:$0xff]
    %v119 = vld [vmem:[#allocation2 + $0x138] sm:$0xff]
    %v120 = vld [vmem:[#allocation2 + $0x140] sm:$0xff]
    %v121 = vld [vmem:[#allocation2 + $0x148] sm:$0xff]
    %v122 = vld [vmem:[#allocation2 + $0x150] sm:$0xff]
    %v123 = vld [vmem:[#allocation2 + $0x158] sm:$0xff]
    %v124 = vld [vmem:[#allocation2 + $0x160] sm:$0xff]
    %v125 = vld [vmem:[#allocation2 + $0x168] sm:$0xff]
    %v126 = vld [vmem:[#allocation2 + $0x170] sm:$0xff]
    %v127 = vld [vmem:[#allocation2 + $0x178] sm:$0xff]
    %v128 = vld [vmem:[#allocation2 + $0x180] sm:$0xff]
    %v129 = vld [vmem:[#allocation2 + $0x188] sm:$0xff]
    %v130 = vld [vmem:[#allocation2 + $0x190] sm:$0xff]
    %v131 = vld [vmem:[#allocation2 + $0x198] sm:$0xff]
    %v132 = vld [vmem:[#allocation2 + $0x1a0] sm:$0xff]
    %v133 = vld [vmem:[#allocation2 + $0x1a8] sm:$0xff]
    %v134 = vld [vmem:[#allocation2 + $0x1b0] sm:$0xff]
    %v135 = vld [vmem:[#allocation2 + $0x1b8] sm:$0xff]
    %v136 = vld [vmem:[#allocation2 + $0x1c0] sm:$0xff]
    %v137 = vld [vmem:[#allocation2 + $0x1c8] sm:$0xff]
    %v138 = vld [vmem:[#allocation2 + $0x1d0] sm:$0xff]
    %v139 = vld [vmem:[#allocation2 + $0x1d8] sm:$0xff]
    %v140 = vld [vmem:[#allocation2 + $0x1e0] sm:$0xff]
    %v141 = vld [vmem:[#allocation2 + $0x1e8] sm:$0xff]
    %v142 = vld [vmem:[#allocation2 + $0x1f0] sm:$0xff]
    %v143 = vld [vmem:[#allocation2 + $0x1f8] sm:$0xff]
    %v144 = vld [vmem:[#allocation2 + $0x200] sm:$0xff]
    %v145 = vld [vmem:[#allocation2 + $0x208] sm:$0xff]
    %v146 = vld [vmem:[#allocation2 + $0x210] sm:$0xff]
    %v147 = vld [vmem:[#allocation2 + $0x218] sm:$0xff]
    %v148 = vld [vmem:[#allocation2 + $0x220] sm:$0xff]
    %v149 = vld [vmem:[#allocation2 + $0x228] sm:$0xff]
    %v150 = vld [vmem:[#allocation2 + $0x230] sm:$0xff]
    %v151 = vld [vmem:[#allocation2 + $0x238] sm:$0xff]
    %v152 = vld [vmem:[#allocation2 + $0x240] sm:$0xff]
    %v153 = vld [vmem:[#allocation2 + $0x248] sm:$0xff]
    %v154 = vld [vmem:[#allocation2 + $0x250] sm:$0xff]
    %v155 = vld [vmem:[#allocation2 + $0x258] sm:$0xff]
    %v156 = vld [vmem:[#allocation2 + $0x260] sm:$0xff]
    %v157 = vld [vmem:[#allocation2 + $0x268] sm:$0xff]
    %v158 = vld [vmem:[#allocation2 + $0x270] sm:$0xff]
    %v159 = vld [vmem:[#allocation2 + $0x278] sm:$0xff]
    %v160 = vld [vmem:[#allocation2 + $0x280] sm:$0xff]
    %v161 = vld [vmem:[#allocation2 + $0x288] sm:$0xff]
    %v162 = vld [vmem:[#allocation2 + $0x290] sm:$0xff]
    %v163 = vld [vmem:[#allocation2 + $0x298] sm:$0xff]
    %v164 = vld [vmem:[#allocation2 + $0x2a0] sm:$0xff]
    %v165 = vld [vmem:[#allocation2 + $0x2a8] sm:$0xff]
    %v166 = vld [vmem:[#allocation2 + $0x2b0] sm:$0xff]
    %v167 = vld [vmem:[#allocation2 + $0x2b8] sm:$0xff]
    %v168 = vld [vmem:[#allocation2 + $0x2c0] sm:$0xff]
    %v169 = vld [vmem:[#allocation2 + $0x2c8] sm:$0xff]
    %v170 = vld [vmem:[#allocation2 + $0x2d0] sm:$0xff]
    %v171 = vld [vmem:[#allocation2 + $0x2d8] sm:$0xff]
    %v172 = vld [vmem:[#allocation2 + $0x2e0] sm:$0xff]
    %v173 = vld [vmem:[#allocation2 + $0x2e8] sm:$0xff]
    %v174 = vld [vmem:[#allocation2 + $0x2f0] sm:$0xff]
    %v175 = vld [vmem:[#allocation2 + $0x2f8] sm:$0xff]
    %v176 = vld [vmem:[#allocation2 + $0x300] sm:$0xff]
    %v177 = vld [vmem:[#allocation2 + $0x308] sm:$0xff]
    %v178 = vld [vmem:[#allocation2 + $0x310] sm:$0xff]
    %v179 = vld [vmem:[#allocation2 + $0x318] sm:$0xff]
    %v180 = vld [vmem:[#allocation2 + $0x320] sm:$0xff]
    %v181 = vld [vmem:[#allocation2 + $0x328] sm:$0xff]
    %v182 = vld [vmem:[#allocation2 + $0x330] sm:$0xff]
    %v183 = vld [vmem:[#allocation2 + $0x338] sm:$0xff]
    %v184 = vld [vmem:[#allocation2 + $0x340] sm:$0xff]
    %v185 = vld [vmem:[#allocation2 + $0x348] sm:$0xff]
    %v186 = vld [vmem:[#allocation2 + $0x350] sm:$0xff]
    %v187 = vld [vmem:[#allocation2 + $0x358] sm:$0xff]
    %v188 = vld [vmem:[#allocation2 + $0x360] sm:$0xff]
    %v189 = vld [vmem:[#allocation2 + $0x368] sm:$0xff]
    %v190 = vld [vmem:[#allocation2 + $0x370] sm:$0xff]
    %v191 = vld [vmem:[#allocation2 + $0x378] sm:$0xff]
    %v192 = vld [vmem:[#allocation2 + $0x380] sm:$0xff]
    %v193 = vld [vmem:[#allocation2 + $0x388] sm:$0xff]
    %v194 = vld [vmem:[#allocation2 + $0x390] sm:$0xff]
    %v195 = vld [vmem:[#allocation2 + $0x398] sm:$0xff]
    %v196 = vld [vmem:[#allocation2 + $0x3a0] sm:$0xff]
    %v197 = vld [vmem:[#allocation2 + $0x3a8] sm:$0xff]
    %v198 = vld [vmem:[#allocation2 + $0x3b0] sm:$0xff]
    %v199 = vld [vmem:[#allocation2 + $0x3b8] sm:$0xff]
    %v200 = vld [vmem:[#allocation2 + $0x3c0] sm:$0xff]
    %v201 = vld [vmem:[#allocation2 + $0x3c8] sm:$0xff]
    %v202 = vld [vmem:[#allocation2 + $0x3d0] sm:$0xff]
    %v203 = vld [vmem:[#allocation2 + $0x3d8] sm:$0xff]
    %v204 = vld [vmem:[#allocation2 + $0x3e0] sm:$0xff]
    %v205 = vld [vmem:[#allocation2 + $0x3e8] sm:$0xff]
    %v206 = vld [vmem:[#allocation2 + $0x3f0] sm:$0xff]
    %v207 = vld [vmem:[#allocation2 + $0x3f8] sm:$0xff]
    %v208 = vld [vmem:[#allocation2 + $0x400] sm:$0xff]
    %v209 = vld [vmem:[#allocation2 + $0x408] sm:$0xff]
    %v210 = vld [vmem:[#allocation2 + $0x410] sm:$0xff]
    %v211 = vld [vmem:[#allocation2 + $0x418] sm:$0xff]
    %v212 = vld [vmem:[#allocation2 + $0x420] sm:$0xff]
    %v213 = vld [vmem:[#allocation2 + $0x428] sm:$0xff]
    %v214 = vld [vmem:[#allocation2 + $0x430] sm:$0xff]
    %v215 = vld [vmem:[#allocation2 + $0x438] sm:$0xff]
    %v216 = vld [vmem:[#allocation2 + $0x440] sm:$0xff]
    %v217 = vld [vmem:[#allocation2 + $0x448] sm:$0xff]
    %v218 = vld [vmem:[#allocation2 + $0x450] sm:$0xff]
    %v219 = vld [vmem:[#allocation2 + $0x458] sm:$0xff]
    %v220 = vld [vmem:[#allocation2 + $0x460] sm:$0xff]
    %v221 = vld [vmem:[#allocation2 + $0x468] sm:$0xff]
    %v222 = vld [vmem:[#allocation2 + $0x470] sm:$0xff]
    %v223 = vld [vmem:[#allocation2 + $0x478] sm:$0xff]
    %v224 = vld [vmem:[#allocation2 + $0x480] sm:$0xff]
    %v225 = vld [vmem:[#allocation2 + $0x488] sm:$0xff]
    %v226 = vld [vmem:[#allocation2 + $0x490] sm:$0xff]
    %v227 = vld [vmem:[#allocation2 + $0x498] sm:$0xff]
    %v228 = vld [vmem:[#allocation2 + $0x4a0] sm:$0xff]
    %v229 = vld [vmem:[#allocation2 + $0x4a8] sm:$0xff]
    %v230 = vld [vmem:[#allocation2 + $0x4b0] sm:$0xff]
    %v231 = vld [vmem:[#allocation2 + $0x4b8] sm:$0xff]
    %v232 = vld [vmem:[#allocation2 + $0x4c0] sm:$0xff]
    %v233 = vld [vmem:[#allocation2 + $0x4c8] sm:$0xff]
    %v234 = vld [vmem:[#allocation2 + $0x4d0] sm:$0xff]
    %v235 = vld [vmem:[#allocation2 + $0x4d8] sm:$0xff]
    %v236 = vld [vmem:[#allocation2 + $0x4e0] sm:$0xff]
    %v237 = vld [vmem:[#allocation2 + $0x4e8] sm:$0xff]
    %v238 = vld [vmem:[#allocation2 + $0x4f0] sm:$0xff]
    %v239 = vld [vmem:[#allocation2 + $0x4f8] sm:$0xff]
    %v240 = vld [vmem:[#allocation2 + $0x500] sm:$0xff]
    %v241 = vld [vmem:[#allocation2 + $0x508] sm:$0xff]
    %v242 = vld [vmem:[#allocation2 + $0x510] sm:$0xff]
    %v243 = vld [vmem:[#allocation2 + $0x518] sm:$0xff]
    %v244 = vld [vmem:[#allocation2 + $0x520] sm:$0xff]
    %v245 = vld [vmem:[#allocation2 + $0x528] sm:$0xff]
    %v246 = vld [vmem:[#allocation2 + $0x530] sm:$0xff]
    %v247 = vld [vmem:[#allocation2 + $0x538] sm:$0xff]
    %v248 = vld [vmem:[#allocation2 + $0x540] sm:$0xff]
    %v249 = vld [vmem:[#allocation2 + $0x548] sm:$0xff]
    %v250 = vld [vmem:[#allocation2 + $0x550] sm:$0xff]
    %v251 = vld [vmem:[#allocation2 + $0x558] sm:$0xff]
    %v252 = vld [vmem:[#allocation2 + $0x560] sm:$0xff]
    %v253 = vld [vmem:[#allocation2 + $0x568] sm:$0xff]
    %v254 = vld [vmem:[#allocation2 + $0x570] sm:$0xff]
    %v255 = vld [vmem:[#allocation2 + $0x578] sm:$0xff]
    %v256 = vld [vmem:[#allocation2 + $0x580] sm:$0xff]
    %v257 = vld [vmem:[#allocation2 + $0x588] sm:$0xff]
    %v258 = vld [vmem:[#allocation2 + $0x590] sm:$0xff]
    %v259 = vld [vmem:[#allocation2 + $0x598] sm:$0xff]
    %v260 = vld [vmem:[#allocation2 + $0x5a0] sm:$0xff]
    %v261 = vld [vmem:[#allocation2 + $0x5a8] sm:$0xff]
    %v262 = vld [vmem:[#allocation2 + $0x5b0] sm:$0xff]
    %v263 = vld [vmem:[#allocation2 + $0x5b8] sm:$0xff]
    %v264 = vld [vmem:[#allocation2 + $0x5c0] sm:$0xff]
    %v265 = vld [vmem:[#allocation2 + $0x5c8] sm:$0xff]
    %v266 = vld [vmem:[#allocation2 + $0x5d0] sm:$0xff]
    %v267 = vld [vmem:[#allocation2 + $0x5d8] sm:$0xff]
    %v268 = vld [vmem:[#allocation2 + $0x5e0] sm:$0xff]
    %v269 = vld [vmem:[#allocation2 + $0x5e8] sm:$0xff]
    %v270 = vld [vmem:[#allocation2 + $0x5f0] sm:$0xff]
    %v271 = vld [vmem:[#allocation2 + $0x5f8] sm:$0xff]
    %v272 = vld [vmem:[#allocation2 + $0x600] sm:$0xff]
    %v273 = vld [vmem:[#allocation2 + $0x608] sm:$0xff]
    %v274 = vld [vmem:[#allocation2 + $0x610] sm:$0xff]
    %v275 = vld [vmem:[#allocation2 + $0x618] sm:$0xff]
    %v276 = vld [vmem:[#allocation2 + $0x620] sm:$0xff]
    %v277 = vld [vmem:[#allocation2 + $0x628] sm:$0xff]
    %v278 = vld [vmem:[#allocation2 + $0x630] sm:$0xff]
    %v279 = vld [vmem:[#allocation2 + $0x638] sm:$0xff]
    %v280 = vld [vmem:[#allocation2 + $0x640] sm:$0xff]
    %v281 = vld [vmem:[#allocation2 + $0x648] sm:$0xff]
    %v282 = vld [vmem:[#allocation2 + $0x650] sm:$0xff]
    %v283 = vld [vmem:[#allocation2 + $0x658] sm:$0xff]
    %v284 = vld [vmem:[#allocation2 + $0x660] sm:$0xff]
    %v285 = vld [vmem:[#allocation2 + $0x668] sm:$0xff]
    %v286 = vld [vmem:[#allocation2 + $0x670] sm:$0xff]
    %v287 = vld [vmem:[#allocation2 + $0x678] sm:$0xff]
    %v288 = vld [vmem:[#allocation2 + $0x680] sm:$0xff]
    %v289 = vld [vmem:[#allocation2 + $0x688] sm:$0xff]
    %v290 = vld [vmem:[#allocation2 + $0x690] sm:$0xff]
    %v291 = vld [vmem:[#allocation2 + $0x698] sm:$0xff]
    %v292 = vld [vmem:[#allocation2 + $0x6a0] sm:$0xff]
    %v293 = vld [vmem:[#allocation2 + $0x6a8] sm:$0xff]
    %v294 = vld [vmem:[#allocation2 + $0x6b0] sm:$0xff]
    %v295 = vld [vmem:[#allocation2 + $0x6b8] sm:$0xff]
    %v296 = vld [vmem:[#allocation2 + $0x6c0] sm:$0xff]
    %v297 = vld [vmem:[#allocation2 + $0x6c8] sm:$0xff]
    %v298 = vld [vmem:[#allocation2 + $0x6d0] sm:$0xff]
    %v299 = vld [vmem:[#allocation2 + $0x6d8] sm:$0xff]
    %v300 = vld [vmem:[#allocation2 + $0x6e0] sm:$0xff]
    %v301 = vld [vmem:[#allocation2 + $0x6e8] sm:$0xff]
    %v302 = vld [vmem:[#allocation2 + $0x6f0] sm:$0xff]
    %v303 = vld [vmem:[#allocation2 + $0x6f8] sm:$0xff]
    %v304 = vld [vmem:[#allocation2 + $0x700] sm:$0xff]
    %v305 = vld [vmem:[#allocation2 + $0x708] sm:$0xff]
    %v306 = vld [vmem:[#allocation2 + $0x710] sm:$0xff]
    %v307 = vld [vmem:[#allocation2 + $0x718] sm:$0xff]
    %v308 = vld [vmem:[#allocation2 + $0x720] sm:$0xff]
    %v309 = vld [vmem:[#allocation2 + $0x728] sm:$0xff]
    %v310 = vld [vmem:[#allocation2 + $0x730] sm:$0xff]
    %v311 = vld [vmem:[#allocation2 + $0x738] sm:$0xff]
    %v312 = vld [vmem:[#allocation2 + $0x740] sm:$0xff]
    %v313 = vld [vmem:[#allocation2 + $0x748] sm:$0xff]
    %v314 = vld [vmem:[#allocation2 + $0x750] sm:$0xff]
    %v315 = vld [vmem:[#allocation2 + $0x758] sm:$0xff]
    %v316 = vld [vmem:[#allocation2 + $0x760] sm:$0xff]
    %v317 = vld [vmem:[#allocation2 + $0x768] sm:$0xff]
    %v318 = vld [vmem:[#allocation2 + $0x770] sm:$0xff]
    %v319 = vld [vmem:[#allocation2 + $0x778] sm:$0xff]
    %v320 = vld [vmem:[#allocation2 + $0x780] sm:$0xff]
    %v321 = vld [vmem:[#allocation2 + $0x788] sm:$0xff]
    %v322 = vld [vmem:[#allocation2 + $0x790] sm:$0xff]
    %v323 = vld [vmem:[#allocation2 + $0x798] sm:$0xff]
    %v324 = vld [vmem:[#allocation2 + $0x7a0] sm:$0xff]
    %v325 = vld [vmem:[#allocation2 + $0x7a8] sm:$0xff]
    %v326 = vld [vmem:[#allocation2 + $0x7b0] sm:$0xff]
    %v327 = vld [vmem:[#allocation2 + $0x7b8] sm:$0xff]
    %v328 = vld [vmem:[#allocation2 + $0x7c0] sm:$0xff]
    %v329 = vld [vmem:[#allocation2 + $0x7c8] sm:$0xff]
    %v330 = vld [vmem:[#allocation2 + $0x7d0] sm:$0xff]
    %v331 = vld [vmem:[#allocation2 + $0x7d8] sm:$0xff]
    %v332 = vld [vmem:[#allocation2 + $0x7e0] sm:$0xff]
    %v333 = vld [vmem:[#allocation2 + $0x7e8] sm:$0xff]
    %v334 = vld [vmem:[#allocation2 + $0x7f0] sm:$0xff]
    %v335 = vld [vmem:[#allocation2 + $0x7f8] sm:$0xff]
    %v336 = vld [vmem:[#allocation2 + $0x800] sm:$0xff]
    %v337 = vld [vmem:[#allocation2 + $0x808] sm:$0xff]
    %v338 = vld [vmem:[#allocation2 + $0x810] sm:$0xff]
    %v339 = vld [vmem:[#allocation2 + $0x818] sm:$0xff]
    %v340 = vld [vmem:[#allocation2 + $0x820] sm:$0xff]
    %v341 = vld [vmem:[#allocation2 + $0x828] sm:$0xff]
    %v342 = vld [vmem:[#allocation2 + $0x830] sm:$0xff]
    %v343 = vld [vmem:[#allocation2 + $0x838] sm:$0xff]
    %v344 = vld [vmem:[#allocation2 + $0x840] sm:$0xff]
    %v345 = vld [vmem:[#allocation2 + $0x848] sm:$0xff]
    %v346 = vld [vmem:[#allocation2 + $0x850] sm:$0xff]
    %v347 = vld [vmem:[#allocation2 + $0x858] sm:$0xff]
    %v348 = vld [vmem:[#allocation2 + $0x860] sm:$0xff]
    %v349 = vld [vmem:[#allocation2 + $0x868] sm:$0xff]
    %v350 = vld [vmem:[#allocation2 + $0x870] sm:$0xff]
    %v351 = vld [vmem:[#allocation2 + $0x878] sm:$0xff]
    %v352 = vld [vmem:[#allocation2 + $0x880] sm:$0xff]
    %v353 = vld [vmem:[#allocation2 + $0x888] sm:$0xff]
    %v354 = vld [vmem:[#allocation2 + $0x890] sm:$0xff]
    %v355 = vld [vmem:[#allocation2 + $0x898] sm:$0xff]
    %v356 = vld [vmem:[#allocation2 + $0x8a0] sm:$0xff]
    %v357 = vld [vmem:[#allocation2 + $0x8a8] sm:$0xff]
    %v358 = vld [vmem:[#allocation2 + $0x8b0] sm:$0xff]
    %v359 = vld [vmem:[#allocation2 + $0x8b8] sm:$0xff]
    %v360 = vld [vmem:[#allocation2 + $0x8c0] sm:$0xff]
    %v361 = vld [vmem:[#allocation2 + $0x8c8] sm:$0xff]
    %v362 = vld [vmem:[#allocation2 + $0x8d0] sm:$0xff]
    %v363 = vld [vmem:[#allocation2 + $0x8d8] sm:$0xff]
    %v364 = vld [vmem:[#allocation2 + $0x8e0] sm:$0xff]
    %v365 = vld [vmem:[#allocation2 + $0x8e8] sm:$0xff]
    %v366 = vld [vmem:[#allocation2 + $0x8f0] sm:$0xff]
    %v367 = vld [vmem:[#allocation2 + $0x8f8] sm:$0xff]
    %v368 = vld [vmem:[#allocation2 + $0x900] sm:$0xff]
    %v369 = vld [vmem:[#allocation2 + $0x908] sm:$0xff]
    %v370 = vld [vmem:[#allocation2 + $0x910] sm:$0xff]
    %v371 = vld [vmem:[#allocation2 + $0x918] sm:$0xff]
    %v372 = vld [vmem:[#allocation2 + $0x920] sm:$0xff]
    %v373 = vld [vmem:[#allocation2 + $0x928] sm:$0xff]
    %v374 = vld [vmem:[#allocation2 + $0x930] sm:$0xff]
    %v375 = vld [vmem:[#allocation2 + $0x938] sm:$0xff]
    %v376 = vld [vmem:[#allocation2 + $0x940] sm:$0xff]
    %v377 = vld [vmem:[#allocation2 + $0x948] sm:$0xff]
    %v378 = vld [vmem:[#allocation2 + $0x950] sm:$0xff]
    %v379 = vld [vmem:[#allocation2 + $0x958] sm:$0xff]
    %v380 = vld [vmem:[#allocation2 + $0x960] sm:$0xff]
    %v381 = vld [vmem:[#allocation2 + $0x968] sm:$0xff]
    %v382 = vld [vmem:[#allocation2 + $0x970] sm:$0xff]
    %v383 = vld [vmem:[#allocation2 + $0x978] sm:$0xff]
    %v384 = vld [vmem:[#allocation2 + $0x980] sm:$0xff]
    %v385 = vld [vmem:[#allocation2 + $0x988] sm:$0xff]
    %v386 = vld [vmem:[#allocation2 + $0x990] sm:$0xff]
    %v387 = vld [vmem:[#allocation2 + $0x998] sm:$0xff]
    %v388 = vld [vmem:[#allocation2 + $0x9a0] sm:$0xff]
    %v389 = vld [vmem:[#allocation2 + $0x9a8] sm:$0xff]
    %v390 = vld [vmem:[#allocation2 + $0x9b0] sm:$0xff]
    %v391 = vld [vmem:[#allocation2 + $0x9b8] sm:$0xff]
    %v392 = vld [vmem:[#allocation2 + $0x9c0] sm:$0xff]
    %v393 = vld [vmem:[#allocation2 + $0x9c8] sm:$0xff]
    %v394 = vld [vmem:[#allocation2 + $0x9d0] sm:$0xff]
    %v395 = vld [vmem:[#allocation2 + $0x9d8] sm:$0xff]
    %v396 = vld [vmem:[#allocation2 + $0x9e0] sm:$0xff]
    %v397 = vld [vmem:[#allocation2 + $0x9e8] sm:$0xff]
    %v398 = vld [vmem:[#allocation2 + $0x9f0] sm:$0xff]
    %v399 = vld [vmem:[#allocation2 + $0x9f8] sm:$0xff]
    %v400 = vld [vmem:[#allocation2 + $0xa00] sm:$0xff]
    %v401 = vld [vmem:[#allocation2 + $0xa08] sm:$0xff]
    %v402 = vld [vmem:[#allocation2 + $0xa10] sm:$0xff]
    %v403 = vld [vmem:[#allocation2 + $0xa18] sm:$0xff]
    %v404 = vld [vmem:[#allocation2 + $0xa20] sm:$0xff]
    %v405 = vld [vmem:[#allocation2 + $0xa28] sm:$0xff]
    %v406 = vld [vmem:[#allocation2 + $0xa30] sm:$0xff]
    %v407 = vld [vmem:[#allocation2 + $0xa38] sm:$0xff]
    %v408 = vld [vmem:[#allocation2 + $0xa40] sm:$0xff]
    %v409 = vld [vmem:[#allocation2 + $0xa48] sm:$0xff]
    %v410 = vld [vmem:[#allocation2 + $0xa50] sm:$0xff]
    %v411 = vld [vmem:[#allocation2 + $0xa58] sm:$0xff]
    %v412 = vld [vmem:[#allocation2 + $0xa60] sm:$0xff]
    %v413 = vld [vmem:[#allocation2 + $0xa68] sm:$0xff]
    %v414 = vld [vmem:[#allocation2 + $0xa70] sm:$0xff]
    %v415 = vld [vmem:[#allocation2 + $0xa78] sm:$0xff]
    %v416 = vld [vmem:[#allocation2 + $0xa80] sm:$0xff]
    %v417 = vld [vmem:[#allocation2 + $0xa88] sm:$0xff]
    %v418 = vld [vmem:[#allocation2 + $0xa90] sm:$0xff]
    %v419 = vld [vmem:[#allocation2 + $0xa98] sm:$0xff]
    %v420 = vld [vmem:[#allocation2 + $0xaa0] sm:$0xff]
    %v421 = vld [vmem:[#allocation2 + $0xaa8] sm:$0xff]
    %v422 = vld [vmem:[#allocation2 + $0xab0] sm:$0xff]
    %v423 = vld [vmem:[#allocation2 + $0xab8] sm:$0xff]
    %v424 = vld [vmem:[#allocation2 + $0xac0] sm:$0xff]
    %v425 = vld [vmem:[#allocation2 + $0xac8] sm:$0xff]
    %v426 = vld [vmem:[#allocation2 + $0xad0] sm:$0xff]
    %v427 = vld [vmem:[#allocation2 + $0xad8] sm:$0xff]
    %v428 = vld [vmem:[#allocation2 + $0xae0] sm:$0xff]
    %v429 = vld [vmem:[#allocation2 + $0xae8] sm:$0xff]
    %v430 = vld [vmem:[#allocation2 + $0xaf0] sm:$0xff]
    %v431 = vld [vmem:[#allocation2 + $0xaf8] sm:$0xff]
    %v432 = vld [vmem:[#allocation2 + $0xb00] sm:$0xff]
    %v433 = vld [vmem:[#allocation2 + $0xb08] sm:$0xff]
    %v434 = vld [vmem:[#allocation2 + $0xb10] sm:$0xff]
    %v435 = vld [vmem:[#allocation2 + $0xb18] sm:$0xff]
    %v436 = vld [vmem:[#allocation2 + $0xb20] sm:$0xff]
    %v437 = vld [vmem:[#allocation2 + $0xb28] sm:$0xff]
    %v438 = vld [vmem:[#allocation2 + $0xb30] sm:$0xff]
    %v439 = vld [vmem:[#allocation2 + $0xb38] sm:$0xff]
    %v440 = vld [vmem:[#allocation2 + $0xb40] sm:$0xff]
    %v441 = vld [vmem:[#allocation2 + $0xb48] sm:$0xff]
    %v442 = vld [vmem:[#allocation2 + $0xb50] sm:$0xff]
    %v443 = vld [vmem:[#allocation2 + $0xb58] sm:$0xff]
    %v444 = vld [vmem:[#allocation2 + $0xb60] sm:$0xff]
    %v445 = vld [vmem:[#allocation2 + $0xb68] sm:$0xff]
    %v446 = vld [vmem:[#allocation2 + $0xb70] sm:$0xff]
    %v447 = vld [vmem:[#allocation2 + $0xb78] sm:$0xff]
    %v448 = vld [vmem:[#allocation2 + $0xb80] sm:$0xff]
    %v449 = vld [vmem:[#allocation2 + $0xb88] sm:$0xff]
    %v450 = vld [vmem:[#allocation2 + $0xb90] sm:$0xff]
    %v451 = vld [vmem:[#allocation2 + $0xb98] sm:$0xff]
    %v452 = vld [vmem:[#allocation2 + $0xba0] sm:$0xff]
    %v453 = vld [vmem:[#allocation2 + $0xba8] sm:$0xff]
    %v454 = vld [vmem:[#allocation2 + $0xbb0] sm:$0xff]
    %v455 = vld [vmem:[#allocation2 + $0xbb8] sm:$0xff]
    %v456 = vld [vmem:[#allocation2 + $0xbc0] sm:$0xff]
    %v457 = vld [vmem:[#allocation2 + $0xbc8] sm:$0xff]
    %v458 = vld [vmem:[#allocation2 + $0xbd0] sm:$0xff]
    %v459 = vld [vmem:[#allocation2 + $0xbd8] sm:$0xff]
    %v460 = vld [vmem:[#allocation2 + $0xbe0] sm:$0xff]
    %v461 = vld [vmem:[#allocation2 + $0xbe8] sm:$0xff]
    %v462 = vld [vmem:[#allocation2 + $0xbf0] sm:$0xff]
    %v463 = vld [vmem:[#allocation2 + $0xbf8] sm:$0xff]
    %v464 = vld [vmem:[#allocation2 + $0xc00] sm:$0xff]
    %v465 = vld [vmem:[#allocation2 + $0xc08] sm:$0xff]
    %v466 = vld [vmem:[#allocation2 + $0xc10] sm:$0xff]
    %v467 = vld [vmem:[#allocation2 + $0xc18] sm:$0xff]
    %v468 = vld [vmem:[#allocation2 + $0xc20] sm:$0xff]
    %v469 = vld [vmem:[#allocation2 + $0xc28] sm:$0xff]
    %v470 = vld [vmem:[#allocation2 + $0xc30] sm:$0xff]
    %v471 = vld [vmem:[#allocation2 + $0xc38] sm:$0xff]
    %v472 = vld [vmem:[#allocation2 + $0xc40] sm:$0xff]
    %v473 = vld [vmem:[#allocation2 + $0xc48] sm:$0xff]
    %v474 = vld [vmem:[#allocation2 + $0xc50] sm:$0xff]
    %v475 = vld [vmem:[#allocation2 + $0xc58] sm:$0xff]
    %v476 = vld [vmem:[#allocation2 + $0xc60] sm:$0xff]
    %v477 = vld [vmem:[#allocation2 + $0xc68] sm:$0xff]
    %v478 = vld [vmem:[#allocation2 + $0xc70] sm:$0xff]
    %v479 = vld [vmem:[#allocation2 + $0xc78] sm:$0xff]
    %v480 = vld [vmem:[#allocation2 + $0xc80] sm:$0xff]
    %v481 = vld [vmem:[#allocation2 + $0xc88] sm:$0xff]
    %v482 = vld [vmem:[#allocation2 + $0xc90] sm:$0xff]
    %v483 = vld [vmem:[#allocation2 + $0xc98] sm:$0xff]
    %v484 = vld [vmem:[#allocation2 + $0xca0] sm:$0xff]
    %v485 = vld [vmem:[#allocation2 + $0xca8] sm:$0xff]
    %v486 = vld [vmem:[#allocation2 + $0xcb0] sm:$0xff]
    %v487 = vld [vmem:[#allocation2 + $0xcb8] sm:$0xff]
    %v488 = vld [vmem:[#allocation2 + $0xcc0] sm:$0xff]
    %v489 = vld [vmem:[#allocation2 + $0xcc8] sm:$0xff]
    %v490 = vld [vmem:[#allocation2 + $0xcd0] sm:$0xff]
    %v491 = vld [vmem:[#allocation2 + $0xcd8] sm:$0xff]
    %v492 = vld [vmem:[#allocation2 + $0xce0] sm:$0xff]
    %v493 = vld [vmem:[#allocation2 + $0xce8] sm:$0xff]
    %v494 = vld [vmem:[#allocation2 + $0xcf0] sm:$0xff]
    %v495 = vld [vmem:[#allocation2 + $0xcf8] sm:$0xff]
    %v496 = vld [vmem:[#allocation2 + $0xd00] sm:$0xff]
    %v497 = vld [vmem:[#allocation2 + $0xd08] sm:$0xff]
    %v498 = vld [vmem:[#allocation2 + $0xd10] sm:$0xff]
    %v499 = vld [vmem:[#allocation2 + $0xd18] sm:$0xff]
    %v500 = vld [vmem:[#allocation2 + $0xd20] sm:$0xff]
    %v501 = vld [vmem:[#allocation2 + $0xd28] sm:$0xff]
    %v502 = vld [vmem:[#allocation2 + $0xd30] sm:$0xff]
    %v503 = vld [vmem:[#allocation2 + $0xd38] sm:$0xff]
    %v504 = vld [vmem:[#allocation2 + $0xd40] sm:$0xff]
    %v505 = vld [vmem:[#allocation2 + $0xd48] sm:$0xff]
    %v506 = vld [vmem:[#allocation2 + $0xd50] sm:$0xff]
    %v507 = vld [vmem:[#allocation2 + $0xd58] sm:$0xff]
    %v508 = vld [vmem:[#allocation2 + $0xd60] sm:$0xff]
    %v509 = vld [vmem:[#allocation2 + $0xd68] sm:$0xff]
    %v510 = vld [vmem:[#allocation2 + $0xd70] sm:$0xff]
    %v511 = vld [vmem:[#allocation2 + $0xd78] sm:$0xff]
    %v512 = vld [vmem:[#allocation2 + $0xd80] sm:$0xff]
    %v513 = vld [vmem:[#allocation2 + $0xd88] sm:$0xff]
    %v514 = vld [vmem:[#allocation2 + $0xd90] sm:$0xff]
    %v515 = vld [vmem:[#allocation2 + $0xd98] sm:$0xff]
    %v516 = vld [vmem:[#allocation2 + $0xda0] sm:$0xff]
    %v517 = vld [vmem:[#allocation2 + $0xda8] sm:$0xff]
    %v518 = vld [vmem:[#allocation2 + $0xdb0] sm:$0xff]
    %v519 = vld [vmem:[#allocation2 + $0xdb8] sm:$0xff]
    %v520 = vld [vmem:[#allocation2 + $0xdc0] sm:$0xff]
    %v521 = vld [vmem:[#allocation2 + $0xdc8] sm:$0xff]
    %v522 = vld [vmem:[#allocation2 + $0xdd0] sm:$0xff]
    %v523 = vld [vmem:[#allocation2 + $0xdd8] sm:$0xff]
    %v524 = vld [vmem:[#allocation2 + $0xde0] sm:$0xff]
    %v525 = vld [vmem:[#allocation2 + $0xde8] sm:$0xff]
    %v526 = vld [vmem:[#allocation2 + $0xdf0] sm:$0xff]
    %v527 = vld [vmem:[#allocation2 + $0xdf8] sm:$0xff]
    %v528 = vld [vmem:[#allocation2 + $0xe00] sm:$0xff]
    %v529 = vld [vmem:[#allocation2 + $0xe08] sm:$0xff]
    %v530 = vld [vmem:[#allocation2 + $0xe10] sm:$0xff]
    %v531 = vld [vmem:[#allocation2 + $0xe18] sm:$0xff]
    %v532 = vld [vmem:[#allocation2 + $0xe20] sm:$0xff]
    %v533 = vld [vmem:[#allocation2 + $0xe28] sm:$0xff]
    %v534 = vld [vmem:[#allocation2 + $0xe30] sm:$0xff]
    %v535 = vld [vmem:[#allocation2 + $0xe38] sm:$0xff]
    %v536 = vld [vmem:[#allocation2 + $0xe40] sm:$0xff]
    %v537 = vld [vmem:[#allocation2 + $0xe48] sm:$0xff]
    %v538 = vld [vmem:[#allocation2 + $0xe50] sm:$0xff]
    %v539 = vld [vmem:[#allocation2 + $0xe58] sm:$0xff]
    %v540 = vld [vmem:[#allocation2 + $0xe60] sm:$0xff]
    %v541 = vld [vmem:[#allocation2 + $0xe68] sm:$0xff]
    %v542 = vld [vmem:[#allocation2 + $0xe70] sm:$0xff]
    %v543 = vld [vmem:[#allocation2 + $0xe78] sm:$0xff]
    %v544 = vld [vmem:[#allocation2 + $0xe80] sm:$0xff]
    %v545 = vld [vmem:[#allocation2 + $0xe88] sm:$0xff]
    %v546 = vld [vmem:[#allocation2 + $0xe90] sm:$0xff]
    %v547 = vld [vmem:[#allocation2 + $0xe98] sm:$0xff]
    %v548 = vld [vmem:[#allocation2 + $0xea0] sm:$0xff]
    %v549 = vld [vmem:[#allocation2 + $0xea8] sm:$0xff]
    %v550 = vld [vmem:[#allocation2 + $0xeb0] sm:$0xff]
    %v551 = vld [vmem:[#allocation2 + $0xeb8] sm:$0xff]
    %v552 = vld [vmem:[#allocation2 + $0xec0] sm:$0xff]
    %v553 = vld [vmem:[#allocation2 + $0xec8] sm:$0xff]
    %v554 = vld [vmem:[#allocation2 + $0xed0] sm:$0xff]
    %v555 = vld [vmem:[#allocation2 + $0xed8] sm:$0xff]
    %v556 = vld [vmem:[#allocation2 + $0xee0] sm:$0xff]
    %v557 = vld [vmem:[#allocation2 + $0xee8] sm:$0xff]
    %v558 = vld [vmem:[#allocation2 + $0xef0] sm:$0xff]
    %v559 = vld [vmem:[#allocation2 + $0xef8] sm:$0xff]
    %v560 = vld [vmem:[#allocation2 + $0xf00] sm:$0xff]
    %v561 = vld [vmem:[#allocation2 + $0xf08] sm:$0xff]
    %v562 = vld [vmem:[#allocation2 + $0xf10] sm:$0xff]
    %v563 = vld [vmem:[#allocation2 + $0xf18] sm:$0xff]
    %v564 = vld [vmem:[#allocation2 + $0xf20] sm:$0xff]
    %v565 = vld [vmem:[#allocation2 + $0xf28] sm:$0xff]
    %v566 = vld [vmem:[#allocation2 + $0xf30] sm:$0xff]
    %v567 = vld [vmem:[#allocation2 + $0xf38] sm:$0xff]
    %v568 = vld [vmem:[#allocation2 + $0xf40] sm:$0xff]
    %v569 = vld [vmem:[#allocation2 + $0xf48] sm:$0xff]
    %v570 = vld [vmem:[#allocation2 + $0xf50] sm:$0xff]
    %v571 = vld [vmem:[#allocation2 + $0xf58] sm:$0xff]
    %v572 = vld [vmem:[#allocation2 + $0xf60] sm:$0xff]
    %v573 = vld [vmem:[#allocation2 + $0xf68] sm:$0xff]
    %v574 = vld [vmem:[#allocation2 + $0xf70] sm:$0xff]
    %v575 = vld [vmem:[#allocation2 + $0xf78] sm:$0xff]
    %v576 = vld [vmem:[#allocation2 + $0xf80] sm:$0xff]
    %v577 = vld [vmem:[#allocation2 + $0xf88] sm:$0xff]
    %v578 = vld [vmem:[#allocation2 + $0xf90] sm:$0xff]
    %v579 = vld [vmem:[#allocation2 + $0xf98] sm:$0xff]
    %v580 = vld [vmem:[#allocation2 + $0xfa0] sm:$0xff]
    %v581 = vld [vmem:[#allocation2 + $0xfa8] sm:$0xff]
    %v582 = vld [vmem:[#allocation2 + $0xfb0] sm:$0xff]
    %v583 = vld [vmem:[#allocation2 + $0xfb8] sm:$0xff]
    %v584 = vld [vmem:[#allocation2 + $0xfc0] sm:$0xff]
    %v585 = vld [vmem:[#allocation2 + $0xfc8] sm:$0xff]
    %v586 = vld [vmem:[#allocation2 + $0xfd0] sm:$0xff]
    %v587 = vld [vmem:[#allocation2 + $0xfd8] sm:$0xff]
    %v588 = vld [vmem:[#allocation2 + $0xfe0] sm:$0xff]
    %v589 = vld [vmem:[#allocation2 + $0xfe8] sm:$0xff]
    %v590 = vld [vmem:[#allocation2 + $0xff0] sm:$0xff]
    %v591 = vld [vmem:[#allocation2 + $0xff8] sm:$0xff]
    %v592 = vld [vmem:[#allocation2 + $0x1000] sm:$0xff]
    %v593 = vld [vmem:[#allocation2 + $0x1008] sm:$0xff]
    %v594 = vld [vmem:[#allocation2 + $0x1010] sm:$0xff]
    %v595 = vld [vmem:[#allocation2 + $0x1018] sm:$0xff]
    %v596 = vld [vmem:[#allocation2 + $0x1020] sm:$0xff]
    %v597 = vld [vmem:[#allocation2 + $0x1028] sm:$0xff]
    %v598 = vld [vmem:[#allocation2 + $0x1030] sm:$0xff]
    %v599 = vld [vmem:[#allocation2 + $0x1038] sm:$0xff]
    %v600 = vld [vmem:[#allocation2 + $0x1040] sm:$0xff]
    %v601 = vld [vmem:[#allocation2 + $0x1048] sm:$0xff]
    %v602 = vld [vmem:[#allocation2 + $0x1050] sm:$0xff]
    %v603 = vld [vmem:[#allocation2 + $0x1058] sm:$0xff]
    %v604 = vld [vmem:[#allocation2 + $0x1060] sm:$0xff]
    %v605 = vld [vmem:[#allocation2 + $0x1068] sm:$0xff]
    %v606 = vld [vmem:[#allocation2 + $0x1070] sm:$0xff]
    %v607 = vld [vmem:[#allocation2 + $0x1078] sm:$0xff]
    %v608 = vld [vmem:[#allocation2 + $0x1080] sm:$0xff]
    %v609 = vld [vmem:[#allocation2 + $0x1088] sm:$0xff]
    %v610 = vld [vmem:[#allocation2 + $0x1090] sm:$0xff]
    %v611 = vld [vmem:[#allocation2 + $0x1098] sm:$0xff]
    %v612 = vld [vmem:[#allocation2 + $0x10a0] sm:$0xff]
    %v613 = vld [vmem:[#allocation2 + $0x10a8] sm:$0xff]
    %v614 = vld [vmem:[#allocation2 + $0x10b0] sm:$0xff]
    %v615 = vld [vmem:[#allocation2 + $0x10b8] sm:$0xff]
    %v616 = vld [vmem:[#allocation2 + $0x10c0] sm:$0xff]
    %v617 = vld [vmem:[#allocation2 + $0x10c8] sm:$0xff]
    %v618 = vld [vmem:[#allocation2 + $0x10d0] sm:$0xff]
    %v619 = vld [vmem:[#allocation2 + $0x10d8] sm:$0xff]
    %v620 = vld [vmem:[#allocation2 + $0x10e0] sm:$0xff]
    %v621 = vld [vmem:[#allocation2 + $0x10e8] sm:$0xff]
    %v622 = vld [vmem:[#allocation2 + $0x10f0] sm:$0xff]
    %v623 = vld [vmem:[#allocation2 + $0x10f8] sm:$0xff]
    %v624 = vld [vmem:[#allocation2 + $0x1100] sm:$0xff]
    %v625 = vld [vmem:[#allocation2 + $0x1108] sm:$0xff]
    %v626 = vld [vmem:[#allocation2 + $0x1110] sm:$0xff]
    %v627 = vld [vmem:[#allocation2 + $0x1118] sm:$0xff]
    %v628 = vld [vmem:[#allocation2 + $0x1120] sm:$0xff]
    %v629 = vld [vmem:[#allocation2 + $0x1128] sm:$0xff]
    %v630 = vld [vmem:[#allocation2 + $0x1130] sm:$0xff]
    %v631 = vld [vmem:[#allocation2 + $0x1138] sm:$0xff]
    %v632 = vld [vmem:[#allocation2 + $0x1140] sm:$0xff]
    %v633 = vld [vmem:[#allocation2 + $0x1148] sm:$0xff]
    %v634 = vld [vmem:[#allocation2 + $0x1150] sm:$0xff]
    %v635 = vld [vmem:[#allocation2 + $0x1158] sm:$0xff]
    %v636 = vld [vmem:[#allocation2 + $0x1160] sm:$0xff]
    %v637 = vld [vmem:[#allocation2 + $0x1168] sm:$0xff]
    %v638 = vld [vmem:[#allocation2 + $0x1170] sm:$0xff]
    %v639 = vld [vmem:[#allocation2 + $0x1178] sm:$0xff]
    %v640 = vld [vmem:[#allocation2 + $0x1180] sm:$0xff]
    %v641 = vld [vmem:[#allocation2 + $0x1188] sm:$0xff]
    %v642 = vld [vmem:[#allocation2 + $0x1190] sm:$0xff]
    %v643 = vld [vmem:[#allocation2 + $0x1198] sm:$0xff]
    %v644 = vld [vmem:[#allocation2 + $0x11a0] sm:$0xff]
    %v645 = vld [vmem:[#allocation2 + $0x11a8] sm:$0xff]
    %v646 = vld [vmem:[#allocation2 + $0x11b0] sm:$0xff]
    %v647 = vld [vmem:[#allocation2 + $0x11b8] sm:$0xff]
    %v648 = vld [vmem:[#allocation2 + $0x11c0] sm:$0xff]
    %v649 = vld [vmem:[#allocation2 + $0x11c8] sm:$0xff]
    %v650 = vld [vmem:[#allocation2 + $0x11d0] sm:$0xff]
    %v651 = vld [vmem:[#allocation2 + $0x11d8] sm:$0xff]
    %v652 = vld [vmem:[#allocation2 + $0x11e0] sm:$0xff]
    %v653 = vld [vmem:[#allocation2 + $0x11e8] sm:$0xff]
    %v654 = vld [vmem:[#allocation2 + $0x11f0] sm:$0xff]
    %v655 = vld [vmem:[#allocation2 + $0x11f8] sm:$0xff]
    %v656 = vld [vmem:[#allocation2 + $0x1200] sm:$0xff]
    %v657 = vld [vmem:[#allocation2 + $0x1208] sm:$0xff]
    %v658 = vld [vmem:[#allocation2 + $0x1210] sm:$0xff]
    %v659 = vld [vmem:[#allocation2 + $0x1218] sm:$0xff]
    %v660 = vld [vmem:[#allocation2 + $0x1220] sm:$0xff]
    %v661 = vld [vmem:[#allocation2 + $0x1228] sm:$0xff]
    %v662 = vld [vmem:[#allocation2 + $0x1230] sm:$0xff]
    %v663 = vld [vmem:[#allocation2 + $0x1238] sm:$0xff]
    %v664 = vld [vmem:[#allocation2 + $0x1240] sm:$0xff]
    %v665 = vld [vmem:[#allocation2 + $0x1248] sm:$0xff]
    %v666 = vld [vmem:[#allocation2 + $0x1250] sm:$0xff]
    %v667 = vld [vmem:[#allocation2 + $0x1258] sm:$0xff]
    %v668 = vld [vmem:[#allocation2 + $0x1260] sm:$0xff]
    %v669 = vld [vmem:[#allocation2 + $0x1268] sm:$0xff]
    %v670 = vld [vmem:[#allocation2 + $0x1270] sm:$0xff]
    %v671 = vld [vmem:[#allocation2 + $0x1278] sm:$0xff]
    %v672 = vld [vmem:[#allocation2 + $0x1280] sm:$0xff]
    %v673 = vld [vmem:[#allocation2 + $0x1288] sm:$0xff]
    %v674 = vld [vmem:[#allocation2 + $0x1290] sm:$0xff]
    %v675 = vld [vmem:[#allocation2 + $0x1298] sm:$0xff]
    %v676 = vld [vmem:[#allocation2 + $0x12a0] sm:$0xff]
    %v677 = vld [vmem:[#allocation2 + $0x12a8] sm:$0xff]
    %v678 = vld [vmem:[#allocation2 + $0x12b0] sm:$0xff]
    %v679 = vld [vmem:[#allocation2 + $0x12b8] sm:$0xff]
    %v680 = vld [vmem:[#allocation2 + $0x12c0] sm:$0xff]
    %v681 = vld [vmem:[#allocation2 + $0x12c8] sm:$0xff]
    %v682 = vld [vmem:[#allocation2 + $0x12d0] sm:$0xff]
    %v683 = vld [vmem:[#allocation2 + $0x12d8] sm:$0xff]
    %v684 = vld [vmem:[#allocation2 + $0x12e0] sm:$0xff]
    %v685 = vld [vmem:[#allocation2 + $0x12e8] sm:$0xff]
    %v686 = vld [vmem:[#allocation2 + $0x12f0] sm:$0xff]
    %v687 = vld [vmem:[#allocation2 + $0x12f8] sm:$0xff]
    %v688 = vld [vmem:[#allocation2 + $0x1300] sm:$0xff]
    %v689 = vld [vmem:[#allocation2 + $0x1308] sm:$0xff]
    %v690 = vld [vmem:[#allocation2 + $0x1310] sm:$0xff]
    %v691 = vld [vmem:[#allocation2 + $0x1318] sm:$0xff]
    %v692 = vld [vmem:[#allocation2 + $0x1320] sm:$0xff]
    %v693 = vld [vmem:[#allocation2 + $0x1328] sm:$0xff]
    %v694 = vld [vmem:[#allocation2 + $0x1330] sm:$0xff]
    %v695 = vld [vmem:[#allocation2 + $0x1338] sm:$0xff]
    %v696 = vld [vmem:[#allocation2 + $0x1340] sm:$0xff]
    %v697 = vld [vmem:[#allocation2 + $0x1348] sm:$0xff]
    %v698 = vld [vmem:[#allocation2 + $0x1350] sm:$0xff]
    %v699 = vld [vmem:[#allocation2 + $0x1358] sm:$0xff]
    %v700 = vld [vmem:[#allocation2 + $0x1360] sm:$0xff]
    %v701 = vld [vmem:[#allocation2 + $0x1368] sm:$0xff]
    %v702 = vld [vmem:[#allocation2 + $0x1370] sm:$0xff]
    %v703 = vld [vmem:[#allocation2 + $0x1378] sm:$0xff]
    %v704 = vld [vmem:[#allocation2 + $0x1380] sm:$0xff]
    %v705 = vld [vmem:[#allocation2 + $0x1388] sm:$0xff]
    %v706 = vld [vmem:[#allocation2 + $0x1390] sm:$0xff]
    %v707 = vld [vmem:[#allocation2 + $0x1398] sm:$0xff]
    %v708 = vld [vmem:[#allocation2 + $0x13a0] sm:$0xff]
    %v709 = vld [vmem:[#allocation2 + $0x13a8] sm:$0xff]
    %v710 = vld [vmem:[#allocation2 + $0x13b0] sm:$0xff]
    %v711 = vld [vmem:[#allocation2 + $0x13b8] sm:$0xff]
    %v712 = vld [vmem:[#allocation2 + $0x13c0] sm:$0xff]
    %v713 = vld [vmem:[#allocation2 + $0x13c8] sm:$0xff]
    %v714 = vld [vmem:[#allocation2 + $0x13d0] sm:$0xff]
    %v715 = vld [vmem:[#allocation2 + $0x13d8] sm:$0xff]
    %v716 = vld [vmem:[#allocation2 + $0x13e0] sm:$0xff]
    %v717 = vld [vmem:[#allocation2 + $0x13e8] sm:$0xff]
    %v718 = vld [vmem:[#allocation2 + $0x13f0] sm:$0xff]
    %v719 = vld [vmem:[#allocation2 + $0x13f8] sm:$0xff]
    %v720 = vld [vmem:[#allocation2 + $0x1400] sm:$0xff]
    %v721 = vld [vmem:[#allocation2 + $0x1408] sm:$0xff]
    %v722 = vld [vmem:[#allocation2 + $0x1410] sm:$0xff]
    %v723 = vld [vmem:[#allocation2 + $0x1418] sm:$0xff]
    %v724 = vld [vmem:[#allocation2 + $0x1420] sm:$0xff]
    %v725 = vld [vmem:[#allocation2 + $0x1428] sm:$0xff]
    %v726 = vld [vmem:[#allocation2 + $0x1430] sm:$0xff]
    %v727 = vld [vmem:[#allocation2 + $0x1438] sm:$0xff]
    %v728 = vld [vmem:[#allocation2 + $0x1440] sm:$0xff]
    %v729 = vld [vmem:[#allocation2 + $0x1448] sm:$0xff]
    %v730 = vld [vmem:[#allocation2 + $0x1450] sm:$0xff]
    %v731 = vld [vmem:[#allocation2 + $0x1458] sm:$0xff]
    %v732 = vld [vmem:[#allocation2 + $0x1460] sm:$0xff]
    %v733 = vld [vmem:[#allocation2 + $0x1468] sm:$0xff]
    %v734 = vld [vmem:[#allocation2 + $0x1470] sm:$0xff]
    %v735 = vld [vmem:[#allocation2 + $0x1478] sm:$0xff]
    %v736 = vld [vmem:[#allocation2 + $0x1480] sm:$0xff]
    %v737 = vld [vmem:[#allocation2 + $0x1488] sm:$0xff]
    %v738 = vld [vmem:[#allocation2 + $0x1490] sm:$0xff]
    %v739 = vld [vmem:[#allocation2 + $0x1498] sm:$0xff]
    %v740 = vld [vmem:[#allocation2 + $0x14a0] sm:$0xff]
    %v741 = vld [vmem:[#allocation2 + $0x14a8] sm:$0xff]
    %v742 = vld [vmem:[#allocation2 + $0x14b0] sm:$0xff]
    %v743 = vld [vmem:[#allocation2 + $0x14b8] sm:$0xff]
    %v744 = vld [vmem:[#allocation2 + $0x14c0] sm:$0xff]
    %v745 = vld [vmem:[#allocation2 + $0x14c8] sm:$0xff]
    %v746 = vld [vmem:[#allocation2 + $0x14d0] sm:$0xff]
    %v747 = vld [vmem:[#allocation2 + $0x14d8] sm:$0xff]
    %v748 = vld [vmem:[#allocation2 + $0x14e0] sm:$0xff]
    %v749 = vld [vmem:[#allocation2 + $0x14e8] sm:$0xff]
    %v750 = vld [vmem:[#allocation2 + $0x14f0] sm:$0xff]
    %v751 = vld [vmem:[#allocation2 + $0x14f8] sm:$0xff]
    %v752 = vld [vmem:[#allocation2 + $0x1500] sm:$0xff]
    %v753 = vld [vmem:[#allocation2 + $0x1508] sm:$0xff]
    %v754 = vld [vmem:[#allocation2 + $0x1510] sm:$0xff]
    %v755 = vld [vmem:[#allocation2 + $0x1518] sm:$0xff]
    %v756 = vld [vmem:[#allocation2 + $0x1520] sm:$0xff]
    %v757 = vld [vmem:[#allocation2 + $0x1528] sm:$0xff]
    %v758 = vld [vmem:[#allocation2 + $0x1530] sm:$0xff]
    %v759 = vld [vmem:[#allocation2 + $0x1538] sm:$0xff]
    %v760 = vld [vmem:[#allocation2 + $0x1540] sm:$0xff]
    %v761 = vld [vmem:[#allocation2 + $0x1548] sm:$0xff]
    %v762 = vld [vmem:[#allocation2 + $0x1550] sm:$0xff]
    %v763 = vld [vmem:[#allocation2 + $0x1558] sm:$0xff]
    %v764 = vld [vmem:[#allocation2 + $0x1560] sm:$0xff]
    %v765 = vld [vmem:[#allocation2 + $0x1568] sm:$0xff]
    %v766 = vld [vmem:[#allocation2 + $0x1570] sm:$0xff]
    %v767 = vld [vmem:[#allocation2 + $0x1578] sm:$0xff]
    %v768 = vld [vmem:[#allocation2 + $0x1580] sm:$0xff]
    %v769 = vld [vmem:[#allocation2 + $0x1588] sm:$0xff]
    %v770 = vld [vmem:[#allocation2 + $0x1590] sm:$0xff]
    %v771 = vld [vmem:[#allocation2 + $0x1598] sm:$0xff]
    %v772 = vld [vmem:[#allocation2 + $0x15a0] sm:$0xff]
    %v773 = vld [vmem:[#allocation2 + $0x15a8] sm:$0xff]
    %v774 = vld [vmem:[#allocation2 + $0x15b0] sm:$0xff]
    %v775 = vld [vmem:[#allocation2 + $0x15b8] sm:$0xff]
    %v776 = vld [vmem:[#allocation2 + $0x15c0] sm:$0xff]
    %v777 = vld [vmem:[#allocation2 + $0x15c8] sm:$0xff]
    %v778 = vld [vmem:[#allocation2 + $0x15d0] sm:$0xff]
    %v779 = vld [vmem:[#allocation2 + $0x15d8] sm:$0xff]
    %v780 = vld [vmem:[#allocation2 + $0x15e0] sm:$0xff]
    %v781 = vld [vmem:[#allocation2 + $0x15e8] sm:$0xff]
    %v782 = vld [vmem:[#allocation2 + $0x15f0] sm:$0xff]
    %v783 = vld [vmem:[#allocation2 + $0x15f8] sm:$0xff]
    %v784 = vld [vmem:[#allocation2 + $0x1600] sm:$0xff]
    %v785 = vld [vmem:[#allocation2 + $0x1608] sm:$0xff]
    %v786 = vld [vmem:[#allocation2 + $0x1610] sm:$0xff]
    %v787 = vld [vmem:[#allocation2 + $0x1618] sm:$0xff]
    %v788 = vld [vmem:[#allocation2 + $0x1620] sm:$0xff]
    %v789 = vld [vmem:[#allocation2 + $0x1628] sm:$0xff]
    %v790 = vld [vmem:[#allocation2 + $0x1630] sm:$0xff]
    %v791 = vld [vmem:[#allocation2 + $0x1638] sm:$0xff]
    %v792 = vld [vmem:[#allocation2 + $0x1640] sm:$0xff]
    %v793 = vld [vmem:[#allocation2 + $0x1648] sm:$0xff]
    %v794 = vld [vmem:[#allocation2 + $0x1650] sm:$0xff]
    %v795 = vld [vmem:[#allocation2 + $0x1658] sm:$0xff]
    %v796 = vld [vmem:[#allocation2 + $0x1660] sm:$0xff]
    %v797 = vld [vmem:[#allocation2 + $0x1668] sm:$0xff]
    %v798 = vld [vmem:[#allocation2 + $0x1670] sm:$0xff]
    %v799 = vld [vmem:[#allocation2 + $0x1678] sm:$0xff]
    %v800 = vld [vmem:[#allocation2 + $0x1680] sm:$0xff]
    %v801 = vld [vmem:[#allocation2 + $0x1688] sm:$0xff]
    %v802 = vld [vmem:[#allocation2 + $0x1690] sm:$0xff]
    %v803 = vld [vmem:[#allocation2 + $0x1698] sm:$0xff]
    %v804 = vld [vmem:[#allocation2 + $0x16a0] sm:$0xff]
    %v805 = vld [vmem:[#allocation2 + $0x16a8] sm:$0xff]
    %v806 = vld [vmem:[#allocation2 + $0x16b0] sm:$0xff]
    %v807 = vld [vmem:[#allocation2 + $0x16b8] sm:$0xff]
    %v808 = vld [vmem:[#allocation2 + $0x16c0] sm:$0xff]
    %v809 = vld [vmem:[#allocation2 + $0x16c8] sm:$0xff]
    %v810 = vld [vmem:[#allocation2 + $0x16d0] sm:$0xff]
    %v811 = vld [vmem:[#allocation2 + $0x16d8] sm:$0xff]
    %v812 = vld [vmem:[#allocation2 + $0x16e0] sm:$0xff]
    %v813 = vld [vmem:[#allocation2 + $0x16e8] sm:$0xff]
    %v814 = vld [vmem:[#allocation2 + $0x16f0] sm:$0xff]
    %v815 = vld [vmem:[#allocation2 + $0x16f8] sm:$0xff]
    %v816 = vld [vmem:[#allocation2 + $0x1700] sm:$0xff]
    %v817 = vld [vmem:[#allocation2 + $0x1708] sm:$0xff]
    %v818 = vld [vmem:[#allocation2 + $0x1710] sm:$0xff]
    %v819 = vld [vmem:[#allocation2 + $0x1718] sm:$0xff]
    %v820 = vld [vmem:[#allocation2 + $0x1720] sm:$0xff]
    %v821 = vld [vmem:[#allocation2 + $0x1728] sm:$0xff]
    %v822 = vld [vmem:[#allocation2 + $0x1730] sm:$0xff]
    %v823 = vld [vmem:[#allocation2 + $0x1738] sm:$0xff]
    %v824 = vld [vmem:[#allocation2 + $0x1740] sm:$0xff]
    %v825 = vld [vmem:[#allocation2 + $0x1748] sm:$0xff]
    %v826 = vld [vmem:[#allocation2 + $0x1750] sm:$0xff]
    %v827 = vld [vmem:[#allocation2 + $0x1758] sm:$0xff]
    %v828 = vld [vmem:[#allocation2 + $0x1760] sm:$0xff]
    %v829 = vld [vmem:[#allocation2 + $0x1768] sm:$0xff]
    %v830 = vld [vmem:[#allocation2 + $0x1770] sm:$0xff]
    %v831 = vld [vmem:[#allocation2 + $0x1778] sm:$0xff]
    %v832 = vld [vmem:[#allocation2 + $0x1780] sm:$0xff]
    %v833 = vld [vmem:[#allocation2 + $0x1788] sm:$0xff]
    %v834 = vld [vmem:[#allocation2 + $0x1790] sm:$0xff]
    %v835 = vld [vmem:[#allocation2 + $0x1798] sm:$0xff]
    %v836 = vld [vmem:[#allocation2 + $0x17a0] sm:$0xff]
    %v837 = vld [vmem:[#allocation2 + $0x17a8] sm:$0xff]
    %v838 = vld [vmem:[#allocation2 + $0x17b0] sm:$0xff]
    %v839 = vld [vmem:[#allocation2 + $0x17b8] sm:$0xff]
    %v840 = vld [vmem:[#allocation2 + $0x17c0] sm:$0xff]
    %v841 = vld [vmem:[#allocation2 + $0x17c8] sm:$0xff]
    %v842 = vld [vmem:[#allocation2 + $0x17d0] sm:$0xff]
    %v843 = vld [vmem:[#allocation2 + $0x17d8] sm:$0xff]
    %v844 = vld [vmem:[#allocation2 + $0x17e0] sm:$0xff]
    %v845 = vld [vmem:[#allocation2 + $0x17e8] sm:$0xff]
    %v846 = vld [vmem:[#allocation2 + $0x17f0] sm:$0xff]
    %v847 = vld [vmem:[#allocation2 + $0x17f8] sm:$0xff]
    %v848 = vld [vmem:[#allocation4] ss:$2 sm:$0xff]
    %v850 = vlaneseq
    %v851 = vshrl.u32 %v850, 7
    %v852 = vsub.s32 0, %v851
    %v853 = vrot.slane %v848, %v852
    %v854 = vlaneseq
    %v855 = vshrl.u32 %v854, 7
    %v856 = vsub.s32 1, %v855
    %v857 = vrot.slane %v848, %v856
    %v858 = vlaneseq
    %v859 = vshrl.u32 %v858, 7
    %v860 = vsub.s32 2, %v859
    %v861 = vrot.slane %v848, %v860
    %v862 = vlaneseq
    %v863 = vshrl.u32 %v862, 7
    %v864 = vsub.s32 3, %v863
    %v865 = vrot.slane %v848, %v864
    %v866 = vlaneseq
    %v867 = vshrl.u32 %v866, 7
    %v868 = vsub.s32 4, %v867
    %v869 = vrot.slane %v848, %v868
    %v870 = vlaneseq
    %v871 = vshrl.u32 %v870, 7
    %v872 = vsub.s32 5, %v871
    %v873 = vrot.slane %v848, %v872
    %v874 = vlaneseq
    %v875 = vshrl.u32 %v874, 7
    %v876 = vsub.s32 6, %v875
    %v877 = vrot.slane %v848, %v876
    %v878 = vlaneseq
    %v879 = vshrl.u32 %v878, 7
    %v880 = vsub.s32 7, %v879
    %v881 = vrot.slane %v848, %v880
    %890 = vmatprep.subr.mxu0 %v81
    %891 = vmatpush1.msra.mxu0 %v80
    %892 = vmatprep.subr.mxu0 %v89
    %893 = vmatpush1.msra.mxu0 %v88
    %894 = vmatprep.subr.mxu0 %v97
    %895 = vmatpush1.msra.mxu0 %v96
    %896 = vmatprep.subr.mxu0 %v105
    %897 = vmatpush1.msra.mxu0 %v104
    %898 = vmatprep.subr.mxu0 %v113
    %899 = vmatpush1.msra.mxu0 %v112
    %900 = vmatprep.subr.mxu0 %v121
    %901 = vmatpush1.msra.mxu0 %v120
    %902 = vmatprep.subr.mxu0 %v129
    %903 = vmatpush1.msra.mxu0 %v128
    %904 = vmatprep.subr.mxu0 %v137
    %905 = vmatpush1.msra.mxu0 %v136
    %906 = vmatprep.subr.mxu0 %v145
    %907 = vmatpush1.msra.mxu0 %v144
    %908 = vmatprep.subr.mxu0 %v153
    %909 = vmatpush1.msra.mxu0 %v152
    %910 = vmatprep.subr.mxu0 %v161
    %911 = vmatpush1.msra.mxu0 %v160
    %912 = vmatprep.subr.mxu0 %v169
    %913 = vmatpush1.msra.mxu0 %v168
    %914 = vmatprep.subr.mxu0 %v177
    %915 = vmatpush1.msra.mxu0 %v176
    %916 = vmatprep.subr.mxu0 %v185
    %917 = vmatpush1.msra.mxu0 %v184
    %918 = vmatprep.subr.mxu0 %v193
    %919 = vmatpush1.msra.mxu0 %v192
    %920 = vmatprep.subr.mxu0 %v201
    %921 = vmatpush1.msra.mxu0 %v200
    %922 = vmatprep.subr.mxu0 %v209
    %923 = vmatpush1.msra.mxu0 %v208
    %924 = vmatprep.subr.mxu0 %v217
    %925 = vmatpush1.msra.mxu0 %v216
    %926 = vmatprep.subr.mxu0 %v225
    %927 = vmatpush1.msra.mxu0 %v224
    %928 = vmatprep.subr.mxu0 %v233
    %929 = vmatpush1.msra.mxu0 %v232
    %930 = vmatprep.subr.mxu0 %v241
    %931 = vmatpush1.msra.mxu0 %v240
    %932 = vmatprep.subr.mxu0 %v249
    %933 = vmatpush1.msra.mxu0 %v248
    %934 = vmatprep.subr.mxu0 %v257
    %935 = vmatpush1.msra.mxu0 %v256
    %936 = vmatprep.subr.mxu0 %v265
    %937 = vmatpush1.msra.mxu0 %v264
    %938 = vmatprep.subr.mxu0 %v273
    %939 = vmatpush1.msra.mxu0 %v272
    %940 = vmatprep.subr.mxu0 %v281
    %941 = vmatpush1.msra.mxu0 %v280
    %942 = vmatprep.subr.mxu0 %v289
    %943 = vmatpush1.msra.mxu0 %v288
    %944 = vmatprep.subr.mxu0 %v297
    %945 = vmatpush1.msra.mxu0 %v296
    %946 = vmatprep.subr.mxu0 %v305
    %947 = vmatpush1.msra.mxu0 %v304
    %948 = vmatprep.subr.mxu0 %v313
    %949 = vmatpush1.msra.mxu0 %v312
    %950 = vmatprep.subr.mxu0 %v321
    %951 = vmatpush1.msra.mxu0 %v320
    %952 = vmatprep.subr.mxu0 %v329
    %953 = vmatpush1.msra.mxu0 %v328
    %954 = vmatprep.mubr.f32.mxu0 %v75
    %955 = vmatmul.mubr.f32.gmra.mrb[0].mxu0 %v74
    %v956 = vpop.f32.mrb[0].mxu0
    %v957 = vadd.f32 %v853, %v956
    %v958 = vpop.f32.mrb[0].mxu0
    %v959 = vadd.f32 %v857, %v958
    %960 = vdwg.mxu0
    %961 = vmatprep.subr.mxu0 %v337
    %962 = vmatpush1.msra.mxu0 %v336
    %963 = vmatprep.subr.mxu0 %v345
    %964 = vmatpush1.msra.mxu0 %v344
    %965 = vmatprep.subr.mxu0 %v353
    %966 = vmatpush1.msra.mxu0 %v352
    %967 = vmatprep.subr.mxu0 %v361
    %968 = vmatpush1.msra.mxu0 %v360
    %969 = vmatprep.subr.mxu0 %v369
    %970 = vmatpush1.msra.mxu0 %v368
    %971 = vmatprep.subr.mxu0 %v377
    %972 = vmatpush1.msra.mxu0 %v376
    %973 = vmatprep.subr.mxu0 %v385
    %974 = vmatpush1.msra.mxu0 %v384
    %975 = vmatprep.subr.mxu0 %v393
    %976 = vmatpush1.msra.mxu0 %v392
    %977 = vmatprep.subr.mxu0 %v401
    %978 = vmatpush1.msra.mxu0 %v400
    %979 = vmatprep.subr.mxu0 %v409
    %980 = vmatpush1.msra.mxu0 %v408
    %981 = vmatprep.subr.mxu0 %v417
    %982 = vmatpush1.msra.mxu0 %v416
    %983 = vmatprep.subr.mxu0 %v425
    %984 = vmatpush1.msra.mxu0 %v424
    %985 = vmatprep.subr.mxu0 %v433
    %986 = vmatpush1.msra.mxu0 %v432
    %987 = vmatprep.subr.mxu0 %v441
    %988 = vmatpush1.msra.mxu0 %v440
    %989 = vmatprep.subr.mxu0 %v449
    %990 = vmatpush1.msra.mxu0 %v448
    %991 = vmatprep.subr.mxu0 %v457
    %992 = vmatpush1.msra.mxu0 %v456
    %993 = vmatprep.subr.mxu0 %v465
    %994 = vmatpush1.msra.mxu0 %v464
    %995 = vmatprep.subr.mxu0 %v473
    %996 = vmatpush1.msra.mxu0 %v472
    %997 = vmatprep.subr.mxu0 %v481
    %998 = vmatpush1.msra.mxu0 %v480
    %999 = vmatprep.subr.mxu0 %v489
    %1000 = vmatpush1.msra.mxu0 %v488
    %1001 = vmatprep.subr.mxu0 %v497
    %1002 = vmatpush1.msra.mxu0 %v496
    %1003 = vmatprep.subr.mxu0 %v505
    %1004 = vmatpush1.msra.mxu0 %v504
    %1005 = vmatprep.subr.mxu0 %v513
    %1006 = vmatpush1.msra.mxu0 %v512
    %1007 = vmatprep.subr.mxu0 %v521
    %1008 = vmatpush1.msra.mxu0 %v520
    %1009 = vmatprep.subr.mxu0 %v529
    %1010 = vmatpush1.msra.mxu0 %v528
    %1011 = vmatprep.subr.mxu0 %v537
    %1012 = vmatpush1.msra.mxu0 %v536
    %1013 = vmatprep.subr.mxu0 %v545
    %1014 = vmatpush1.msra.mxu0 %v544
    %1015 = vmatprep.subr.mxu0 %v553
    %1016 = vmatpush1.msra.mxu0 %v552
    %1017 = vmatprep.subr.mxu0 %v561
    %1018 = vmatpush1.msra.mxu0 %v560
    %1019 = vmatprep.subr.mxu0 %v569
    %1020 = vmatpush1.msra.mxu0 %v568
    %1021 = vmatprep.subr.mxu0 %v577
    %1022 = vmatpush1.msra.mxu0 %v576
    %1023 = vmatprep.subr.mxu0 %v585
    %1024 = vmatpush1.msra.mxu0 %v584
    %1025 = vmatprep.mubr.f32.mxu0 %v77
    %1026 = vmatmul.mubr.f32.gmra.mrb[0].mxu0 %v76
    %v1027 = vpop.f32.mrb[0].mxu0
    %v1028 = vadd.f32 %v957, %v1027
    %v1029 = vpop.f32.mrb[0].mxu0
    %v1030 = vadd.f32 %v959, %v1029
    %1031 = vdwg.mxu0
    %1032 = vmatprep.subr.mxu0 %v593
    %1033 = vmatpush1.msra.mxu0 %v592
    %1034 = vmatprep.subr.mxu0 %v601
    %1035 = vmatpush1.msra.mxu0 %v600
    %1036 = vmatprep.subr.mxu0 %v609
    %1037 = vmatpush1.msra.mxu0 %v608
    %1038 = vmatprep.subr.mxu0 %v617
    %1039 = vmatpush1.msra.mxu0 %v616
    %1040 = vmatprep.subr.mxu0 %v625
    %1041 = vmatpush1.msra.mxu0 %v624
    %1042 = vmatprep.subr.mxu0 %v633
    %1043 = vmatpush1.msra.mxu0 %v632
    %1044 = vmatprep.subr.mxu0 %v641
    %1045 = vmatpush1.msra.mxu0 %v640
    %1046 = vmatprep.subr.mxu0 %v649
    %1047 = vmatpush1.msra.mxu0 %v648
    %1048 = vmatprep.subr.mxu0 %v657
    %1049 = vmatpush1.msra.mxu0 %v656
    %1050 = vmatprep.subr.mxu0 %v665
    %1051 = vmatpush1.msra.mxu0 %v664
    %1052 = vmatprep.subr.mxu0 %v673
    %1053 = vmatpush1.msra.mxu0 %v672
    %1054 = vmatprep.subr.mxu0 %v681
    %1055 = vmatpush1.msra.mxu0 %v680
    %1056 = vmatprep.subr.mxu0 %v689
    %1057 = vmatpush1.msra.mxu0 %v688
    %1058 = vmatprep.subr.mxu0 %v697
    %1059 = vmatpush1.msra.mxu0 %v696
    %1060 = vmatprep.subr.mxu0 %v705
    %1061 = vmatpush1.msra.mxu0 %v704
    %1062 = vmatprep.subr.mxu0 %v713
    %1063 = vmatpush1.msra.mxu0 %v712
    %1064 = vmatprep.subr.mxu0 %v721
    %1065 = vmatpush1.msra.mxu0 %v720
    %1066 = vmatprep.subr.mxu0 %v729
    %1067 = vmatpush1.msra.mxu0 %v728
    %1068 = vmatprep.subr.mxu0 %v737
    %1069 = vmatpush1.msra.mxu0 %v736
    %1070 = vmatprep.subr.mxu0 %v745
    %1071 = vmatpush1.msra.mxu0 %v744
    %1072 = vmatprep.subr.mxu0 %v753
    %1073 = vmatpush1.msra.mxu0 %v752
    %1074 = vmatprep.subr.mxu0 %v761
    %1075 = vmatpush1.msra.mxu0 %v760
    %1076 = vmatprep.subr.mxu0 %v769
    %1077 = vmatpush1.msra.mxu0 %v768
    %1078 = vmatprep.subr.mxu0 %v777
    %1079 = vmatpush1.msra.mxu0 %v776
    %1080 = vmatprep.subr.mxu0 %v785
    %1081 = vmatpush1.msra.mxu0 %v784
    %1082 = vmatprep.subr.mxu0 %v793
    %1083 = vmatpush1.msra.mxu0 %v792
    %1084 = vmatprep.subr.mxu0 %v801
    %1085 = vmatpush1.msra.mxu0 %v800
    %1086 = vmatprep.subr.mxu0 %v809
    %1087 = vmatpush1.msra.mxu0 %v808
    %1088 = vmatprep.subr.mxu0 %v817
    %1089 = vmatpush1.msra.mxu0 %v816
    %1090 = vmatprep.subr.mxu0 %v825
    %1091 = vmatpush1.msra.mxu0 %v824
    %1092 = vmatprep.subr.mxu0 %v833
    %1093 = vmatpush1.msra.mxu0 %v832
    %1094 = vmatprep.subr.mxu0 %v841
    %1095 = vmatpush1.msra.mxu0 %v840
    %1096 = vmatprep.mubr.f32.mxu0 %v79
    %1097 = vmatmul.mubr.f32.gmra.mrb[0].mxu0 %v78
    %v1098 = vpop.f32.mrb[0].mxu0
    %v1099 = vadd.f32 %v1028, %v1098
    %v1100 = vpop.f32.mrb[0].mxu0
    %v1101 = vadd.f32 %v1030, %v1100
    %1102 = vdwg.mxu0
    %1103 = vmatprep.subr.mxu0 %v83
    %1104 = vmatpush1.msra.mxu0 %v82
    %1105 = vmatprep.subr.mxu0 %v91
    %1106 = vmatpush1.msra.mxu0 %v90
    %1107 = vmatprep.subr.mxu0 %v99
    %1108 = vmatpush1.msra.mxu0 %v98
    %1109 = vmatprep.subr.mxu0 %v107
    %1110 = vmatpush1.msra.mxu0 %v106
    %1111 = vmatprep.subr.mxu0 %v115
    %1112 = vmatpush1.msra.mxu0 %v114
    %1113 = vmatprep.subr.mxu0 %v123
    %1114 = vmatpush1.msra.mxu0 %v122
    %1115 = vmatprep.subr.mxu0 %v131
    %1116 = vmatpush1.msra.mxu0 %v130
    %1117 = vmatprep.subr.mxu0 %v139
    %1118 = vmatpush1.msra.mxu0 %v138
    %1119 = vmatprep.subr.mxu0 %v147
    %1120 = vmatpush1.msra.mxu0 %v146
    %1121 = vmatprep.subr.mxu0 %v155
    %1122 = vmatpush1.msra.mxu0 %v154
    %1123 = vmatprep.subr.mxu0 %v163
    %1124 = vmatpush1.msra.mxu0 %v162
    %1125 = vmatprep.subr.mxu0 %v171
    %1126 = vmatpush1.msra.mxu0 %v170
    %1127 = vmatprep.subr.mxu0 %v179
    %1128 = vmatpush1.msra.mxu0 %v178
    %1129 = vmatprep.subr.mxu0 %v187
    %1130 = vmatpush1.msra.mxu0 %v186
    %1131 = vmatprep.subr.mxu0 %v195
    %1132 = vmatpush1.msra.mxu0 %v194
    %1133 = vmatprep.subr.mxu0 %v203
    %1134 = vmatpush1.msra.mxu0 %v202
    %1135 = vmatprep.subr.mxu0 %v211
    %1136 = vmatpush1.msra.mxu0 %v210
    %1137 = vmatprep.subr.mxu0 %v219
    %1138 = vmatpush1.msra.mxu0 %v218
    %1139 = vmatprep.subr.mxu0 %v227
    %1140 = vmatpush1.msra.mxu0 %v226
    %1141 = vmatprep.subr.mxu0 %v235
    %1142 = vmatpush1.msra.mxu0 %v234
    %1143 = vmatprep.subr.mxu0 %v243
    %1144 = vmatpush1.msra.mxu0 %v242
    %1145 = vmatprep.subr.mxu0 %v251
    %1146 = vmatpush1.msra.mxu0 %v250
    %1147 = vmatprep.subr.mxu0 %v259
    %1148 = vmatpush1.msra.mxu0 %v258
    %1149 = vmatprep.subr.mxu0 %v267
    %1150 = vmatpush1.msra.mxu0 %v266
    %1151 = vmatprep.subr.mxu0 %v275
    %1152 = vmatpush1.msra.mxu0 %v274
    %1153 = vmatprep.subr.mxu0 %v283
    %1154 = vmatpush1.msra.mxu0 %v282
    %1155 = vmatprep.subr.mxu0 %v291
    %1156 = vmatpush1.msra.mxu0 %v290
    %1157 = vmatprep.subr.mxu0 %v299
    %1158 = vmatpush1.msra.mxu0 %v298
    %1159 = vmatprep.subr.mxu0 %v307
    %1160 = vmatpush1.msra.mxu0 %v306
    %1161 = vmatprep.subr.mxu0 %v315
    %1162 = vmatpush1.msra.mxu0 %v314
    %1163 = vmatprep.subr.mxu0 %v323
    %1164 = vmatpush1.msra.mxu0 %v322
    %1165 = vmatprep.subr.mxu0 %v331
    %1166 = vmatpush1.msra.mxu0 %v330
    %1167 = vmatprep.mubr.f32.mxu0 %v75
    %1168 = vmatmul.mubr.f32.gmra.mrb[0].mxu0 %v74
    %v1169 = vpop.f32.mrb[0].mxu0
    %v1170 = vadd.f32 %v861, %v1169
    %v1171 = vpop.f32.mrb[0].mxu0
    %v1172 = vadd.f32 %v865, %v1171
    %1173 = vdwg.mxu0
    %1174 = vmatprep.subr.mxu0 %v339
    %1175 = vmatpush1.msra.mxu0 %v338
    %1176 = vmatprep.subr.mxu0 %v347
    %1177 = vmatpush1.msra.mxu0 %v346
    %1178 = vmatprep.subr.mxu0 %v355
    %1179 = vmatpush1.msra.mxu0 %v354
    %1180 = vmatprep.subr.mxu0 %v363
    %1181 = vmatpush1.msra.mxu0 %v362
    %1182 = vmatprep.subr.mxu0 %v371
    %1183 = vmatpush1.msra.mxu0 %v370
    %1184 = vmatprep.subr.mxu0 %v379
    %1185 = vmatpush1.msra.mxu0 %v378
    %1186 = vmatprep.subr.mxu0 %v387
    %1187 = vmatpush1.msra.mxu0 %v386
    %1188 = vmatprep.subr.mxu0 %v395
    %1189 = vmatpush1.msra.mxu0 %v394
    %1190 = vmatprep.subr.mxu0 %v403
    %1191 = vmatpush1.msra.mxu0 %v402
    %1192 = vmatprep.subr.mxu0 %v411
    %1193 = vmatpush1.msra.mxu0 %v410
    %1194 = vmatprep.subr.mxu0 %v419
    %1195 = vmatpush1.msra.mxu0 %v418
    %1196 = vmatprep.subr.mxu0 %v427
    %1197 = vmatpush1.msra.mxu0 %v426
    %1198 = vmatprep.subr.mxu0 %v435
    %1199 = vmatpush1.msra.mxu0 %v434
    %1200 = vmatprep.subr.mxu0 %v443
    %1201 = vmatpush1.msra.mxu0 %v442
    %1202 = vmatprep.subr.mxu0 %v451
    %1203 = vmatpush1.msra.mxu0 %v450
    %1204 = vmatprep.subr.mxu0 %v459
    %1205 = vmatpush1.msra.mxu0 %v458
    %1206 = vmatprep.subr.mxu0 %v467
    %1207 = vmatpush1.msra.mxu0 %v466
    %1208 = vmatprep.subr.mxu0 %v475
    %1209 = vmatpush1.msra.mxu0 %v474
    %1210 = vmatprep.subr.mxu0 %v483
    %1211 = vmatpush1.msra.mxu0 %v482
    %1212 = vmatprep.subr.mxu0 %v491
    %1213 = vmatpush1.msra.mxu0 %v490
    %1214 = vmatprep.subr.mxu0 %v499
    %1215 = vmatpush1.msra.mxu0 %v498
    %1216 = vmatprep.subr.mxu0 %v507
    %1217 = vmatpush1.msra.mxu0 %v506
    %1218 = vmatprep.subr.mxu0 %v515
    %1219 = vmatpush1.msra.mxu0 %v514
    %1220 = vmatprep.subr.mxu0 %v523
    %1221 = vmatpush1.msra.mxu0 %v522
    %1222 = vmatprep.subr.mxu0 %v531
    %1223 = vmatpush1.msra.mxu0 %v530
    %1224 = vmatprep.subr.mxu0 %v539
    %1225 = vmatpush1.msra.mxu0 %v538
    %1226 = vmatprep.subr.mxu0 %v547
    %1227 = vmatpush1.msra.mxu0 %v546
    %1228 = vmatprep.subr.mxu0 %v555
    %1229 = vmatpush1.msra.mxu0 %v554
    %1230 = vmatprep.subr.mxu0 %v563
    %1231 = vmatpush1.msra.mxu0 %v562
    %1232 = vmatprep.subr.mxu0 %v571
    %1233 = vmatpush1.msra.mxu0 %v570
    %1234 = vmatprep.subr.mxu0 %v579
    %1235 = vmatpush1.msra.mxu0 %v578
    %1236 = vmatprep.subr.mxu0 %v587
    %1237 = vmatpush1.msra.mxu0 %v586
    %1238 = vmatprep.mubr.f32.mxu0 %v77
    %1239 = vmatmul.mubr.f32.gmra.mrb[0].mxu0 %v76
    %v1240 = vpop.f32.mrb[0].mxu0
    %v1241 = vadd.f32 %v1170, %v1240
    %v1242 = vpop.f32.mrb[0].mxu0
    %v1243 = vadd.f32 %v1172, %v1242
    %1244 = vdwg.mxu0
    %1245 = vmatprep.subr.mxu0 %v595
    %1246 = vmatpush1.msra.mxu0 %v594
    %1247 = vmatprep.subr.mxu0 %v603
    %1248 = vmatpush1.msra.mxu0 %v602
    %1249 = vmatprep.subr.mxu0 %v611
    %1250 = vmatpush1.msra.mxu0 %v610
    %1251 = vmatprep.subr.mxu0 %v619
    %1252 = vmatpush1.msra.mxu0 %v618
    %1253 = vmatprep.subr.mxu0 %v627
    %1254 = vmatpush1.msra.mxu0 %v626
    %1255 = vmatprep.subr.mxu0 %v635
    %1256 = vmatpush1.msra.mxu0 %v634
    %1257 = vmatprep.subr.mxu0 %v643
    %1258 = vmatpush1.msra.mxu0 %v642
    %1259 = vmatprep.subr.mxu0 %v651
    %1260 = vmatpush1.msra.mxu0 %v650
    %1261 = vmatprep.subr.mxu0 %v659
    %1262 = vmatpush1.msra.mxu0 %v658
    %1263 = vmatprep.subr.mxu0 %v667
    %1264 = vmatpush1.msra.mxu0 %v666
    %1265 = vmatprep.subr.mxu0 %v675
    %1266 = vmatpush1.msra.mxu0 %v674
    %1267 = vmatprep.subr.mxu0 %v683
    %1268 = vmatpush1.msra.mxu0 %v682
    %1269 = vmatprep.subr.mxu0 %v691
    %1270 = vmatpush1.msra.mxu0 %v690
    %1271 = vmatprep.subr.mxu0 %v699
    %1272 = vmatpush1.msra.mxu0 %v698
    %1273 = vmatprep.subr.mxu0 %v707
    %1274 = vmatpush1.msra.mxu0 %v706
    %1275 = vmatprep.subr.mxu0 %v715
    %1276 = vmatpush1.msra.mxu0 %v714
    %1277 = vmatprep.subr.mxu0 %v723
    %1278 = vmatpush1.msra.mxu0 %v722
    %1279 = vmatprep.subr.mxu0 %v731
    %1280 = vmatpush1.msra.mxu0 %v730
    %1281 = vmatprep.subr.mxu0 %v739
    %1282 = vmatpush1.msra.mxu0 %v738
    %1283 = vmatprep.subr.mxu0 %v747
    %1284 = vmatpush1.msra.mxu0 %v746
    %1285 = vmatprep.subr.mxu0 %v755
    %1286 = vmatpush1.msra.mxu0 %v754
    %1287 = vmatprep.subr.mxu0 %v763
    %1288 = vmatpush1.msra.mxu0 %v762
    %1289 = vmatprep.subr.mxu0 %v771
    %1290 = vmatpush1.msra.mxu0 %v770
    %1291 = vmatprep.subr.mxu0 %v779
    %1292 = vmatpush1.msra.mxu0 %v778
    %1293 = vmatprep.subr.mxu0 %v787
    %1294 = vmatpush1.msra.mxu0 %v786
    %1295 = vmatprep.subr.mxu0 %v795
    %1296 = vmatpush1.msra.mxu0 %v794
    %1297 = vmatprep.subr.mxu0 %v803
    %1298 = vmatpush1.msra.mxu0 %v802
    %1299 = vmatprep.subr.mxu0 %v811
    %1300 = vmatpush1.msra.mxu0 %v810
    %1301 = vmatprep.subr.mxu0 %v819
    %1302 = vmatpush1.msra.mxu0 %v818
    %1303 = vmatprep.subr.mxu0 %v827
    %1304 = vmatpush1.msra.mxu0 %v826
    %1305 = vmatprep.subr.mxu0 %v835
    %1306 = vmatpush1.msra.mxu0 %v834
    %1307 = vmatprep.subr.mxu0 %v843
    %1308 = vmatpush1.msra.mxu0 %v842
    %1309 = vmatprep.mubr.f32.mxu0 %v79
    %1310 = vmatmul.mubr.f32.gmra.mrb[0].mxu0 %v78
    %v1311 = vpop.f32.mrb[0].mxu0
    %v1312 = vadd.f32 %v1241, %v1311
    %v1313 = vpop.f32.mrb[0].mxu0
    %v1314 = vadd.f32 %v1243, %v1313
    %1315 = vdwg.mxu0
    %1316 = vmatprep.subr.mxu0 %v85
    %1317 = vmatpush1.msra.mxu0 %v84
    %1318 = vmatprep.subr.mxu0 %v93
    %1319 = vmatpush1.msra.mxu0 %v92
    %1320 = vmatprep.subr.mxu0 %v101
    %1321 = vmatpush1.msra.mxu0 %v100
    %1322 = vmatprep.subr.mxu0 %v109
    %1323 = vmatpush1.msra.mxu0 %v108
    %1324 = vmatprep.subr.mxu0 %v117
    %1325 = vmatpush1.msra.mxu0 %v116
    %1326 = vmatprep.subr.mxu0 %v125
    %1327 = vmatpush1.msra.mxu0 %v124
    %1328 = vmatprep.subr.mxu0 %v133
    %1329 = vmatpush1.msra.mxu0 %v132
    %1330 = vmatprep.subr.mxu0 %v141
    %1331 = vmatpush1.msra.mxu0 %v140
    %1332 = vmatprep.subr.mxu0 %v149
    %1333 = vmatpush1.msra.mxu0 %v148
    %1334 = vmatprep.subr.mxu0 %v157
    %1335 = vmatpush1.msra.mxu0 %v156
    %1336 = vmatprep.subr.mxu0 %v165
    %1337 = vmatpush1.msra.mxu0 %v164
    %1338 = vmatprep.subr.mxu0 %v173
    %1339 = vmatpush1.msra.mxu0 %v172
    %1340 = vmatprep.subr.mxu0 %v181
    %1341 = vmatpush1.msra.mxu0 %v180
    %1342 = vmatprep.subr.mxu0 %v189
    %1343 = vmatpush1.msra.mxu0 %v188
    %1344 = vmatprep.subr.mxu0 %v197
    %1345 = vmatpush1.msra.mxu0 %v196
    %1346 = vmatprep.subr.mxu0 %v205
    %1347 = vmatpush1.msra.mxu0 %v204
    %1348 = vmatprep.subr.mxu0 %v213
    %1349 = vmatpush1.msra.mxu0 %v212
    %1350 = vmatprep.subr.mxu0 %v221
    %1351 = vmatpush1.msra.mxu0 %v220
    %1352 = vmatprep.subr.mxu0 %v229
    %1353 = vmatpush1.msra.mxu0 %v228
    %1354 = vmatprep.subr.mxu0 %v237
    %1355 = vmatpush1.msra.mxu0 %v236
    %1356 = vmatprep.subr.mxu0 %v245
    %1357 = vmatpush1.msra.mxu0 %v244
    %1358 = vmatprep.subr.mxu0 %v253
    %1359 = vmatpush1.msra.mxu0 %v252
    %1360 = vmatprep.subr.mxu0 %v261
    %1361 = vmatpush1.msra.mxu0 %v260
    %1362 = vmatprep.subr.mxu0 %v269
    %1363 = vmatpush1.msra.mxu0 %v268
    %1364 = vmatprep.subr.mxu0 %v277
    %1365 = vmatpush1.msra.mxu0 %v276
    %1366 = vmatprep.subr.mxu0 %v285
    %1367 = vmatpush1.msra.mxu0 %v284
    %1368 = vmatprep.subr.mxu0 %v293
    %1369 = vmatpush1.msra.mxu0 %v292
    %1370 = vmatprep.subr.mxu0 %v301
    %1371 = vmatpush1.msra.mxu0 %v300
    %1372 = vmatprep.subr.mxu0 %v309
    %1373 = vmatpush1.msra.mxu0 %v308
    %1374 = vmatprep.subr.mxu0 %v317
    %1375 = vmatpush1.msra.mxu0 %v316
    %1376 = vmatprep.subr.mxu0 %v325
    %1377 = vmatpush1.msra.mxu0 %v324
    %1378 = vmatprep.subr.mxu0 %v333
    %1379 = vmatpush1.msra.mxu0 %v332
    %1380 = vmatprep.mubr.f32.mxu0 %v75
    %1381 = vmatmul.mubr.f32.gmra.mrb[0].mxu0 %v74
    %v1382 = vpop.f32.mrb[0].mxu0
    %v1383 = vadd.f32 %v869, %v1382
    %v1384 = vpop.f32.mrb[0].mxu0
    %v1385 = vadd.f32 %v873, %v1384
    %1386 = vdwg.mxu0
    %1387 = vmatprep.subr.mxu0 %v341
    %1388 = vmatpush1.msra.mxu0 %v340
    %1389 = vmatprep.subr.mxu0 %v349
    %1390 = vmatpush1.msra.mxu0 %v348
    %1391 = vmatprep.subr.mxu0 %v357
    %1392 = vmatpush1.msra.mxu0 %v356
    %1393 = vmatprep.subr.mxu0 %v365
    %1394 = vmatpush1.msra.mxu0 %v364
    %1395 = vmatprep.subr.mxu0 %v373
    %1396 = vmatpush1.msra.mxu0 %v372
    %1397 = vmatprep.subr.mxu0 %v381
    %1398 = vmatpush1.msra.mxu0 %v380
    %1399 = vmatprep.subr.mxu0 %v389
    %1400 = vmatpush1.msra.mxu0 %v388
    %1401 = vmatprep.subr.mxu0 %v397
    %1402 = vmatpush1.msra.mxu0 %v396
    %1403 = vmatprep.subr.mxu0 %v405
    %1404 = vmatpush1.msra.mxu0 %v404
    %1405 = vmatprep.subr.mxu0 %v413
    %1406 = vmatpush1.msra.mxu0 %v412
    %1407 = vmatprep.subr.mxu0 %v421
    %1408 = vmatpush1.msra.mxu0 %v420
    %1409 = vmatprep.subr.mxu0 %v429
    %1410 = vmatpush1.msra.mxu0 %v428
    %1411 = vmatprep.subr.mxu0 %v437
    %1412 = vmatpush1.msra.mxu0 %v436
    %1413 = vmatprep.subr.mxu0 %v445
    %1414 = vmatpush1.msra.mxu0 %v444
    %1415 = vmatprep.subr.mxu0 %v453
    %1416 = vmatpush1.msra.mxu0 %v452
    %1417 = vmatprep.subr.mxu0 %v461
    %1418 = vmatpush1.msra.mxu0 %v460
    %1419 = vmatprep.subr.mxu0 %v469
    %1420 = vmatpush1.msra.mxu0 %v468
    %1421 = vmatprep.subr.mxu0 %v477
    %1422 = vmatpush1.msra.mxu0 %v476
    %1423 = vmatprep.subr.mxu0 %v485
    %1424 = vmatpush1.msra.mxu0 %v484
    %1425 = vmatprep.subr.mxu0 %v493
    %1426 = vmatpush1.msra.mxu0 %v492
    %1427 = vmatprep.subr.mxu0 %v501
    %1428 = vmatpush1.msra.mxu0 %v500
    %1429 = vmatprep.subr.mxu0 %v509
    %1430 = vmatpush1.msra.mxu0 %v508
    %1431 = vmatprep.subr.mxu0 %v517
    %1432 = vmatpush1.msra.mxu0 %v516
    %1433 = vmatprep.subr.mxu0 %v525
    %1434 = vmatpush1.msra.mxu0 %v524
    %1435 = vmatprep.subr.mxu0 %v533
    %1436 = vmatpush1.msra.mxu0 %v532
    %1437 = vmatprep.subr.mxu0 %v541
    %1438 = vmatpush1.msra.mxu0 %v540
    %1439 = vmatprep.subr.mxu0 %v549
    %1440 = vmatpush1.msra.mxu0 %v548
    %1441 = vmatprep.subr.mxu0 %v557
    %1442 = vmatpush1.msra.mxu0 %v556
    %1443 = vmatprep.subr.mxu0 %v565
    %1444 = vmatpush1.msra.mxu0 %v564
    %1445 = vmatprep.subr.mxu0 %v573
    %1446 = vmatpush1.msra.mxu0 %v572
    %1447 = vmatprep.subr.mxu0 %v581
    %1448 = vmatpush1.msra.mxu0 %v580
    %1449 = vmatprep.subr.mxu0 %v589
    %1450 = vmatpush1.msra.mxu0 %v588
    %1451 = vmatprep.mubr.f32.mxu0 %v77
    %1452 = vmatmul.mubr.f32.gmra.mrb[0].mxu0 %v76
    %v1453 = vpop.f32.mrb[0].mxu0
    %v1454 = vadd.f32 %v1383, %v1453
    %v1455 = vpop.f32.mrb[0].mxu0
    %v1456 = vadd.f32 %v1385, %v1455
    %1457 = vdwg.mxu0
    %1458 = vmatprep.subr.mxu0 %v597
    %1459 = vmatpush1.msra.mxu0 %v596
    %1460 = vmatprep.subr.mxu0 %v605
    %1461 = vmatpush1.msra.mxu0 %v604
    %1462 = vmatprep.subr.mxu0 %v613
    %1463 = vmatpush1.msra.mxu0 %v612
    %1464 = vmatprep.subr.mxu0 %v621
    %1465 = vmatpush1.msra.mxu0 %v620
    %1466 = vmatprep.subr.mxu0 %v629
    %1467 = vmatpush1.msra.mxu0 %v628
    %1468 = vmatprep.subr.mxu0 %v637
    %1469 = vmatpush1.msra.mxu0 %v636
    %1470 = vmatprep.subr.mxu0 %v645
    %1471 = vmatpush1.msra.mxu0 %v644
    %1472 = vmatprep.subr.mxu0 %v653
    %1473 = vmatpush1.msra.mxu0 %v652
    %1474 = vmatprep.subr.mxu0 %v661
    %1475 = vmatpush1.msra.mxu0 %v660
    %1476 = vmatprep.subr.mxu0 %v669
    %1477 = vmatpush1.msra.mxu0 %v668
    %1478 = vmatprep.subr.mxu0 %v677
    %1479 = vmatpush1.msra.mxu0 %v676
    %1480 = vmatprep.subr.mxu0 %v685
    %1481 = vmatpush1.msra.mxu0 %v684
    %1482 = vmatprep.subr.mxu0 %v693
    %1483 = vmatpush1.msra.mxu0 %v692
    %1484 = vmatprep.subr.mxu0 %v701
    %1485 = vmatpush1.msra.mxu0 %v700
    %1486 = vmatprep.subr.mxu0 %v709
    %1487 = vmatpush1.msra.mxu0 %v708
    %1488 = vmatprep.subr.mxu0 %v717
    %1489 = vmatpush1.msra.mxu0 %v716
    %1490 = vmatprep.subr.mxu0 %v725
    %1491 = vmatpush1.msra.mxu0 %v724
    %1492 = vmatprep.subr.mxu0 %v733
    %1493 = vmatpush1.msra.mxu0 %v732
    %1494 = vmatprep.subr.mxu0 %v741
    %1495 = vmatpush1.msra.mxu0 %v740
    %1496 = vmatprep.subr.mxu0 %v749
    %1497 = vmatpush1.msra.mxu0 %v748
    %1498 = vmatprep.subr.mxu0 %v757
    %1499 = vmatpush1.msra.mxu0 %v756
    %1500 = vmatprep.subr.mxu0 %v765
    %1501 = vmatpush1.msra.mxu0 %v764
    %1502 = vmatprep.subr.mxu0 %v773
    %1503 = vmatpush1.msra.mxu0 %v772
    %1504 = vmatprep.subr.mxu0 %v781
    %1505 = vmatpush1.msra.mxu0 %v780
    %1506 = vmatprep.subr.mxu0 %v789
    %1507 = vmatpush1.msra.mxu0 %v788
    %1508 = vmatprep.subr.mxu0 %v797
    %1509 = vmatpush1.msra.mxu0 %v796
    %1510 = vmatprep.subr.mxu0 %v805
    %1511 = vmatpush1.msra.mxu0 %v804
    %1512 = vmatprep.subr.mxu0 %v813
    %1513 = vmatpush1.msra.mxu0 %v812
    %1514 = vmatprep.subr.mxu0 %v821
    %1515 = vmatpush1.msra.mxu0 %v820
    %1516 = vmatprep.subr.mxu0 %v829
    %1517 = vmatpush1.msra.mxu0 %v828
    %1518 = vmatprep.subr.mxu0 %v837
    %1519 = vmatpush1.msra.mxu0 %v836
    %1520 = vmatprep.subr.mxu0 %v845
    %1521 = vmatpush1.msra.mxu0 %v844
    %1522 = vmatprep.mubr.f32.mxu0 %v79
    %1523 = vmatmul.mubr.f32.gmra.mrb[0].mxu0 %v78
    %v1524 = vpop.f32.mrb[0].mxu0
    %v1525 = vadd.f32 %v1454, %v1524
    %v1526 = vpop.f32.mrb[0].mxu0
    %v1527 = vadd.f32 %v1456, %v1526
    %1528 = vdwg.mxu0
    %1529 = vmatprep.subr.mxu0 %v87
    %1530 = vmatpush1.msra.mxu0 %v86
    %1531 = vmatprep.subr.mxu0 %v95
    %1532 = vmatpush1.msra.mxu0 %v94
    %1533 = vmatprep.subr.mxu0 %v103
    %1534 = vmatpush1.msra.mxu0 %v102
    %1535 = vmatprep.subr.mxu0 %v111
    %1536 = vmatpush1.msra.mxu0 %v110
    %1537 = vmatprep.subr.mxu0 %v119
    %1538 = vmatpush1.msra.mxu0 %v118
    %1539 = vmatprep.subr.mxu0 %v127
    %1540 = vmatpush1.msra.mxu0 %v126
    %1541 = vmatprep.subr.mxu0 %v135
    %1542 = vmatpush1.msra.mxu0 %v134
    %1543 = vmatprep.subr.mxu0 %v143
    %1544 = vmatpush1.msra.mxu0 %v142
    %1545 = vmatprep.subr.mxu0 %v151
    %1546 = vmatpush1.msra.mxu0 %v150
    %1547 = vmatprep.subr.mxu0 %v159
    %1548 = vmatpush1.msra.mxu0 %v158
    %1549 = vmatprep.subr.mxu0 %v167
    %1550 = vmatpush1.msra.mxu0 %v166
    %1551 = vmatprep.subr.mxu0 %v175
    %1552 = vmatpush1.msra.mxu0 %v174
    %1553 = vmatprep.subr.mxu0 %v183
    %1554 = vmatpush1.msra.mxu0 %v182
    %1555 = vmatprep.subr.mxu0 %v191
    %1556 = vmatpush1.msra.mxu0 %v190
    %1557 = vmatprep.subr.mxu0 %v199
    %1558 = vmatpush1.msra.mxu0 %v198
    %1559 = vmatprep.subr.mxu0 %v207
    %1560 = vmatpush1.msra.mxu0 %v206
    %1561 = vmatprep.subr.mxu0 %v215
    %1562 = vmatpush1.msra.mxu0 %v214
    %1563 = vmatprep.subr.mxu0 %v223
    %1564 = vmatpush1.msra.mxu0 %v222
    %1565 = vmatprep.subr.mxu0 %v231
    %1566 = vmatpush1.msra.mxu0 %v230
    %1567 = vmatprep.subr.mxu0 %v239
    %1568 = vmatpush1.msra.mxu0 %v238
    %1569 = vmatprep.subr.mxu0 %v247
    %1570 = vmatpush1.msra.mxu0 %v246
    %1571 = vmatprep.subr.mxu0 %v255
    %1572 = vmatpush1.msra.mxu0 %v254
    %1573 = vmatprep.subr.mxu0 %v263
    %1574 = vmatpush1.msra.mxu0 %v262
    %1575 = vmatprep.subr.mxu0 %v271
    %1576 = vmatpush1.msra.mxu0 %v270
    %1577 = vmatprep.subr.mxu0 %v279
    %1578 = vmatpush1.msra.mxu0 %v278
    %1579 = vmatprep.subr.mxu0 %v287
    %1580 = vmatpush1.msra.mxu0 %v286
    %1581 = vmatprep.subr.mxu0 %v295
    %1582 = vmatpush1.msra.mxu0 %v294
    %1583 = vmatprep.subr.mxu0 %v303
    %1584 = vmatpush1.msra.mxu0 %v302
    %1585 = vmatprep.subr.mxu0 %v311
    %1586 = vmatpush1.msra.mxu0 %v310
    %1587 = vmatprep.subr.mxu0 %v319
    %1588 = vmatpush1.msra.mxu0 %v318
    %1589 = vmatprep.subr.mxu0 %v327
    %1590 = vmatpush1.msra.mxu0 %v326
    %1591 = vmatprep.subr.mxu0 %v335
    %1592 = vmatpush1.msra.mxu0 %v334
    %1593 = vmatprep.mubr.f32.mxu0 %v75
    %1594 = vmatmul.mubr.f32.gmra.mrb[0].mxu0 %v74
    %v1595 = vpop.f32.mrb[0].mxu0
    %v1596 = vadd.f32 %v877, %v1595
    %v1597 = vpop.f32.mrb[0].mxu0
    %v1598 = vadd.f32 %v881, %v1597
    %1599 = vdwg.mxu0
    %1600 = vmatprep.subr.mxu0 %v343
    %1601 = vmatpush1.msra.mxu0 %v342
    %1602 = vmatprep.subr.mxu0 %v351
    %1603 = vmatpush1.msra.mxu0 %v350
    %1604 = vmatprep.subr.mxu0 %v359
    %1605 = vmatpush1.msra.mxu0 %v358
    %1606 = vmatprep.subr.mxu0 %v367
    %1607 = vmatpush1.msra.mxu0 %v366
    %1608 = vmatprep.subr.mxu0 %v375
    %1609 = vmatpush1.msra.mxu0 %v374
    %1610 = vmatprep.subr.mxu0 %v383
    %1611 = vmatpush1.msra.mxu0 %v382
    %1612 = vmatprep.subr.mxu0 %v391
    %1613 = vmatpush1.msra.mxu0 %v390
    %1614 = vmatprep.subr.mxu0 %v399
    %1615 = vmatpush1.msra.mxu0 %v398
    %1616 = vmatprep.subr.mxu0 %v407
    %1617 = vmatpush1.msra.mxu0 %v406
    %1618 = vmatprep.subr.mxu0 %v415
    %1619 = vmatpush1.msra.mxu0 %v414
    %1620 = vmatprep.subr.mxu0 %v423
    %1621 = vmatpush1.msra.mxu0 %v422
    %1622 = vmatprep.subr.mxu0 %v431
    %1623 = vmatpush1.msra.mxu0 %v430
    %1624 = vmatprep.subr.mxu0 %v439
    %1625 = vmatpush1.msra.mxu0 %v438
    %1626 = vmatprep.subr.mxu0 %v447
    %1627 = vmatpush1.msra.mxu0 %v446
    %1628 = vmatprep.subr.mxu0 %v455
    %1629 = vmatpush1.msra.mxu0 %v454
    %1630 = vmatprep.subr.mxu0 %v463
    %1631 = vmatpush1.msra.mxu0 %v462
    %1632 = vmatprep.subr.mxu0 %v471
    %1633 = vmatpush1.msra.mxu0 %v470
    %1634 = vmatprep.subr.mxu0 %v479
    %1635 = vmatpush1.msra.mxu0 %v478
    %1636 = vmatprep.subr.mxu0 %v487
    %1637 = vmatpush1.msra.mxu0 %v486
    %1638 = vmatprep.subr.mxu0 %v495
    %1639 = vmatpush1.msra.mxu0 %v494
    %1640 = vmatprep.subr.mxu0 %v503
    %1641 = vmatpush1.msra.mxu0 %v502
    %1642 = vmatprep.subr.mxu0 %v511
    %1643 = vmatpush1.msra.mxu0 %v510
    %1644 = vmatprep.subr.mxu0 %v519
    %1645 = vmatpush1.msra.mxu0 %v518
    %1646 = vmatprep.subr.mxu0 %v527
    %1647 = vmatpush1.msra.mxu0 %v526
    %1648 = vmatprep.subr.mxu0 %v535
    %1649 = vmatpush1.msra.mxu0 %v534
    %1650 = vmatprep.subr.mxu0 %v543
    %1651 = vmatpush1.msra.mxu0 %v542
    %1652 = vmatprep.subr.mxu0 %v551
    %1653 = vmatpush1.msra.mxu0 %v550
    %1654 = vmatprep.subr.mxu0 %v559
    %1655 = vmatpush1.msra.mxu0 %v558
    %1656 = vmatprep.subr.mxu0 %v567
    %1657 = vmatpush1.msra.mxu0 %v566
    %1658 = vmatprep.subr.mxu0 %v575
    %1659 = vmatpush1.msra.mxu0 %v574
    %1660 = vmatprep.subr.mxu0 %v583
    %1661 = vmatpush1.msra.mxu0 %v582
    %1662 = vmatprep.subr.mxu0 %v591
    %1663 = vmatpush1.msra.mxu0 %v590
    %1664 = vmatprep.mubr.f32.mxu0 %v77
    %1665 = vmatmul.mubr.f32.gmra.mrb[0].mxu0 %v76
    %v1666 = vpop.f32.mrb[0].mxu0
    %v1667 = vadd.f32 %v1596, %v1666
    %v1668 = vpop.f32.mrb[0].mxu0
    %v1669 = vadd.f32 %v1598, %v1668
    %1670 = vdwg.mxu0
    %1671 = vmatprep.subr.mxu0 %v599
    %1672 = vmatpush1.msra.mxu0 %v598
    %1673 = vmatprep.subr.mxu0 %v607
    %1674 = vmatpush1.msra.mxu0 %v606
    %1675 = vmatprep.subr.mxu0 %v615
    %1676 = vmatpush1.msra.mxu0 %v614
    %1677 = vmatprep.subr.mxu0 %v623
    %1678 = vmatpush1.msra.mxu0 %v622
    %1679 = vmatprep.subr.mxu0 %v631
    %1680 = vmatpush1.msra.mxu0 %v630
    %1681 = vmatprep.subr.mxu0 %v639
    %1682 = vmatpush1.msra.mxu0 %v638
    %1683 = vmatprep.subr.mxu0 %v647
    %1684 = vmatpush1.msra.mxu0 %v646
    %1685 = vmatprep.subr.mxu0 %v655
    %1686 = vmatpush1.msra.mxu0 %v654
    %1687 = vmatprep.subr.mxu0 %v663
    %1688 = vmatpush1.msra.mxu0 %v662
    %1689 = vmatprep.subr.mxu0 %v671
    %1690 = vmatpush1.msra.mxu0 %v670
    %1691 = vmatprep.subr.mxu0 %v679
    %1692 = vmatpush1.msra.mxu0 %v678
    %1693 = vmatprep.subr.mxu0 %v687
    %1694 = vmatpush1.msra.mxu0 %v686
    %1695 = vmatprep.subr.mxu0 %v695
    %1696 = vmatpush1.msra.mxu0 %v694
    %1697 = vmatprep.subr.mxu0 %v703
    %1698 = vmatpush1.msra.mxu0 %v702
    %1699 = vmatprep.subr.mxu0 %v711
    %1700 = vmatpush1.msra.mxu0 %v710
    %1701 = vmatprep.subr.mxu0 %v719
    %1702 = vmatpush1.msra.mxu0 %v718
    %1703 = vmatprep.subr.mxu0 %v727
    %1704 = vmatpush1.msra.mxu0 %v726
    %1705 = vmatprep.subr.mxu0 %v735
    %1706 = vmatpush1.msra.mxu0 %v734
    %1707 = vmatprep.subr.mxu0 %v743
    %1708 = vmatpush1.msra.mxu0 %v742
    %1709 = vmatprep.subr.mxu0 %v751
    %1710 = vmatpush1.msra.mxu0 %v750
    %1711 = vmatprep.subr.mxu0 %v759
    %1712 = vmatpush1.msra.mxu0 %v758
    %1713 = vmatprep.subr.mxu0 %v767
    %1714 = vmatpush1.msra.mxu0 %v766
    %1715 = vmatprep.subr.mxu0 %v775
    %1716 = vmatpush1.msra.mxu0 %v774
    %1717 = vmatprep.subr.mxu0 %v783
    %1718 = vmatpush1.msra.mxu0 %v782
    %1719 = vmatprep.subr.mxu0 %v791
    %1720 = vmatpush1.msra.mxu0 %v790
    %1721 = vmatprep.subr.mxu0 %v799
    %1722 = vmatpush1.msra.mxu0 %v798
    %1723 = vmatprep.subr.mxu0 %v807
    %1724 = vmatpush1.msra.mxu0 %v806
    %1725 = vmatprep.subr.mxu0 %v815
    %1726 = vmatpush1.msra.mxu0 %v814
    %1727 = vmatprep.subr.mxu0 %v823
    %1728 = vmatpush1.msra.mxu0 %v822
    %1729 = vmatprep.subr.mxu0 %v831
    %1730 = vmatpush1.msra.mxu0 %v830
    %1731 = vmatprep.subr.mxu0 %v839
    %1732 = vmatpush1.msra.mxu0 %v838
    %1733 = vmatprep.subr.mxu0 %v847
    %1734 = vmatpush1.msra.mxu0 %v846
    %1735 = vmatprep.mubr.f32.mxu0 %v79
    %1736 = vmatmul.mubr.f32.gmra.mrb[0].mxu0 %v78
    %v1737 = vpop.f32.mrb[0].mxu0
    %v1738 = vadd.f32 %v1667, %v1737
    %v1739 = vpop.f32.mrb[0].mxu0
    %v1740 = vadd.f32 %v1669, %v1739
    %1741 = vdwg.mxu0
    %v1742 = vmax.f32 %v1099, 0.0
    %v1743 = vmax.f32 %v1101, 0.0
    %v1744 = vmax.f32 %v1312, 0.0
    %v1745 = vmax.f32 %v1314, 0.0
    %v1746 = vmax.f32 %v1525, 0.0
    %v1747 = vmax.f32 %v1527, 0.0
    %v1748 = vmax.f32 %v1738, 0.0
    %v1749 = vmax.f32 %v1740, 0.0
    %v1750 = vld [vmem:[#allocation6] sm:$0xff]
    %v1751 = vld [vmem:[#allocation6 + $0x8] sm:$0xff]
    %v1752 = vld [vmem:[#allocation6 + $0x10] sm:$0xff]
    %v1753 = vld [vmem:[#allocation6 + $0x18] sm:$0xff]
    %v1754 = vld [vmem:[#allocation6 + $0x20] sm:$0xff]
    %v1755 = vld [vmem:[#allocation6 + $0x28] sm:$0xff]
    %v1756 = vld [vmem:[#allocation6 + $0x30] sm:$0xff]
    %v1757 = vld [vmem:[#allocation6 + $0x38] sm:$0xff]
    %v1758 = vld [vmem:[#allocation6 + $0x40] sm:$0xff]
    %v1759 = vld [vmem:[#allocation6 + $0x48] sm:$0xff]
    %v1760 = vld [vmem:[#allocation6 + $0x50] sm:$0xff]
    %v1761 = vld [vmem:[#allocation6 + $0x58] sm:$0xff]
    %v1762 = vld [vmem:[#allocation6 + $0x60] sm:$0xff]
    %v1763 = vld [vmem:[#allocation6 + $0x68] sm:$0xff]
    %v1764 = vld [vmem:[#allocation6 + $0x70] sm:$0xff]
    %v1765 = vld [vmem:[#allocation6 + $0x78] sm:$0xff]
    %v1766 = vld [vmem:[#allocation6 + $0x80] sm:$0xff]
    %v1767 = vld [vmem:[#allocation6 + $0x88] sm:$0xff]
    %v1768 = vld [vmem:[#allocation6 + $0x90] sm:$0xff]
    %v1769 = vld [vmem:[#allocation6 + $0x98] sm:$0xff]
    %v1770 = vld [vmem:[#allocation6 + $0xa0] sm:$0xff]
    %v1771 = vld [vmem:[#allocation6 + $0xa8] sm:$0xff]
    %v1772 = vld [vmem:[#allocation6 + $0xb0] sm:$0xff]
    %v1773 = vld [vmem:[#allocation6 + $0xb8] sm:$0xff]
    %v1774 = vld [vmem:[#allocation6 + $0xc0] sm:$0xff]
    %v1775 = vld [vmem:[#allocation6 + $0xc8] sm:$0xff]
    %v1776 = vld [vmem:[#allocation6 + $0xd0] sm:$0xff]
    %v1777 = vld [vmem:[#allocation6 + $0xd8] sm:$0xff]
    %v1778 = vld [vmem:[#allocation6 + $0xe0] sm:$0xff]
    %v1779 = vld [vmem:[#allocation6 + $0xe8] sm:$0xff]
    %v1780 = vld [vmem:[#allocation6 + $0xf0] sm:$0xff]
    %v1781 = vld [vmem:[#allocation6 + $0xf8] sm:$0xff]
    %v1782 = vld [vmem:[#allocation6 + $0x100] sm:$0xff]
    %v1783 = vld [vmem:[#allocation6 + $0x108] sm:$0xff]
    %v1784 = vld [vmem:[#allocation6 + $0x110] sm:$0xff]
    %v1785 = vld [vmem:[#allocation6 + $0x118] sm:$0xff]
    %v1786 = vld [vmem:[#allocation6 + $0x120] sm:$0xff]
    %v1787 = vld [vmem:[#allocation6 + $0x128] sm:$0xff]
    %v1788 = vld [vmem:[#allocation6 + $0x130] sm:$0xff]
    %v1789 = vld [vmem:[#allocation6 + $0x138] sm:$0xff]
    %v1790 = vld [vmem:[#allocation6 + $0x140] sm:$0xff]
    %v1791 = vld [vmem:[#allocation6 + $0x148] sm:$0xff]
    %v1792 = vld [vmem:[#allocation6 + $0x150] sm:$0xff]
    %v1793 = vld [vmem:[#allocation6 + $0x158] sm:$0xff]
    %v1794 = vld [vmem:[#allocation6 + $0x160] sm:$0xff]
    %v1795 = vld [vmem:[#allocation6 + $0x168] sm:$0xff]
    %v1796 = vld [vmem:[#allocation6 + $0x170] sm:$0xff]
    %v1797 = vld [vmem:[#allocation6 + $0x178] sm:$0xff]
    %v1798 = vld [vmem:[#allocation6 + $0x180] sm:$0xff]
    %v1799 = vld [vmem:[#allocation6 + $0x188] sm:$0xff]
    %v1800 = vld [vmem:[#allocation6 + $0x190] sm:$0xff]
    %v1801 = vld [vmem:[#allocation6 + $0x198] sm:$0xff]
    %v1802 = vld [vmem:[#allocation6 + $0x1a0] sm:$0xff]
    %v1803 = vld [vmem:[#allocation6 + $0x1a8] sm:$0xff]
    %v1804 = vld [vmem:[#allocation6 + $0x1b0] sm:$0xff]
    %v1805 = vld [vmem:[#allocation6 + $0x1b8] sm:$0xff]
    %v1806 = vld [vmem:[#allocation6 + $0x1c0] sm:$0xff]
    %v1807 = vld [vmem:[#allocation6 + $0x1c8] sm:$0xff]
    %v1808 = vld [vmem:[#allocation6 + $0x1d0] sm:$0xff]
    %v1809 = vld [vmem:[#allocation6 + $0x1d8] sm:$0xff]
    %v1810 = vld [vmem:[#allocation6 + $0x1e0] sm:$0xff]
    %v1811 = vld [vmem:[#allocation6 + $0x1e8] sm:$0xff]
    %v1812 = vld [vmem:[#allocation6 + $0x1f0] sm:$0xff]
    %v1813 = vld [vmem:[#allocation6 + $0x1f8] sm:$0xff]
    %v1814 = vld [vmem:[#allocation6 + $0x200] sm:$0xff]
    %v1815 = vld [vmem:[#allocation6 + $0x208] sm:$0xff]
    %v1816 = vld [vmem:[#allocation6 + $0x210] sm:$0xff]
    %v1817 = vld [vmem:[#allocation6 + $0x218] sm:$0xff]
    %v1818 = vld [vmem:[#allocation6 + $0x220] sm:$0xff]
    %v1819 = vld [vmem:[#allocation6 + $0x228] sm:$0xff]
    %v1820 = vld [vmem:[#allocation6 + $0x230] sm:$0xff]
    %v1821 = vld [vmem:[#allocation6 + $0x238] sm:$0xff]
    %v1822 = vld [vmem:[#allocation6 + $0x240] sm:$0xff]
    %v1823 = vld [vmem:[#allocation6 + $0x248] sm:$0xff]
    %v1824 = vld [vmem:[#allocation6 + $0x250] sm:$0xff]
    %v1825 = vld [vmem:[#allocation6 + $0x258] sm:$0xff]
    %v1826 = vld [vmem:[#allocation6 + $0x260] sm:$0xff]
    %v1827 = vld [vmem:[#allocation6 + $0x268] sm:$0xff]
    %v1828 = vld [vmem:[#allocation6 + $0x270] sm:$0xff]
    %v1829 = vld [vmem:[#allocation6 + $0x278] sm:$0xff]
    %v1830 = vld [vmem:[#allocation6 + $0x280] sm:$0xff]
    %v1831 = vld [vmem:[#allocation6 + $0x288] sm:$0xff]
    %v1832 = vld [vmem:[#allocation6 + $0x290] sm:$0xff]
    %v1833 = vld [vmem:[#allocation6 + $0x298] sm:$0xff]
    %v1834 = vld [vmem:[#allocation6 + $0x2a0] sm:$0xff]
    %v1835 = vld [vmem:[#allocation6 + $0x2a8] sm:$0xff]
    %v1836 = vld [vmem:[#allocation6 + $0x2b0] sm:$0xff]
    %v1837 = vld [vmem:[#allocation6 + $0x2b8] sm:$0xff]
    %v1838 = vld [vmem:[#allocation6 + $0x2c0] sm:$0xff]
    %v1839 = vld [vmem:[#allocation6 + $0x2c8] sm:$0xff]
    %v1840 = vld [vmem:[#allocation6 + $0x2d0] sm:$0xff]
    %v1841 = vld [vmem:[#allocation6 + $0x2d8] sm:$0xff]
    %v1842 = vld [vmem:[#allocation6 + $0x2e0] sm:$0xff]
    %v1843 = vld [vmem:[#allocation6 + $0x2e8] sm:$0xff]
    %v1844 = vld [vmem:[#allocation6 + $0x2f0] sm:$0xff]
    %v1845 = vld [vmem:[#allocation6 + $0x2f8] sm:$0xff]
    %v1846 = vld [vmem:[#allocation6 + $0x300] sm:$0xff]
    %v1847 = vld [vmem:[#allocation6 + $0x308] sm:$0xff]
    %v1848 = vld [vmem:[#allocation6 + $0x310] sm:$0xff]
    %v1849 = vld [vmem:[#allocation6 + $0x318] sm:$0xff]
    %v1850 = vld [vmem:[#allocation6 + $0x320] sm:$0xff]
    %v1851 = vld [vmem:[#allocation6 + $0x328] sm:$0xff]
    %v1852 = vld [vmem:[#allocation6 + $0x330] sm:$0xff]
    %v1853 = vld [vmem:[#allocation6 + $0x338] sm:$0xff]
    %v1854 = vld [vmem:[#allocation6 + $0x340] sm:$0xff]
    %v1855 = vld [vmem:[#allocation6 + $0x348] sm:$0xff]
    %v1856 = vld [vmem:[#allocation6 + $0x350] sm:$0xff]
    %v1857 = vld [vmem:[#allocation6 + $0x358] sm:$0xff]
    %v1858 = vld [vmem:[#allocation6 + $0x360] sm:$0xff]
    %v1859 = vld [vmem:[#allocation6 + $0x368] sm:$0xff]
    %v1860 = vld [vmem:[#allocation6 + $0x370] sm:$0xff]
    %v1861 = vld [vmem:[#allocation6 + $0x378] sm:$0xff]
    %v1862 = vld [vmem:[#allocation6 + $0x380] sm:$0xff]
    %v1863 = vld [vmem:[#allocation6 + $0x388] sm:$0xff]
    %v1864 = vld [vmem:[#allocation6 + $0x390] sm:$0xff]
    %v1865 = vld [vmem:[#allocation6 + $0x398] sm:$0xff]
    %v1866 = vld [vmem:[#allocation6 + $0x3a0] sm:$0xff]
    %v1867 = vld [vmem:[#allocation6 + $0x3a8] sm:$0xff]
    %v1868 = vld [vmem:[#allocation6 + $0x3b0] sm:$0xff]
    %v1869 = vld [vmem:[#allocation6 + $0x3b8] sm:$0xff]
    %v1870 = vld [vmem:[#allocation6 + $0x3c0] sm:$0xff]
    %v1871 = vld [vmem:[#allocation6 + $0x3c8] sm:$0xff]
    %v1872 = vld [vmem:[#allocation6 + $0x3d0] sm:$0xff]
    %v1873 = vld [vmem:[#allocation6 + $0x3d8] sm:$0xff]
    %v1874 = vld [vmem:[#allocation6 + $0x3e0] sm:$0xff]
    %v1875 = vld [vmem:[#allocation6 + $0x3e8] sm:$0xff]
    %v1876 = vld [vmem:[#allocation6 + $0x3f0] sm:$0xff]
    %v1877 = vld [vmem:[#allocation6 + $0x3f8] sm:$0xff]
    %v1878 = vld [vmem:[#allocation6 + $0x400] sm:$0xff]
    %v1879 = vld [vmem:[#allocation6 + $0x408] sm:$0xff]
    %v1880 = vld [vmem:[#allocation6 + $0x410] sm:$0xff]
    %v1881 = vld [vmem:[#allocation6 + $0x418] sm:$0xff]
    %v1882 = vld [vmem:[#allocation6 + $0x420] sm:$0xff]
    %v1883 = vld [vmem:[#allocation6 + $0x428] sm:$0xff]
    %v1884 = vld [vmem:[#allocation6 + $0x430] sm:$0xff]
    %v1885 = vld [vmem:[#allocation6 + $0x438] sm:$0xff]
    %v1886 = vld [vmem:[#allocation6 + $0x440] sm:$0xff]
    %v1887 = vld [vmem:[#allocation6 + $0x448] sm:$0xff]
    %v1888 = vld [vmem:[#allocation6 + $0x450] sm:$0xff]
    %v1889 = vld [vmem:[#allocation6 + $0x458] sm:$0xff]
    %v1890 = vld [vmem:[#allocation6 + $0x460] sm:$0xff]
    %v1891 = vld [vmem:[#allocation6 + $0x468] sm:$0xff]
    %v1892 = vld [vmem:[#allocation6 + $0x470] sm:$0xff]
    %v1893 = vld [vmem:[#allocation6 + $0x478] sm:$0xff]
    %v1894 = vld [vmem:[#allocation6 + $0x480] sm:$0xff]
    %v1895 = vld [vmem:[#allocation6 + $0x488] sm:$0xff]
    %v1896 = vld [vmem:[#allocation6 + $0x490] sm:$0xff]
    %v1897 = vld [vmem:[#allocation6 + $0x498] sm:$0xff]
    %v1898 = vld [vmem:[#allocation6 + $0x4a0] sm:$0xff]
    %v1899 = vld [vmem:[#allocation6 + $0x4a8] sm:$0xff]
    %v1900 = vld [vmem:[#allocation6 + $0x4b0] sm:$0xff]
    %v1901 = vld [vmem:[#allocation6 + $0x4b8] sm:$0xff]
    %v1902 = vld [vmem:[#allocation6 + $0x4c0] sm:$0xff]
    %v1903 = vld [vmem:[#allocation6 + $0x4c8] sm:$0xff]
    %v1904 = vld [vmem:[#allocation6 + $0x4d0] sm:$0xff]
    %v1905 = vld [vmem:[#allocation6 + $0x4d8] sm:$0xff]
    %v1906 = vld [vmem:[#allocation6 + $0x4e0] sm:$0xff]
    %v1907 = vld [vmem:[#allocation6 + $0x4e8] sm:$0xff]
    %v1908 = vld [vmem:[#allocation6 + $0x4f0] sm:$0xff]
    %v1909 = vld [vmem:[#allocation6 + $0x4f8] sm:$0xff]
    %v1910 = vld [vmem:[#allocation6 + $0x500] sm:$0xff]
    %v1911 = vld [vmem:[#allocation6 + $0x508] sm:$0xff]
    %v1912 = vld [vmem:[#allocation6 + $0x510] sm:$0xff]
    %v1913 = vld [vmem:[#allocation6 + $0x518] sm:$0xff]
    %v1914 = vld [vmem:[#allocation6 + $0x520] sm:$0xff]
    %v1915 = vld [vmem:[#allocation6 + $0x528] sm:$0xff]
    %v1916 = vld [vmem:[#allocation6 + $0x530] sm:$0xff]
    %v1917 = vld [vmem:[#allocation6 + $0x538] sm:$0xff]
    %v1918 = vld [vmem:[#allocation6 + $0x540] sm:$0xff]
    %v1919 = vld [vmem:[#allocation6 + $0x548] sm:$0xff]
    %v1920 = vld [vmem:[#allocation6 + $0x550] sm:$0xff]
    %v1921 = vld [vmem:[#allocation6 + $0x558] sm:$0xff]
    %v1922 = vld [vmem:[#allocation6 + $0x560] sm:$0xff]
    %v1923 = vld [vmem:[#allocation6 + $0x568] sm:$0xff]
    %v1924 = vld [vmem:[#allocation6 + $0x570] sm:$0xff]
    %v1925 = vld [vmem:[#allocation6 + $0x578] sm:$0xff]
    %v1926 = vld [vmem:[#allocation6 + $0x580] sm:$0xff]
    %v1927 = vld [vmem:[#allocation6 + $0x588] sm:$0xff]
    %v1928 = vld [vmem:[#allocation6 + $0x590] sm:$0xff]
    %v1929 = vld [vmem:[#allocation6 + $0x598] sm:$0xff]
    %v1930 = vld [vmem:[#allocation6 + $0x5a0] sm:$0xff]
    %v1931 = vld [vmem:[#allocation6 + $0x5a8] sm:$0xff]
    %v1932 = vld [vmem:[#allocation6 + $0x5b0] sm:$0xff]
    %v1933 = vld [vmem:[#allocation6 + $0x5b8] sm:$0xff]
    %v1934 = vld [vmem:[#allocation6 + $0x5c0] sm:$0xff]
    %v1935 = vld [vmem:[#allocation6 + $0x5c8] sm:$0xff]
    %v1936 = vld [vmem:[#allocation6 + $0x5d0] sm:$0xff]
    %v1937 = vld [vmem:[#allocation6 + $0x5d8] sm:$0xff]
    %v1938 = vld [vmem:[#allocation6 + $0x5e0] sm:$0xff]
    %v1939 = vld [vmem:[#allocation6 + $0x5e8] sm:$0xff]
    %v1940 = vld [vmem:[#allocation6 + $0x5f0] sm:$0xff]
    %v1941 = vld [vmem:[#allocation6 + $0x5f8] sm:$0xff]
    %v1942 = vld [vmem:[#allocation6 + $0x600] sm:$0xff]
    %v1943 = vld [vmem:[#allocation6 + $0x608] sm:$0xff]
    %v1944 = vld [vmem:[#allocation6 + $0x610] sm:$0xff]
    %v1945 = vld [vmem:[#allocation6 + $0x618] sm:$0xff]
    %v1946 = vld [vmem:[#allocation6 + $0x620] sm:$0xff]
    %v1947 = vld [vmem:[#allocation6 + $0x628] sm:$0xff]
    %v1948 = vld [vmem:[#allocation6 + $0x630] sm:$0xff]
    %v1949 = vld [vmem:[#allocation6 + $0x638] sm:$0xff]
    %v1950 = vld [vmem:[#allocation6 + $0x640] sm:$0xff]
    %v1951 = vld [vmem:[#allocation6 + $0x648] sm:$0xff]
    %v1952 = vld [vmem:[#allocation6 + $0x650] sm:$0xff]
    %v1953 = vld [vmem:[#allocation6 + $0x658] sm:$0xff]
    %v1954 = vld [vmem:[#allocation6 + $0x660] sm:$0xff]
    %v1955 = vld [vmem:[#allocation6 + $0x668] sm:$0xff]
    %v1956 = vld [vmem:[#allocation6 + $0x670] sm:$0xff]
    %v1957 = vld [vmem:[#allocation6 + $0x678] sm:$0xff]
    %v1958 = vld [vmem:[#allocation6 + $0x680] sm:$0xff]
    %v1959 = vld [vmem:[#allocation6 + $0x688] sm:$0xff]
    %v1960 = vld [vmem:[#allocation6 + $0x690] sm:$0xff]
    %v1961 = vld [vmem:[#allocation6 + $0x698] sm:$0xff]
    %v1962 = vld [vmem:[#allocation6 + $0x6a0] sm:$0xff]
    %v1963 = vld [vmem:[#allocation6 + $0x6a8] sm:$0xff]
    %v1964 = vld [vmem:[#allocation6 + $0x6b0] sm:$0xff]
    %v1965 = vld [vmem:[#allocation6 + $0x6b8] sm:$0xff]
    %v1966 = vld [vmem:[#allocation6 + $0x6c0] sm:$0xff]
    %v1967 = vld [vmem:[#allocation6 + $0x6c8] sm:$0xff]
    %v1968 = vld [vmem:[#allocation6 + $0x6d0] sm:$0xff]
    %v1969 = vld [vmem:[#allocation6 + $0x6d8] sm:$0xff]
    %v1970 = vld [vmem:[#allocation6 + $0x6e0] sm:$0xff]
    %v1971 = vld [vmem:[#allocation6 + $0x6e8] sm:$0xff]
    %v1972 = vld [vmem:[#allocation6 + $0x6f0] sm:$0xff]
    %v1973 = vld [vmem:[#allocation6 + $0x6f8] sm:$0xff]
    %v1974 = vld [vmem:[#allocation6 + $0x700] sm:$0xff]
    %v1975 = vld [vmem:[#allocation6 + $0x708] sm:$0xff]
    %v1976 = vld [vmem:[#allocation6 + $0x710] sm:$0xff]
    %v1977 = vld [vmem:[#allocation6 + $0x718] sm:$0xff]
    %v1978 = vld [vmem:[#allocation6 + $0x720] sm:$0xff]
    %v1979 = vld [vmem:[#allocation6 + $0x728] sm:$0xff]
    %v1980 = vld [vmem:[#allocation6 + $0x730] sm:$0xff]
    %v1981 = vld [vmem:[#allocation6 + $0x738] sm:$0xff]
    %v1982 = vld [vmem:[#allocation6 + $0x740] sm:$0xff]
    %v1983 = vld [vmem:[#allocation6 + $0x748] sm:$0xff]
    %v1984 = vld [vmem:[#allocation6 + $0x750] sm:$0xff]
    %v1985 = vld [vmem:[#allocation6 + $0x758] sm:$0xff]
    %v1986 = vld [vmem:[#allocation6 + $0x760] sm:$0xff]
    %v1987 = vld [vmem:[#allocation6 + $0x768] sm:$0xff]
    %v1988 = vld [vmem:[#allocation6 + $0x770] sm:$0xff]
    %v1989 = vld [vmem:[#allocation6 + $0x778] sm:$0xff]
    %v1990 = vld [vmem:[#allocation6 + $0x780] sm:$0xff]
    %v1991 = vld [vmem:[#allocation6 + $0x788] sm:$0xff]
    %v1992 = vld [vmem:[#allocation6 + $0x790] sm:$0xff]
    %v1993 = vld [vmem:[#allocation6 + $0x798] sm:$0xff]
    %v1994 = vld [vmem:[#allocation6 + $0x7a0] sm:$0xff]
    %v1995 = vld [vmem:[#allocation6 + $0x7a8] sm:$0xff]
    %v1996 = vld [vmem:[#allocation6 + $0x7b0] sm:$0xff]
    %v1997 = vld [vmem:[#allocation6 + $0x7b8] sm:$0xff]
    %v1998 = vld [vmem:[#allocation6 + $0x7c0] sm:$0xff]
    %v1999 = vld [vmem:[#allocation6 + $0x7c8] sm:$0xff]
    %v2000 = vld [vmem:[#allocation6 + $0x7d0] sm:$0xff]
    %v2001 = vld [vmem:[#allocation6 + $0x7d8] sm:$0xff]
    %v2002 = vld [vmem:[#allocation6 + $0x7e0] sm:$0xff]
    %v2003 = vld [vmem:[#allocation6 + $0x7e8] sm:$0xff]
    %v2004 = vld [vmem:[#allocation6 + $0x7f0] sm:$0xff]
    %v2005 = vld [vmem:[#allocation6 + $0x7f8] sm:$0xff]
    %v2006 = vld [vmem:[#allocation6 + $0x800] sm:$0xff]
    %v2007 = vld [vmem:[#allocation6 + $0x808] sm:$0xff]
    %v2008 = vld [vmem:[#allocation6 + $0x810] sm:$0xff]
    %v2009 = vld [vmem:[#allocation6 + $0x818] sm:$0xff]
    %v2010 = vld [vmem:[#allocation6 + $0x820] sm:$0xff]
    %v2011 = vld [vmem:[#allocation6 + $0x828] sm:$0xff]
    %v2012 = vld [vmem:[#allocation6 + $0x830] sm:$0xff]
    %v2013 = vld [vmem:[#allocation6 + $0x838] sm:$0xff]
    %v2014 = vld [vmem:[#allocation6 + $0x840] sm:$0xff]
    %v2015 = vld [vmem:[#allocation6 + $0x848] sm:$0xff]
    %v2016 = vld [vmem:[#allocation6 + $0x850] sm:$0xff]
    %v2017 = vld [vmem:[#allocation6 + $0x858] sm:$0xff]
    %v2018 = vld [vmem:[#allocation6 + $0x860] sm:$0xff]
    %v2019 = vld [vmem:[#allocation6 + $0x868] sm:$0xff]
    %v2020 = vld [vmem:[#allocation6 + $0x870] sm:$0xff]
    %v2021 = vld [vmem:[#allocation6 + $0x878] sm:$0xff]
    %v2022 = vld [vmem:[#allocation6 + $0x880] sm:$0xff]
    %v2023 = vld [vmem:[#allocation6 + $0x888] sm:$0xff]
    %v2024 = vld [vmem:[#allocation6 + $0x890] sm:$0xff]
    %v2025 = vld [vmem:[#allocation6 + $0x898] sm:$0xff]
    %v2026 = vld [vmem:[#allocation6 + $0x8a0] sm:$0xff]
    %v2027 = vld [vmem:[#allocation6 + $0x8a8] sm:$0xff]
    %v2028 = vld [vmem:[#allocation6 + $0x8b0] sm:$0xff]
    %v2029 = vld [vmem:[#allocation6 + $0x8b8] sm:$0xff]
    %v2030 = vld [vmem:[#allocation6 + $0x8c0] sm:$0xff]
    %v2031 = vld [vmem:[#allocation6 + $0x8c8] sm:$0xff]
    %v2032 = vld [vmem:[#allocation6 + $0x8d0] sm:$0xff]
    %v2033 = vld [vmem:[#allocation6 + $0x8d8] sm:$0xff]
    %v2034 = vld [vmem:[#allocation6 + $0x8e0] sm:$0xff]
    %v2035 = vld [vmem:[#allocation6 + $0x8e8] sm:$0xff]
    %v2036 = vld [vmem:[#allocation6 + $0x8f0] sm:$0xff]
    %v2037 = vld [vmem:[#allocation6 + $0x8f8] sm:$0xff]
    %v2038 = vld [vmem:[#allocation6 + $0x900] sm:$0xff]
    %v2039 = vld [vmem:[#allocation6 + $0x908] sm:$0xff]
    %v2040 = vld [vmem:[#allocation6 + $0x910] sm:$0xff]
    %v2041 = vld [vmem:[#allocation6 + $0x918] sm:$0xff]
    %v2042 = vld [vmem:[#allocation6 + $0x920] sm:$0xff]
    %v2043 = vld [vmem:[#allocation6 + $0x928] sm:$0xff]
    %v2044 = vld [vmem:[#allocation6 + $0x930] sm:$0xff]
    %v2045 = vld [vmem:[#allocation6 + $0x938] sm:$0xff]
    %v2046 = vld [vmem:[#allocation6 + $0x940] sm:$0xff]
    %v2047 = vld [vmem:[#allocation6 + $0x948] sm:$0xff]
    %v2048 = vld [vmem:[#allocation6 + $0x950] sm:$0xff]
    %v2049 = vld [vmem:[#allocation6 + $0x958] sm:$0xff]
    %v2050 = vld [vmem:[#allocation6 + $0x960] sm:$0xff]
    %v2051 = vld [vmem:[#allocation6 + $0x968] sm:$0xff]
    %v2052 = vld [vmem:[#allocation6 + $0x970] sm:$0xff]
    %v2053 = vld [vmem:[#allocation6 + $0x978] sm:$0xff]
    %v2054 = vld [vmem:[#allocation6 + $0x980] sm:$0xff]
    %v2055 = vld [vmem:[#allocation6 + $0x988] sm:$0xff]
    %v2056 = vld [vmem:[#allocation6 + $0x990] sm:$0xff]
    %v2057 = vld [vmem:[#allocation6 + $0x998] sm:$0xff]
    %v2058 = vld [vmem:[#allocation6 + $0x9a0] sm:$0xff]
    %v2059 = vld [vmem:[#allocation6 + $0x9a8] sm:$0xff]
    %v2060 = vld [vmem:[#allocation6 + $0x9b0] sm:$0xff]
    %v2061 = vld [vmem:[#allocation6 + $0x9b8] sm:$0xff]
    %v2062 = vld [vmem:[#allocation6 + $0x9c0] sm:$0xff]
    %v2063 = vld [vmem:[#allocation6 + $0x9c8] sm:$0xff]
    %v2064 = vld [vmem:[#allocation6 + $0x9d0] sm:$0xff]
    %v2065 = vld [vmem:[#allocation6 + $0x9d8] sm:$0xff]
    %v2066 = vld [vmem:[#allocation6 + $0x9e0] sm:$0xff]
    %v2067 = vld [vmem:[#allocation6 + $0x9e8] sm:$0xff]
    %v2068 = vld [vmem:[#allocation6 + $0x9f0] sm:$0xff]
    %v2069 = vld [vmem:[#allocation6 + $0x9f8] sm:$0xff]
    %v2070 = vld [vmem:[#allocation6 + $0xa00] sm:$0xff]
    %v2071 = vld [vmem:[#allocation6 + $0xa08] sm:$0xff]
    %v2072 = vld [vmem:[#allocation6 + $0xa10] sm:$0xff]
    %v2073 = vld [vmem:[#allocation6 + $0xa18] sm:$0xff]
    %v2074 = vld [vmem:[#allocation6 + $0xa20] sm:$0xff]
    %v2075 = vld [vmem:[#allocation6 + $0xa28] sm:$0xff]
    %v2076 = vld [vmem:[#allocation6 + $0xa30] sm:$0xff]
    %v2077 = vld [vmem:[#allocation6 + $0xa38] sm:$0xff]
    %v2078 = vld [vmem:[#allocation6 + $0xa40] sm:$0xff]
    %v2079 = vld [vmem:[#allocation6 + $0xa48] sm:$0xff]
    %v2080 = vld [vmem:[#allocation6 + $0xa50] sm:$0xff]
    %v2081 = vld [vmem:[#allocation6 + $0xa58] sm:$0xff]
    %v2082 = vld [vmem:[#allocation6 + $0xa60] sm:$0xff]
    %v2083 = vld [vmem:[#allocation6 + $0xa68] sm:$0xff]
    %v2084 = vld [vmem:[#allocation6 + $0xa70] sm:$0xff]
    %v2085 = vld [vmem:[#allocation6 + $0xa78] sm:$0xff]
    %v2086 = vld [vmem:[#allocation6 + $0xa80] sm:$0xff]
    %v2087 = vld [vmem:[#allocation6 + $0xa88] sm:$0xff]
    %v2088 = vld [vmem:[#allocation6 + $0xa90] sm:$0xff]
    %v2089 = vld [vmem:[#allocation6 + $0xa98] sm:$0xff]
    %v2090 = vld [vmem:[#allocation6 + $0xaa0] sm:$0xff]
    %v2091 = vld [vmem:[#allocation6 + $0xaa8] sm:$0xff]
    %v2092 = vld [vmem:[#allocation6 + $0xab0] sm:$0xff]
    %v2093 = vld [vmem:[#allocation6 + $0xab8] sm:$0xff]
    %v2094 = vld [vmem:[#allocation6 + $0xac0] sm:$0xff]
    %v2095 = vld [vmem:[#allocation6 + $0xac8] sm:$0xff]
    %v2096 = vld [vmem:[#allocation6 + $0xad0] sm:$0xff]
    %v2097 = vld [vmem:[#allocation6 + $0xad8] sm:$0xff]
    %v2098 = vld [vmem:[#allocation6 + $0xae0] sm:$0xff]
    %v2099 = vld [vmem:[#allocation6 + $0xae8] sm:$0xff]
    %v2100 = vld [vmem:[#allocation6 + $0xaf0] sm:$0xff]
    %v2101 = vld [vmem:[#allocation6 + $0xaf8] sm:$0xff]
    %v2102 = vld [vmem:[#allocation6 + $0xb00] sm:$0xff]
    %v2103 = vld [vmem:[#allocation6 + $0xb08] sm:$0xff]
    %v2104 = vld [vmem:[#allocation6 + $0xb10] sm:$0xff]
    %v2105 = vld [vmem:[#allocation6 + $0xb18] sm:$0xff]
    %v2106 = vld [vmem:[#allocation6 + $0xb20] sm:$0xff]
    %v2107 = vld [vmem:[#allocation6 + $0xb28] sm:$0xff]
    %v2108 = vld [vmem:[#allocation6 + $0xb30] sm:$0xff]
    %v2109 = vld [vmem:[#allocation6 + $0xb38] sm:$0xff]
    %v2110 = vld [vmem:[#allocation6 + $0xb40] sm:$0xff]
    %v2111 = vld [vmem:[#allocation6 + $0xb48] sm:$0xff]
    %v2112 = vld [vmem:[#allocation6 + $0xb50] sm:$0xff]
    %v2113 = vld [vmem:[#allocation6 + $0xb58] sm:$0xff]
    %v2114 = vld [vmem:[#allocation6 + $0xb60] sm:$0xff]
    %v2115 = vld [vmem:[#allocation6 + $0xb68] sm:$0xff]
    %v2116 = vld [vmem:[#allocation6 + $0xb70] sm:$0xff]
    %v2117 = vld [vmem:[#allocation6 + $0xb78] sm:$0xff]
    %v2118 = vld [vmem:[#allocation6 + $0xb80] sm:$0xff]
    %v2119 = vld [vmem:[#allocation6 + $0xb88] sm:$0xff]
    %v2120 = vld [vmem:[#allocation6 + $0xb90] sm:$0xff]
    %v2121 = vld [vmem:[#allocation6 + $0xb98] sm:$0xff]
    %v2122 = vld [vmem:[#allocation6 + $0xba0] sm:$0xff]
    %v2123 = vld [vmem:[#allocation6 + $0xba8] sm:$0xff]
    %v2124 = vld [vmem:[#allocation6 + $0xbb0] sm:$0xff]
    %v2125 = vld [vmem:[#allocation6 + $0xbb8] sm:$0xff]
    %v2126 = vld [vmem:[#allocation6 + $0xbc0] sm:$0xff]
    %v2127 = vld [vmem:[#allocation6 + $0xbc8] sm:$0xff]
    %v2128 = vld [vmem:[#allocation6 + $0xbd0] sm:$0xff]
    %v2129 = vld [vmem:[#allocation6 + $0xbd8] sm:$0xff]
    %v2130 = vld [vmem:[#allocation6 + $0xbe0] sm:$0xff]
    %v2131 = vld [vmem:[#allocation6 + $0xbe8] sm:$0xff]
    %v2132 = vld [vmem:[#allocation6 + $0xbf0] sm:$0xff]
    %v2133 = vld [vmem:[#allocation6 + $0xbf8] sm:$0xff]
    %v2134 = vld [vmem:[#allocation6 + $0xc00] sm:$0xff]
    %v2135 = vld [vmem:[#allocation6 + $0xc08] sm:$0xff]
    %v2136 = vld [vmem:[#allocation6 + $0xc10] sm:$0xff]
    %v2137 = vld [vmem:[#allocation6 + $0xc18] sm:$0xff]
    %v2138 = vld [vmem:[#allocation6 + $0xc20] sm:$0xff]
    %v2139 = vld [vmem:[#allocation6 + $0xc28] sm:$0xff]
    %v2140 = vld [vmem:[#allocation6 + $0xc30] sm:$0xff]
    %v2141 = vld [vmem:[#allocation6 + $0xc38] sm:$0xff]
    %v2142 = vld [vmem:[#allocation6 + $0xc40] sm:$0xff]
    %v2143 = vld [vmem:[#allocation6 + $0xc48] sm:$0xff]
    %v2144 = vld [vmem:[#allocation6 + $0xc50] sm:$0xff]
    %v2145 = vld [vmem:[#allocation6 + $0xc58] sm:$0xff]
    %v2146 = vld [vmem:[#allocation6 + $0xc60] sm:$0xff]
    %v2147 = vld [vmem:[#allocation6 + $0xc68] sm:$0xff]
    %v2148 = vld [vmem:[#allocation6 + $0xc70] sm:$0xff]
    %v2149 = vld [vmem:[#allocation6 + $0xc78] sm:$0xff]
    %v2150 = vld [vmem:[#allocation6 + $0xc80] sm:$0xff]
    %v2151 = vld [vmem:[#allocation6 + $0xc88] sm:$0xff]
    %v2152 = vld [vmem:[#allocation6 + $0xc90] sm:$0xff]
    %v2153 = vld [vmem:[#allocation6 + $0xc98] sm:$0xff]
    %v2154 = vld [vmem:[#allocation6 + $0xca0] sm:$0xff]
    %v2155 = vld [vmem:[#allocation6 + $0xca8] sm:$0xff]
    %v2156 = vld [vmem:[#allocation6 + $0xcb0] sm:$0xff]
    %v2157 = vld [vmem:[#allocation6 + $0xcb8] sm:$0xff]
    %v2158 = vld [vmem:[#allocation6 + $0xcc0] sm:$0xff]
    %v2159 = vld [vmem:[#allocation6 + $0xcc8] sm:$0xff]
    %v2160 = vld [vmem:[#allocation6 + $0xcd0] sm:$0xff]
    %v2161 = vld [vmem:[#allocation6 + $0xcd8] sm:$0xff]
    %v2162 = vld [vmem:[#allocation6 + $0xce0] sm:$0xff]
    %v2163 = vld [vmem:[#allocation6 + $0xce8] sm:$0xff]
    %v2164 = vld [vmem:[#allocation6 + $0xcf0] sm:$0xff]
    %v2165 = vld [vmem:[#allocation6 + $0xcf8] sm:$0xff]
    %v2166 = vld [vmem:[#allocation6 + $0xd00] sm:$0xff]
    %v2167 = vld [vmem:[#allocation6 + $0xd08] sm:$0xff]
    %v2168 = vld [vmem:[#allocation6 + $0xd10] sm:$0xff]
    %v2169 = vld [vmem:[#allocation6 + $0xd18] sm:$0xff]
    %v2170 = vld [vmem:[#allocation6 + $0xd20] sm:$0xff]
    %v2171 = vld [vmem:[#allocation6 + $0xd28] sm:$0xff]
    %v2172 = vld [vmem:[#allocation6 + $0xd30] sm:$0xff]
    %v2173 = vld [vmem:[#allocation6 + $0xd38] sm:$0xff]
    %v2174 = vld [vmem:[#allocation6 + $0xd40] sm:$0xff]
    %v2175 = vld [vmem:[#allocation6 + $0xd48] sm:$0xff]
    %v2176 = vld [vmem:[#allocation6 + $0xd50] sm:$0xff]
    %v2177 = vld [vmem:[#allocation6 + $0xd58] sm:$0xff]
    %v2178 = vld [vmem:[#allocation6 + $0xd60] sm:$0xff]
    %v2179 = vld [vmem:[#allocation6 + $0xd68] sm:$0xff]
    %v2180 = vld [vmem:[#allocation6 + $0xd70] sm:$0xff]
    %v2181 = vld [vmem:[#allocation6 + $0xd78] sm:$0xff]
    %v2182 = vld [vmem:[#allocation6 + $0xd80] sm:$0xff]
    %v2183 = vld [vmem:[#allocation6 + $0xd88] sm:$0xff]
    %v2184 = vld [vmem:[#allocation6 + $0xd90] sm:$0xff]
    %v2185 = vld [vmem:[#allocation6 + $0xd98] sm:$0xff]
    %v2186 = vld [vmem:[#allocation6 + $0xda0] sm:$0xff]
    %v2187 = vld [vmem:[#allocation6 + $0xda8] sm:$0xff]
    %v2188 = vld [vmem:[#allocation6 + $0xdb0] sm:$0xff]
    %v2189 = vld [vmem:[#allocation6 + $0xdb8] sm:$0xff]
    %v2190 = vld [vmem:[#allocation6 + $0xdc0] sm:$0xff]
    %v2191 = vld [vmem:[#allocation6 + $0xdc8] sm:$0xff]
    %v2192 = vld [vmem:[#allocation6 + $0xdd0] sm:$0xff]
    %v2193 = vld [vmem:[#allocation6 + $0xdd8] sm:$0xff]
    %v2194 = vld [vmem:[#allocation6 + $0xde0] sm:$0xff]
    %v2195 = vld [vmem:[#allocation6 + $0xde8] sm:$0xff]
    %v2196 = vld [vmem:[#allocation6 + $0xdf0] sm:$0xff]
    %v2197 = vld [vmem:[#allocation6 + $0xdf8] sm:$0xff]
    %v2198 = vld [vmem:[#allocation6 + $0xe00] sm:$0xff]
    %v2199 = vld [vmem:[#allocation6 + $0xe08] sm:$0xff]
    %v2200 = vld [vmem:[#allocation6 + $0xe10] sm:$0xff]
    %v2201 = vld [vmem:[#allocation6 + $0xe18] sm:$0xff]
    %v2202 = vld [vmem:[#allocation6 + $0xe20] sm:$0xff]
    %v2203 = vld [vmem:[#allocation6 + $0xe28] sm:$0xff]
    %v2204 = vld [vmem:[#allocation6 + $0xe30] sm:$0xff]
    %v2205 = vld [vmem:[#allocation6 + $0xe38] sm:$0xff]
    %v2206 = vld [vmem:[#allocation6 + $0xe40] sm:$0xff]
    %v2207 = vld [vmem:[#allocation6 + $0xe48] sm:$0xff]
    %v2208 = vld [vmem:[#allocation6 + $0xe50] sm:$0xff]
    %v2209 = vld [vmem:[#allocation6 + $0xe58] sm:$0xff]
    %v2210 = vld [vmem:[#allocation6 + $0xe60] sm:$0xff]
    %v2211 = vld [vmem:[#allocation6 + $0xe68] sm:$0xff]
    %v2212 = vld [vmem:[#allocation6 + $0xe70] sm:$0xff]
    %v2213 = vld [vmem:[#allocation6 + $0xe78] sm:$0xff]
    %v2214 = vld [vmem:[#allocation6 + $0xe80] sm:$0xff]
    %v2215 = vld [vmem:[#allocation6 + $0xe88] sm:$0xff]
    %v2216 = vld [vmem:[#allocation6 + $0xe90] sm:$0xff]
    %v2217 = vld [vmem:[#allocation6 + $0xe98] sm:$0xff]
    %v2218 = vld [vmem:[#allocation6 + $0xea0] sm:$0xff]
    %v2219 = vld [vmem:[#allocation6 + $0xea8] sm:$0xff]
    %v2220 = vld [vmem:[#allocation6 + $0xeb0] sm:$0xff]
    %v2221 = vld [vmem:[#allocation6 + $0xeb8] sm:$0xff]
    %v2222 = vld [vmem:[#allocation6 + $0xec0] sm:$0xff]
    %v2223 = vld [vmem:[#allocation6 + $0xec8] sm:$0xff]
    %v2224 = vld [vmem:[#allocation6 + $0xed0] sm:$0xff]
    %v2225 = vld [vmem:[#allocation6 + $0xed8] sm:$0xff]
    %v2226 = vld [vmem:[#allocation6 + $0xee0] sm:$0xff]
    %v2227 = vld [vmem:[#allocation6 + $0xee8] sm:$0xff]
    %v2228 = vld [vmem:[#allocation6 + $0xef0] sm:$0xff]
    %v2229 = vld [vmem:[#allocation6 + $0xef8] sm:$0xff]
    %v2230 = vld [vmem:[#allocation6 + $0xf00] sm:$0xff]
    %v2231 = vld [vmem:[#allocation6 + $0xf08] sm:$0xff]
    %v2232 = vld [vmem:[#allocation6 + $0xf10] sm:$0xff]
    %v2233 = vld [vmem:[#allocation6 + $0xf18] sm:$0xff]
    %v2234 = vld [vmem:[#allocation6 + $0xf20] sm:$0xff]
    %v2235 = vld [vmem:[#allocation6 + $0xf28] sm:$0xff]
    %v2236 = vld [vmem:[#allocation6 + $0xf30] sm:$0xff]
    %v2237 = vld [vmem:[#allocation6 + $0xf38] sm:$0xff]
    %v2238 = vld [vmem:[#allocation6 + $0xf40] sm:$0xff]
    %v2239 = vld [vmem:[#allocation6 + $0xf48] sm:$0xff]
    %v2240 = vld [vmem:[#allocation6 + $0xf50] sm:$0xff]
    %v2241 = vld [vmem:[#allocation6 + $0xf58] sm:$0xff]
    %v2242 = vld [vmem:[#allocation6 + $0xf60] sm:$0xff]
    %v2243 = vld [vmem:[#allocation6 + $0xf68] sm:$0xff]
    %v2244 = vld [vmem:[#allocation6 + $0xf70] sm:$0xff]
    %v2245 = vld [vmem:[#allocation6 + $0xf78] sm:$0xff]
    %v2246 = vld [vmem:[#allocation6 + $0xf80] sm:$0xff]
    %v2247 = vld [vmem:[#allocation6 + $0xf88] sm:$0xff]
    %v2248 = vld [vmem:[#allocation6 + $0xf90] sm:$0xff]
    %v2249 = vld [vmem:[#allocation6 + $0xf98] sm:$0xff]
    %v2250 = vld [vmem:[#allocation6 + $0xfa0] sm:$0xff]
    %v2251 = vld [vmem:[#allocation6 + $0xfa8] sm:$0xff]
    %v2252 = vld [vmem:[#allocation6 + $0xfb0] sm:$0xff]
    %v2253 = vld [vmem:[#allocation6 + $0xfb8] sm:$0xff]
    %v2254 = vld [vmem:[#allocation6 + $0xfc0] sm:$0xff]
    %v2255 = vld [vmem:[#allocation6 + $0xfc8] sm:$0xff]
    %v2256 = vld [vmem:[#allocation6 + $0xfd0] sm:$0xff]
    %v2257 = vld [vmem:[#allocation6 + $0xfd8] sm:$0xff]
    %v2258 = vld [vmem:[#allocation6 + $0xfe0] sm:$0xff]
    %v2259 = vld [vmem:[#allocation6 + $0xfe8] sm:$0xff]
    %v2260 = vld [vmem:[#allocation6 + $0xff0] sm:$0xff]
    %v2261 = vld [vmem:[#allocation6 + $0xff8] sm:$0xff]
    %s2262 = scalar_lea.vmem [#allocation4], 1
    %v2263 = vld [vmem:[%s2262] ss:$2 sm:$0xf]
    %v2265 = vlaneseq
    %v2266 = vshrl.u32 %v2265, 7
    %v2267 = vsub.s32 0, %v2266
    %v2268 = vrot.slane %v2263, %v2267
    %v2269 = vlaneseq
    %v2270 = vshrl.u32 %v2269, 7
    %v2271 = vsub.s32 1, %v2270
    %v2272 = vrot.slane %v2263, %v2271
    %v2273 = vlaneseq
    %v2274 = vshrl.u32 %v2273, 7
    %v2275 = vsub.s32 2, %v2274
    %v2276 = vrot.slane %v2263, %v2275
    %v2277 = vlaneseq
    %v2278 = vshrl.u32 %v2277, 7
    %v2279 = vsub.s32 3, %v2278
    %v2280 = vrot.slane %v2263, %v2279
    %2285 = vmatprep.subr.mxu0 %v1751
    %2286 = vmatpush1.msra.mxu0 %v1750
    %2287 = vmatprep.subr.mxu0 %v1755
    %2288 = vmatpush1.msra.mxu0 %v1754
    %2289 = vmatprep.subr.mxu0 %v1759
    %2290 = vmatpush1.msra.mxu0 %v1758
    %2291 = vmatprep.subr.mxu0 %v1763
    %2292 = vmatpush1.msra.mxu0 %v1762
    %2293 = vmatprep.subr.mxu0 %v1767
    %2294 = vmatpush1.msra.mxu0 %v1766
    %2295 = vmatprep.subr.mxu0 %v1771
    %2296 = vmatpush1.msra.mxu0 %v1770
    %2297 = vmatprep.subr.mxu0 %v1775
    %2298 = vmatpush1.msra.mxu0 %v1774
    %2299 = vmatprep.subr.mxu0 %v1779
    %2300 = vmatpush1.msra.mxu0 %v1778
    %2301 = vmatprep.subr.mxu0 %v1783
    %2302 = vmatpush1.msra.mxu0 %v1782
    %2303 = vmatprep.subr.mxu0 %v1787
    %2304 = vmatpush1.msra.mxu0 %v1786
    %2305 = vmatprep.subr.mxu0 %v1791
    %2306 = vmatpush1.msra.mxu0 %v1790
    %2307 = vmatprep.subr.mxu0 %v1795
    %2308 = vmatpush1.msra.mxu0 %v1794
    %2309 = vmatprep.subr.mxu0 %v1799
    %2310 = vmatpush1.msra.mxu0 %v1798
    %2311 = vmatprep.subr.mxu0 %v1803
    %2312 = vmatpush1.msra.mxu0 %v1802
    %2313 = vmatprep.subr.mxu0 %v1807
    %2314 = vmatpush1.msra.mxu0 %v1806
    %2315 = vmatprep.subr.mxu0 %v1811
    %2316 = vmatpush1.msra.mxu0 %v1810
    %2317 = vmatprep.subr.mxu0 %v1815
    %2318 = vmatpush1.msra.mxu0 %v1814
    %2319 = vmatprep.subr.mxu0 %v1819
    %2320 = vmatpush1.msra.mxu0 %v1818
    %2321 = vmatprep.subr.mxu0 %v1823
    %2322 = vmatpush1.msra.mxu0 %v1822
    %2323 = vmatprep.subr.mxu0 %v1827
    %2324 = vmatpush1.msra.mxu0 %v1826
    %2325 = vmatprep.subr.mxu0 %v1831
    %2326 = vmatpush1.msra.mxu0 %v1830
    %2327 = vmatprep.subr.mxu0 %v1835
    %2328 = vmatpush1.msra.mxu0 %v1834
    %2329 = vmatprep.subr.mxu0 %v1839
    %2330 = vmatpush1.msra.mxu0 %v1838
    %2331 = vmatprep.subr.mxu0 %v1843
    %2332 = vmatpush1.msra.mxu0 %v1842
    %2333 = vmatprep.subr.mxu0 %v1847
    %2334 = vmatpush1.msra.mxu0 %v1846
    %2335 = vmatprep.subr.mxu0 %v1851
    %2336 = vmatpush1.msra.mxu0 %v1850
    %2337 = vmatprep.subr.mxu0 %v1855
    %2338 = vmatpush1.msra.mxu0 %v1854
    %2339 = vmatprep.subr.mxu0 %v1859
    %2340 = vmatpush1.msra.mxu0 %v1858
    %2341 = vmatprep.subr.mxu0 %v1863
    %2342 = vmatpush1.msra.mxu0 %v1862
    %2343 = vmatprep.subr.mxu0 %v1867
    %2344 = vmatpush1.msra.mxu0 %v1866
    %2345 = vmatprep.subr.mxu0 %v1871
    %2346 = vmatpush1.msra.mxu0 %v1870
    %2347 = vmatprep.subr.mxu0 %v1875
    %2348 = vmatpush1.msra.mxu0 %v1874
    %2349 = vmatprep.mubr.f32.mxu0 %v1743
    %2350 = vmatmul.mubr.f32.gmra.mrb[0].mxu0 %v1742
    %v2351 = vpop.f32.mrb[0].mxu0
    %v2352 = vadd.f32 %v2268, %v2351
    %v2353 = vpop.f32.mrb[0].mxu0
    %v2354 = vadd.f32 %v2272, %v2353
    %2355 = vdwg.mxu0
    %2356 = vmatprep.subr.mxu0 %v1879
    %2357 = vmatpush1.msra.mxu0 %v1878
    %2358 = vmatprep.subr.mxu0 %v1883
    %2359 = vmatpush1.msra.mxu0 %v1882
    %2360 = vmatprep.subr.mxu0 %v1887
    %2361 = vmatpush1.msra.mxu0 %v1886
    %2362 = vmatprep.subr.mxu0 %v1891
    %2363 = vmatpush1.msra.mxu0 %v1890
    %2364 = vmatprep.subr.mxu0 %v1895
    %2365 = vmatpush1.msra.mxu0 %v1894
    %2366 = vmatprep.subr.mxu0 %v1899
    %2367 = vmatpush1.msra.mxu0 %v1898
    %2368 = vmatprep.subr.mxu0 %v1903
    %2369 = vmatpush1.msra.mxu0 %v1902
    %2370 = vmatprep.subr.mxu0 %v1907
    %2371 = vmatpush1.msra.mxu0 %v1906
    %2372 = vmatprep.subr.mxu0 %v1911
    %2373 = vmatpush1.msra.mxu0 %v1910
    %2374 = vmatprep.subr.mxu0 %v1915
    %2375 = vmatpush1.msra.mxu0 %v1914
    %2376 = vmatprep.subr.mxu0 %v1919
    %2377 = vmatpush1.msra.mxu0 %v1918
    %2378 = vmatprep.subr.mxu0 %v1923
    %2379 = vmatpush1.msra.mxu0 %v1922
    %2380 = vmatprep.subr.mxu0 %v1927
    %2381 = vmatpush1.msra.mxu0 %v1926
    %2382 = vmatprep.subr.mxu0 %v1931
    %2383 = vmatpush1.msra.mxu0 %v1930
    %2384 = vmatprep.subr.mxu0 %v1935
    %2385 = vmatpush1.msra.mxu0 %v1934
    %2386 = vmatprep.subr.mxu0 %v1939
    %2387 = vmatpush1.msra.mxu0 %v1938
    %2388 = vmatprep.subr.mxu0 %v1943
    %2389 = vmatpush1.msra.mxu0 %v1942
    %2390 = vmatprep.subr.mxu0 %v1947
    %2391 = vmatpush1.msra.mxu0 %v1946
    %2392 = vmatprep.subr.mxu0 %v1951
    %2393 = vmatpush1.msra.mxu0 %v1950
    %2394 = vmatprep.subr.mxu0 %v1955
    %2395 = vmatpush1.msra.mxu0 %v1954
    %2396 = vmatprep.subr.mxu0 %v1959
    %2397 = vmatpush1.msra.mxu0 %v1958
    %2398 = vmatprep.subr.mxu0 %v1963
    %2399 = vmatpush1.msra.mxu0 %v1962
    %2400 = vmatprep.subr.mxu0 %v1967
    %2401 = vmatpush1.msra.mxu0 %v1966
    %2402 = vmatprep.subr.mxu0 %v1971
    %2403 = vmatpush1.msra.mxu0 %v1970
    %2404 = vmatprep.subr.mxu0 %v1975
    %2405 = vmatpush1.msra.mxu0 %v1974
    %2406 = vmatprep.subr.mxu0 %v1979
    %2407 = vmatpush1.msra.mxu0 %v1978
    %2408 = vmatprep.subr.mxu0 %v1983
    %2409 = vmatpush1.msra.mxu0 %v1982
    %2410 = vmatprep.subr.mxu0 %v1987
    %2411 = vmatpush1.msra.mxu0 %v1986
    %2412 = vmatprep.subr.mxu0 %v1991
    %2413 = vmatpush1.msra.mxu0 %v1990
    %2414 = vmatprep.subr.mxu0 %v1995
    %2415 = vmatpush1.msra.mxu0 %v1994
    %2416 = vmatprep.subr.mxu0 %v1999
    %2417 = vmatpush1.msra.mxu0 %v1998
    %2418 = vmatprep.subr.mxu0 %v2003
    %2419 = vmatpush1.msra.mxu0 %v2002
    %2420 = vmatprep.mubr.f32.mxu0 %v1745
    %2421 = vmatmul.mubr.f32.gmra.mrb[0].mxu0 %v1744
    %v2422 = vpop.f32.mrb[0].mxu0
    %v2423 = vadd.f32 %v2352, %v2422
    %v2424 = vpop.f32.mrb[0].mxu0
    %v2425 = vadd.f32 %v2354, %v2424
    %2426 = vdwg.mxu0
    %2427 = vmatprep.subr.mxu0 %v2007
    %2428 = vmatpush1.msra.mxu0 %v2006
    %2429 = vmatprep.subr.mxu0 %v2011
    %2430 = vmatpush1.msra.mxu0 %v2010
    %2431 = vmatprep.subr.mxu0 %v2015
    %2432 = vmatpush1.msra.mxu0 %v2014
    %2433 = vmatprep.subr.mxu0 %v2019
    %2434 = vmatpush1.msra.mxu0 %v2018
    %2435 = vmatprep.subr.mxu0 %v2023
    %2436 = vmatpush1.msra.mxu0 %v2022
    %2437 = vmatprep.subr.mxu0 %v2027
    %2438 = vmatpush1.msra.mxu0 %v2026
    %2439 = vmatprep.subr.mxu0 %v2031
    %2440 = vmatpush1.msra.mxu0 %v2030
    %2441 = vmatprep.subr.mxu0 %v2035
    %2442 = vmatpush1.msra.mxu0 %v2034
    %2443 = vmatprep.subr.mxu0 %v2039
    %2444 = vmatpush1.msra.mxu0 %v2038
    %2445 = vmatprep.subr.mxu0 %v2043
    %2446 = vmatpush1.msra.mxu0 %v2042
    %2447 = vmatprep.subr.mxu0 %v2047
    %2448 = vmatpush1.msra.mxu0 %v2046
    %2449 = vmatprep.subr.mxu0 %v2051
    %2450 = vmatpush1.msra.mxu0 %v2050
    %2451 = vmatprep.subr.mxu0 %v2055
    %2452 = vmatpush1.msra.mxu0 %v2054
    %2453 = vmatprep.subr.mxu0 %v2059
    %2454 = vmatpush1.msra.mxu0 %v2058
    %2455 = vmatprep.subr.mxu0 %v2063
    %2456 = vmatpush1.msra.mxu0 %v2062
    %2457 = vmatprep.subr.mxu0 %v2067
    %2458 = vmatpush1.msra.mxu0 %v2066
    %2459 = vmatprep.subr.mxu0 %v2071
    %2460 = vmatpush1.msra.mxu0 %v2070
    %2461 = vmatprep.subr.mxu0 %v2075
    %2462 = vmatpush1.msra.mxu0 %v2074
    %2463 = vmatprep.subr.mxu0 %v2079
    %2464 = vmatpush1.msra.mxu0 %v2078
    %2465 = vmatprep.subr.mxu0 %v2083
    %2466 = vmatpush1.msra.mxu0 %v2082
    %2467 = vmatprep.subr.mxu0 %v2087
    %2468 = vmatpush1.msra.mxu0 %v2086
    %2469 = vmatprep.subr.mxu0 %v2091
    %2470 = vmatpush1.msra.mxu0 %v2090
    %2471 = vmatprep.subr.mxu0 %v2095
    %2472 = vmatpush1.msra.mxu0 %v2094
    %2473 = vmatprep.subr.mxu0 %v2099
    %2474 = vmatpush1.msra.mxu0 %v2098
    %2475 = vmatprep.subr.mxu0 %v2103
    %2476 = vmatpush1.msra.mxu0 %v2102
    %2477 = vmatprep.subr.mxu0 %v2107
    %2478 = vmatpush1.msra.mxu0 %v2106
    %2479 = vmatprep.subr.mxu0 %v2111
    %2480 = vmatpush1.msra.mxu0 %v2110
    %2481 = vmatprep.subr.mxu0 %v2115
    %2482 = vmatpush1.msra.mxu0 %v2114
    %2483 = vmatprep.subr.mxu0 %v2119
    %2484 = vmatpush1.msra.mxu0 %v2118
    %2485 = vmatprep.subr.mxu0 %v2123
    %2486 = vmatpush1.msra.mxu0 %v2122
    %2487 = vmatprep.subr.mxu0 %v2127
    %2488 = vmatpush1.msra.mxu0 %v2126
    %2489 = vmatprep.subr.mxu0 %v2131
    %2490 = vmatpush1.msra.mxu0 %v2130
    %2491 = vmatprep.mubr.f32.mxu0 %v1747
    %2492 = vmatmul.mubr.f32.gmra.mrb[0].mxu0 %v1746
    %v2493 = vpop.f32.mrb[0].mxu0
    %v2494 = vadd.f32 %v2423, %v2493
    %v2495 = vpop.f32.mrb[0].mxu0
    %v2496 = vadd.f32 %v2425, %v2495
    %2497 = vdwg.mxu0
    %2498 = vmatprep.subr.mxu0 %v2135
    %2499 = vmatpush1.msra.mxu0 %v2134
    %2500 = vmatprep.subr.mxu0 %v2139
    %2501 = vmatpush1.msra.mxu0 %v2138
    %2502 = vmatprep.subr.mxu0 %v2143
    %2503 = vmatpush1.msra.mxu0 %v2142
    %2504 = vmatprep.subr.mxu0 %v2147
    %2505 = vmatpush1.msra.mxu0 %v2146
    %2506 = vmatprep.subr.mxu0 %v2151
    %2507 = vmatpush1.msra.mxu0 %v2150
    %2508 = vmatprep.subr.mxu0 %v2155
    %2509 = vmatpush1.msra.mxu0 %v2154
    %2510 = vmatprep.subr.mxu0 %v2159
    %2511 = vmatpush1.msra.mxu0 %v2158
    %2512 = vmatprep.subr.mxu0 %v2163
    %2513 = vmatpush1.msra.mxu0 %v2162
    %2514 = vmatprep.subr.mxu0 %v2167
    %2515 = vmatpush1.msra.mxu0 %v2166
    %2516 = vmatprep.subr.mxu0 %v2171
    %2517 = vmatpush1.msra.mxu0 %v2170
    %2518 = vmatprep.subr.mxu0 %v2175
    %2519 = vmatpush1.msra.mxu0 %v2174
    %2520 = vmatprep.subr.mxu0 %v2179
    %2521 = vmatpush1.msra.mxu0 %v2178
    %2522 = vmatprep.subr.mxu0 %v2183
    %2523 = vmatpush1.msra.mxu0 %v2182
    %2524 = vmatprep.subr.mxu0 %v2187
    %2525 = vmatpush1.msra.mxu0 %v2186
    %2526 = vmatprep.subr.mxu0 %v2191
    %2527 = vmatpush1.msra.mxu0 %v2190
    %2528 = vmatprep.subr.mxu0 %v2195
    %2529 = vmatpush1.msra.mxu0 %v2194
    %2530 = vmatprep.subr.mxu0 %v2199
    %2531 = vmatpush1.msra.mxu0 %v2198
    %2532 = vmatprep.subr.mxu0 %v2203
    %2533 = vmatpush1.msra.mxu0 %v2202
    %2534 = vmatprep.subr.mxu0 %v2207
    %2535 = vmatpush1.msra.mxu0 %v2206
    %2536 = vmatprep.subr.mxu0 %v2211
    %2537 = vmatpush1.msra.mxu0 %v2210
    %2538 = vmatprep.subr.mxu0 %v2215
    %2539 = vmatpush1.msra.mxu0 %v2214
    %2540 = vmatprep.subr.mxu0 %v2219
    %2541 = vmatpush1.msra.mxu0 %v2218
    %2542 = vmatprep.subr.mxu0 %v2223
    %2543 = vmatpush1.msra.mxu0 %v2222
    %2544 = vmatprep.subr.mxu0 %v2227
    %2545 = vmatpush1.msra.mxu0 %v2226
    %2546 = vmatprep.subr.mxu0 %v2231
    %2547 = vmatpush1.msra.mxu0 %v2230
    %2548 = vmatprep.subr.mxu0 %v2235
    %2549 = vmatpush1.msra.mxu0 %v2234
    %2550 = vmatprep.subr.mxu0 %v2239
    %2551 = vmatpush1.msra.mxu0 %v2238
    %2552 = vmatprep.subr.mxu0 %v2243
    %2553 = vmatpush1.msra.mxu0 %v2242
    %2554 = vmatprep.subr.mxu0 %v2247
    %2555 = vmatpush1.msra.mxu0 %v2246
    %2556 = vmatprep.subr.mxu0 %v2251
    %2557 = vmatpush1.msra.mxu0 %v2250
    %2558 = vmatprep.subr.mxu0 %v2255
    %2559 = vmatpush1.msra.mxu0 %v2254
    %2560 = vmatprep.subr.mxu0 %v2259
    %2561 = vmatpush1.msra.mxu0 %v2258
    %2562 = vmatprep.mubr.f32.mxu0 %v1749
    %2563 = vmatmul.mubr.f32.gmra.mrb[0].mxu0 %v1748
    %v2564 = vpop.f32.mrb[0].mxu0
    %v2565 = vadd.f32 %v2494, %v2564
    %v2566 = vpop.f32.mrb[0].mxu0
    %v2567 = vadd.f32 %v2496, %v2566
    %2568 = vdwg.mxu0
    %2569 = vmatprep.subr.mxu0 %v1753
    %2570 = vmatpush1.msra.mxu0 %v1752
    %2571 = vmatprep.subr.mxu0 %v1757
    %2572 = vmatpush1.msra.mxu0 %v1756
    %2573 = vmatprep.subr.mxu0 %v1761
    %2574 = vmatpush1.msra.mxu0 %v1760
    %2575 = vmatprep.subr.mxu0 %v1765
    %2576 = vmatpush1.msra.mxu0 %v1764
    %2577 = vmatprep.subr.mxu0 %v1769
    %2578 = vmatpush1.msra.mxu0 %v1768
    %2579 = vmatprep.subr.mxu0 %v1773
    %2580 = vmatpush1.msra.mxu0 %v1772
    %2581 = vmatprep.subr.mxu0 %v1777
    %2582 = vmatpush1.msra.mxu0 %v1776
    %2583 = vmatprep.subr.mxu0 %v1781
    %2584 = vmatpush1.msra.mxu0 %v1780
    %2585 = vmatprep.subr.mxu0 %v1785
    %2586 = vmatpush1.msra.mxu0 %v1784
    %2587 = vmatprep.subr.mxu0 %v1789
    %2588 = vmatpush1.msra.mxu0 %v1788
    %2589 = vmatprep.subr.mxu0 %v1793
    %2590 = vmatpush1.msra.mxu0 %v1792
    %2591 = vmatprep.subr.mxu0 %v1797
    %2592 = vmatpush1.msra.mxu0 %v1796
    %2593 = vmatprep.subr.mxu0 %v1801
    %2594 = vmatpush1.msra.mxu0 %v1800
    %2595 = vmatprep.subr.mxu0 %v1805
    %2596 = vmatpush1.msra.mxu0 %v1804
    %2597 = vmatprep.subr.mxu0 %v1809
    %2598 = vmatpush1.msra.mxu0 %v1808
    %2599 = vmatprep.subr.mxu0 %v1813
    %2600 = vmatpush1.msra.mxu0 %v1812
    %2601 = vmatprep.subr.mxu0 %v1817
    %2602 = vmatpush1.msra.mxu0 %v1816
    %2603 = vmatprep.subr.mxu0 %v1821
    %2604 = vmatpush1.msra.mxu0 %v1820
    %2605 = vmatprep.subr.mxu0 %v1825
    %2606 = vmatpush1.msra.mxu0 %v1824
    %2607 = vmatprep.subr.mxu0 %v1829
    %2608 = vmatpush1.msra.mxu0 %v1828
    %2609 = vmatprep.subr.mxu0 %v1833
    %2610 = vmatpush1.msra.mxu0 %v1832
    %2611 = vmatprep.subr.mxu0 %v1837
    %2612 = vmatpush1.msra.mxu0 %v1836
    %2613 = vmatprep.subr.mxu0 %v1841
    %2614 = vmatpush1.msra.mxu0 %v1840
    %2615 = vmatprep.subr.mxu0 %v1845
    %2616 = vmatpush1.msra.mxu0 %v1844
    %2617 = vmatprep.subr.mxu0 %v1849
    %2618 = vmatpush1.msra.mxu0 %v1848
    %2619 = vmatprep.subr.mxu0 %v1853
    %2620 = vmatpush1.msra.mxu0 %v1852
    %2621 = vmatprep.subr.mxu0 %v1857
    %2622 = vmatpush1.msra.mxu0 %v1856
    %2623 = vmatprep.subr.mxu0 %v1861
    %2624 = vmatpush1.msra.mxu0 %v1860
    %2625 = vmatprep.subr.mxu0 %v1865
    %2626 = vmatpush1.msra.mxu0 %v1864
    %2627 = vmatprep.subr.mxu0 %v1869
    %2628 = vmatpush1.msra.mxu0 %v1868
    %2629 = vmatprep.subr.mxu0 %v1873
    %2630 = vmatpush1.msra.mxu0 %v1872
    %2631 = vmatprep.subr.mxu0 %v1877
    %2632 = vmatpush1.msra.mxu0 %v1876
    %2633 = vmatprep.mubr.f32.mxu0 %v1743
    %2634 = vmatmul.mubr.f32.gmra.mrb[0].mxu0 %v1742
    %v2635 = vpop.f32.mrb[0].mxu0
    %v2636 = vadd.f32 %v2276, %v2635
    %v2637 = vpop.f32.mrb[0].mxu0
    %v2638 = vadd.f32 %v2280, %v2637
    %2639 = vdwg.mxu0
    %2640 = vmatprep.subr.mxu0 %v1881
    %2641 = vmatpush1.msra.mxu0 %v1880
    %2642 = vmatprep.subr.mxu0 %v1885
    %2643 = vmatpush1.msra.mxu0 %v1884
    %2644 = vmatprep.subr.mxu0 %v1889
    %2645 = vmatpush1.msra.mxu0 %v1888
    %2646 = vmatprep.subr.mxu0 %v1893
    %2647 = vmatpush1.msra.mxu0 %v1892
    %2648 = vmatprep.subr.mxu0 %v1897
    %2649 = vmatpush1.msra.mxu0 %v1896
    %2650 = vmatprep.subr.mxu0 %v1901
    %2651 = vmatpush1.msra.mxu0 %v1900
    %2652 = vmatprep.subr.mxu0 %v1905
    %2653 = vmatpush1.msra.mxu0 %v1904
    %2654 = vmatprep.subr.mxu0 %v1909
    %2655 = vmatpush1.msra.mxu0 %v1908
    %2656 = vmatprep.subr.mxu0 %v1913
    %2657 = vmatpush1.msra.mxu0 %v1912
    %2658 = vmatprep.subr.mxu0 %v1917
    %2659 = vmatpush1.msra.mxu0 %v1916
    %2660 = vmatprep.subr.mxu0 %v1921
    %2661 = vmatpush1.msra.mxu0 %v1920
    %2662 = vmatprep.subr.mxu0 %v1925
    %2663 = vmatpush1.msra.mxu0 %v1924
    %2664 = vmatprep.subr.mxu0 %v1929
    %2665 = vmatpush1.msra.mxu0 %v1928
    %2666 = vmatprep.subr.mxu0 %v1933
    %2667 = vmatpush1.msra.mxu0 %v1932
    %2668 = vmatprep.subr.mxu0 %v1937
    %2669 = vmatpush1.msra.mxu0 %v1936
    %2670 = vmatprep.subr.mxu0 %v1941
    %2671 = vmatpush1.msra.mxu0 %v1940
    %2672 = vmatprep.subr.mxu0 %v1945
    %2673 = vmatpush1.msra.mxu0 %v1944
    %2674 = vmatprep.subr.mxu0 %v1949
    %2675 = vmatpush1.msra.mxu0 %v1948
    %2676 = vmatprep.subr.mxu0 %v1953
    %2677 = vmatpush1.msra.mxu0 %v1952
    %2678 = vmatprep.subr.mxu0 %v1957
    %2679 = vmatpush1.msra.mxu0 %v1956
    %2680 = vmatprep.subr.mxu0 %v1961
    %2681 = vmatpush1.msra.mxu0 %v1960
    %2682 = vmatprep.subr.mxu0 %v1965
    %2683 = vmatpush1.msra.mxu0 %v1964
    %2684 = vmatprep.subr.mxu0 %v1969
    %2685 = vmatpush1.msra.mxu0 %v1968
    %2686 = vmatprep.subr.mxu0 %v1973
    %2687 = vmatpush1.msra.mxu0 %v1972
    %2688 = vmatprep.subr.mxu0 %v1977
    %2689 = vmatpush1.msra.mxu0 %v1976
    %2690 = vmatprep.subr.mxu0 %v1981
    %2691 = vmatpush1.msra.mxu0 %v1980
    %2692 = vmatprep.subr.mxu0 %v1985
    %2693 = vmatpush1.msra.mxu0 %v1984
    %2694 = vmatprep.subr.mxu0 %v1989
    %2695 = vmatpush1.msra.mxu0 %v1988
    %2696 = vmatprep.subr.mxu0 %v1993
    %2697 = vmatpush1.msra.mxu0 %v1992
    %2698 = vmatprep.subr.mxu0 %v1997
    %2699 = vmatpush1.msra.mxu0 %v1996
    %2700 = vmatprep.subr.mxu0 %v2001
    %2701 = vmatpush1.msra.mxu0 %v2000
    %2702 = vmatprep.subr.mxu0 %v2005
    %2703 = vmatpush1.msra.mxu0 %v2004
    %2704 = vmatprep.mubr.f32.mxu0 %v1745
    %2705 = vmatmul.mubr.f32.gmra.mrb[0].mxu0 %v1744
    %v2706 = vpop.f32.mrb[0].mxu0
    %v2707 = vadd.f32 %v2636, %v2706
    %v2708 = vpop.f32.mrb[0].mxu0
    %v2709 = vadd.f32 %v2638, %v2708
    %2710 = vdwg.mxu0
    %2711 = vmatprep.subr.mxu0 %v2009
    %2712 = vmatpush1.msra.mxu0 %v2008
    %2713 = vmatprep.subr.mxu0 %v2013
    %2714 = vmatpush1.msra.mxu0 %v2012
    %2715 = vmatprep.subr.mxu0 %v2017
    %2716 = vmatpush1.msra.mxu0 %v2016
    %2717 = vmatprep.subr.mxu0 %v2021
    %2718 = vmatpush1.msra.mxu0 %v2020
    %2719 = vmatprep.subr.mxu0 %v2025
    %2720 = vmatpush1.msra.mxu0 %v2024
    %2721 = vmatprep.subr.mxu0 %v2029
    %2722 = vmatpush1.msra.mxu0 %v2028
    %2723 = vmatprep.subr.mxu0 %v2033
    %2724 = vmatpush1.msra.mxu0 %v2032
    %2725 = vmatprep.subr.mxu0 %v2037
    %2726 = vmatpush1.msra.mxu0 %v2036
    %2727 = vmatprep.subr.mxu0 %v2041
    %2728 = vmatpush1.msra.mxu0 %v2040
    %2729 = vmatprep.subr.mxu0 %v2045
    %2730 = vmatpush1.msra.mxu0 %v2044
    %2731 = vmatprep.subr.mxu0 %v2049
    %2732 = vmatpush1.msra.mxu0 %v2048
    %2733 = vmatprep.subr.mxu0 %v2053
    %2734 = vmatpush1.msra.mxu0 %v2052
    %2735 = vmatprep.subr.mxu0 %v2057
    %2736 = vmatpush1.msra.mxu0 %v2056
    %2737 = vmatprep.subr.mxu0 %v2061
    %2738 = vmatpush1.msra.mxu0 %v2060
    %2739 = vmatprep.subr.mxu0 %v2065
    %2740 = vmatpush1.msra.mxu0 %v2064
    %2741 = vmatprep.subr.mxu0 %v2069
    %2742 = vmatpush1.msra.mxu0 %v2068
    %2743 = vmatprep.subr.mxu0 %v2073
    %2744 = vmatpush1.msra.mxu0 %v2072
    %2745 = vmatprep.subr.mxu0 %v2077
    %2746 = vmatpush1.msra.mxu0 %v2076
    %2747 = vmatprep.subr.mxu0 %v2081
    %2748 = vmatpush1.msra.mxu0 %v2080
    %2749 = vmatprep.subr.mxu0 %v2085
    %2750 = vmatpush1.msra.mxu0 %v2084
    %2751 = vmatprep.subr.mxu0 %v2089
    %2752 = vmatpush1.msra.mxu0 %v2088
    %2753 = vmatprep.subr.mxu0 %v2093
    %2754 = vmatpush1.msra.mxu0 %v2092
    %2755 = vmatprep.subr.mxu0 %v2097
    %2756 = vmatpush1.msra.mxu0 %v2096
    %2757 = vmatprep.subr.mxu0 %v2101
    %2758 = vmatpush1.msra.mxu0 %v2100
    %2759 = vmatprep.subr.mxu0 %v2105
    %2760 = vmatpush1.msra.mxu0 %v2104
    %2761 = vmatprep.subr.mxu0 %v2109
    %2762 = vmatpush1.msra.mxu0 %v2108
    %2763 = vmatprep.subr.mxu0 %v2113
    %2764 = vmatpush1.msra.mxu0 %v2112
    %2765 = vmatprep.subr.mxu0 %v2117
    %2766 = vmatpush1.msra.mxu0 %v2116
    %2767 = vmatprep.subr.mxu0 %v2121
    %2768 = vmatpush1.msra.mxu0 %v2120
    %2769 = vmatprep.subr.mxu0 %v2125
    %2770 = vmatpush1.msra.mxu0 %v2124
    %2771 = vmatprep.subr.mxu0 %v2129
    %2772 = vmatpush1.msra.mxu0 %v2128
    %2773 = vmatprep.subr.mxu0 %v2133
    %2774 = vmatpush1.msra.mxu0 %v2132
    %2775 = vmatprep.mubr.f32.mxu0 %v1747
    %2776 = vmatmul.mubr.f32.gmra.mrb[0].mxu0 %v1746
    %v2777 = vpop.f32.mrb[0].mxu0
    %v2778 = vadd.f32 %v2707, %v2777
    %v2779 = vpop.f32.mrb[0].mxu0
    %v2780 = vadd.f32 %v2709, %v2779
    %2781 = vdwg.mxu0
    %2782 = vmatprep.subr.mxu0 %v2137
    %2783 = vmatpush1.msra.mxu0 %v2136
    %2784 = vmatprep.subr.mxu0 %v2141
    %2785 = vmatpush1.msra.mxu0 %v2140
    %2786 = vmatprep.subr.mxu0 %v2145
    %2787 = vmatpush1.msra.mxu0 %v2144
    %2788 = vmatprep.subr.mxu0 %v2149
    %2789 = vmatpush1.msra.mxu0 %v2148
    %2790 = vmatprep.subr.mxu0 %v2153
    %2791 = vmatpush1.msra.mxu0 %v2152
    %2792 = vmatprep.subr.mxu0 %v2157
    %2793 = vmatpush1.msra.mxu0 %v2156
    %2794 = vmatprep.subr.mxu0 %v2161
    %2795 = vmatpush1.msra.mxu0 %v2160
    %2796 = vmatprep.subr.mxu0 %v2165
    %2797 = vmatpush1.msra.mxu0 %v2164
    %2798 = vmatprep.subr.mxu0 %v2169
    %2799 = vmatpush1.msra.mxu0 %v2168
    %2800 = vmatprep.subr.mxu0 %v2173
    %2801 = vmatpush1.msra.mxu0 %v2172
    %2802 = vmatprep.subr.mxu0 %v2177
    %2803 = vmatpush1.msra.mxu0 %v2176
    %2804 = vmatprep.subr.mxu0 %v2181
    %2805 = vmatpush1.msra.mxu0 %v2180
    %2806 = vmatprep.subr.mxu0 %v2185
    %2807 = vmatpush1.msra.mxu0 %v2184
    %2808 = vmatprep.subr.mxu0 %v2189
    %2809 = vmatpush1.msra.mxu0 %v2188
    %2810 = vmatprep.subr.mxu0 %v2193
    %2811 = vmatpush1.msra.mxu0 %v2192
    %2812 = vmatprep.subr.mxu0 %v2197
    %2813 = vmatpush1.msra.mxu0 %v2196
    %2814 = vmatprep.subr.mxu0 %v2201
    %2815 = vmatpush1.msra.mxu0 %v2200
    %2816 = vmatprep.subr.mxu0 %v2205
    %2817 = vmatpush1.msra.mxu0 %v2204
    %2818 = vmatprep.subr.mxu0 %v2209
    %2819 = vmatpush1.msra.mxu0 %v2208
    %2820 = vmatprep.subr.mxu0 %v2213
    %2821 = vmatpush1.msra.mxu0 %v2212
    %2822 = vmatprep.subr.mxu0 %v2217
    %2823 = vmatpush1.msra.mxu0 %v2216
    %2824 = vmatprep.subr.mxu0 %v2221
    %2825 = vmatpush1.msra.mxu0 %v2220
    %2826 = vmatprep.subr.mxu0 %v2225
    %2827 = vmatpush1.msra.mxu0 %v2224
    %2828 = vmatprep.subr.mxu0 %v2229
    %2829 = vmatpush1.msra.mxu0 %v2228
    %2830 = vmatprep.subr.mxu0 %v2233
    %2831 = vmatpush1.msra.mxu0 %v2232
    %2832 = vmatprep.subr.mxu0 %v2237
    %2833 = vmatpush1.msra.mxu0 %v2236
    %2834 = vmatprep.subr.mxu0 %v2241
    %2835 = vmatpush1.msra.mxu0 %v2240
    %2836 = vmatprep.subr.mxu0 %v2245
    %2837 = vmatpush1.msra.mxu0 %v2244
    %2838 = vmatprep.subr.mxu0 %v2249
    %2839 = vmatpush1.msra.mxu0 %v2248
    %2840 = vmatprep.subr.mxu0 %v2253
    %2841 = vmatpush1.msra.mxu0 %v2252
    %2842 = vmatprep.subr.mxu0 %v2257
    %2843 = vmatpush1.msra.mxu0 %v2256
    %2844 = vmatprep.subr.mxu0 %v2261
    %2845 = vmatpush1.msra.mxu0 %v2260
    %2846 = vmatprep.mubr.f32.mxu0 %v1749
    %2847 = vmatmul.mubr.f32.gmra.mrb[0].mxu0 %v1748
    %v2848 = vpop.f32.mrb[0].mxu0
    %v2849 = vadd.f32 %v2778, %v2848
    %v2850 = vpop.f32.mrb[0].mxu0
    %v2851 = vadd.f32 %v2780, %v2850
    %2852 = vdwg.mxu0
    %v2853 = vmax.f32 %v2565, 0.0
    %v2854 = vmax.f32 %v2567, 0.0
    %v2855 = vmax.f32 %v2849, 0.0
    %v2856 = vmax.f32 %v2851, 0.0
    %v2857 = vld [vmem:[%s4] sm:$0xff]
    %v2858 = vld [vmem:[%s4 + $0x8] sm:$0xff]
    %v2859 = vld [vmem:[%s4 + $0x10] sm:$0xff]
    %v2860 = vld [vmem:[%s4 + $0x18] sm:$0xff]
    %v2861 = vld [vmem:[%s4 + $0x20] sm:$0xff]
    %v2862 = vld [vmem:[%s4 + $0x28] sm:$0xff]
    %v2863 = vld [vmem:[%s4 + $0x30] sm:$0xff]
    %v2864 = vld [vmem:[%s4 + $0x38] sm:$0xff]
    %v2865 = vld [vmem:[%s4 + $0x40] sm:$0xff]
    %v2866 = vld [vmem:[%s4 + $0x48] sm:$0xff]
    %v2867 = vld [vmem:[%s4 + $0x50] sm:$0xff]
    %v2868 = vld [vmem:[%s4 + $0x58] sm:$0xff]
    %v2869 = vld [vmem:[%s4 + $0x60] sm:$0xff]
    %v2870 = vld [vmem:[%s4 + $0x68] sm:$0xff]
    %v2871 = vld [vmem:[%s4 + $0x70] sm:$0xff]
    %v2872 = vld [vmem:[%s4 + $0x78] sm:$0xff]
    %v2873 = vld [vmem:[%s4 + $0x80] sm:$0xff]
    %v2874 = vld [vmem:[%s4 + $0x88] sm:$0xff]
    %v2875 = vld [vmem:[%s4 + $0x90] sm:$0xff]
    %v2876 = vld [vmem:[%s4 + $0x98] sm:$0xff]
    %v2877 = vld [vmem:[%s4 + $0xa0] sm:$0xff]
    %v2878 = vld [vmem:[%s4 + $0xa8] sm:$0xff]
    %v2879 = vld [vmem:[%s4 + $0xb0] sm:$0xff]
    %v2880 = vld [vmem:[%s4 + $0xb8] sm:$0xff]
    %v2881 = vld [vmem:[%s4 + $0xc0] sm:$0xff]
    %v2882 = vld [vmem:[%s4 + $0xc8] sm:$0xff]
    %v2883 = vld [vmem:[%s4 + $0xd0] sm:$0xff]
    %v2884 = vld [vmem:[%s4 + $0xd8] sm:$0xff]
    %v2885 = vld [vmem:[%s4 + $0xe0] sm:$0xff]
    %v2886 = vld [vmem:[%s4 + $0xe8] sm:$0xff]
    %v2887 = vld [vmem:[%s4 + $0xf0] sm:$0xff]
    %v2888 = vld [vmem:[%s4 + $0xf8] sm:$0xff]
    %v2889 = vld [vmem:[%s4 + $0x100] sm:$0xff]
    %v2890 = vld [vmem:[%s4 + $0x108] sm:$0xff]
    %v2891 = vld [vmem:[%s4 + $0x110] sm:$0xff]
    %v2892 = vld [vmem:[%s4 + $0x118] sm:$0xff]
    %v2893 = vld [vmem:[%s4 + $0x120] sm:$0xff]
    %v2894 = vld [vmem:[%s4 + $0x128] sm:$0xff]
    %v2895 = vld [vmem:[%s4 + $0x130] sm:$0xff]
    %v2896 = vld [vmem:[%s4 + $0x138] sm:$0xff]
    %v2897 = vld [vmem:[%s4 + $0x140] sm:$0xff]
    %v2898 = vld [vmem:[%s4 + $0x148] sm:$0xff]
    %v2899 = vld [vmem:[%s4 + $0x150] sm:$0xff]
    %v2900 = vld [vmem:[%s4 + $0x158] sm:$0xff]
    %v2901 = vld [vmem:[%s4 + $0x160] sm:$0xff]
    %v2902 = vld [vmem:[%s4 + $0x168] sm:$0xff]
    %v2903 = vld [vmem:[%s4 + $0x170] sm:$0xff]
    %v2904 = vld [vmem:[%s4 + $0x178] sm:$0xff]
    %v2905 = vld [vmem:[%s4 + $0x180] sm:$0xff]
    %v2906 = vld [vmem:[%s4 + $0x188] sm:$0xff]
    %v2907 = vld [vmem:[%s4 + $0x190] sm:$0xff]
    %v2908 = vld [vmem:[%s4 + $0x198] sm:$0xff]
    %v2909 = vld [vmem:[%s4 + $0x1a0] sm:$0xff]
    %v2910 = vld [vmem:[%s4 + $0x1a8] sm:$0xff]
    %v2911 = vld [vmem:[%s4 + $0x1b0] sm:$0xff]
    %v2912 = vld [vmem:[%s4 + $0x1b8] sm:$0xff]
    %v2913 = vld [vmem:[%s4 + $0x1c0] sm:$0xff]
    %v2914 = vld [vmem:[%s4 + $0x1c8] sm:$0xff]
    %v2915 = vld [vmem:[%s4 + $0x1d0] sm:$0xff]
    %v2916 = vld [vmem:[%s4 + $0x1d8] sm:$0xff]
    %v2917 = vld [vmem:[%s4 + $0x1e0] sm:$0xff]
    %v2918 = vld [vmem:[%s4 + $0x1e8] sm:$0xff]
    %v2919 = vld [vmem:[%s4 + $0x1f0] sm:$0xff]
    %v2920 = vld [vmem:[%s4 + $0x1f8] sm:$0xff]
    %v2921 = vld [vmem:[#allocation7] sm:$0x1]
    %v2923 = vlaneseq
    %v2924 = vshrl.u32 %v2923, 7
    %v2925 = vsub.s32 0, %v2924
    %v2926 = vrot.slane %v2921, %v2925
    %2928 = vmatprep.subr.mxu0 0.0
    %2929 = vmatpush1.msra.mxu0 %v2857
    %2930 = vmatprep.subr.mxu0 0.0
    %2931 = vmatpush1.msra.mxu0 %v2858
    %2932 = vmatprep.subr.mxu0 0.0
    %2933 = vmatpush1.msra.mxu0 %v2859
    %2934 = vmatprep.subr.mxu0 0.0
    %2935 = vmatpush1.msra.mxu0 %v2860
    %2936 = vmatprep.subr.mxu0 0.0
    %2937 = vmatpush1.msra.mxu0 %v2861
    %2938 = vmatprep.subr.mxu0 0.0
    %2939 = vmatpush1.msra.mxu0 %v2862
    %2940 = vmatprep.subr.mxu0 0.0
    %2941 = vmatpush1.msra.mxu0 %v2863
    %2942 = vmatprep.subr.mxu0 0.0
    %2943 = vmatpush1.msra.mxu0 %v2864
    %2944 = vmatprep.subr.mxu0 0.0
    %2945 = vmatpush1.msra.mxu0 %v2865
    %2946 = vmatprep.subr.mxu0 0.0
    %2947 = vmatpush1.msra.mxu0 %v2866
    %2948 = vmatprep.subr.mxu0 0.0
    %2949 = vmatpush1.msra.mxu0 %v2867
    %2950 = vmatprep.subr.mxu0 0.0
    %2951 = vmatpush1.msra.mxu0 %v2868
    %2952 = vmatprep.subr.mxu0 0.0
    %2953 = vmatpush1.msra.mxu0 %v2869
    %2954 = vmatprep.subr.mxu0 0.0
    %2955 = vmatpush1.msra.mxu0 %v2870
    %2956 = vmatprep.subr.mxu0 0.0
    %2957 = vmatpush1.msra.mxu0 %v2871
    %2958 = vmatprep.subr.mxu0 0.0
    %2959 = vmatpush1.msra.mxu0 %v2872
    %2960 = vmatprep.subr.mxu0 0.0
    %2961 = vmatpush1.msra.mxu0 %v2873
    %2962 = vmatprep.subr.mxu0 0.0
    %2963 = vmatpush1.msra.mxu0 %v2874
    %2964 = vmatprep.subr.mxu0 0.0
    %2965 = vmatpush1.msra.mxu0 %v2875
    %2966 = vmatprep.subr.mxu0 0.0
    %2967 = vmatpush1.msra.mxu0 %v2876
    %2968 = vmatprep.subr.mxu0 0.0
    %2969 = vmatpush1.msra.mxu0 %v2877
    %2970 = vmatprep.subr.mxu0 0.0
    %2971 = vmatpush1.msra.mxu0 %v2878
    %2972 = vmatprep.subr.mxu0 0.0
    %2973 = vmatpush1.msra.mxu0 %v2879
    %2974 = vmatprep.subr.mxu0 0.0
    %2975 = vmatpush1.msra.mxu0 %v2880
    %2976 = vmatprep.subr.mxu0 0.0
    %2977 = vmatpush1.msra.mxu0 %v2881
    %2978 = vmatprep.subr.mxu0 0.0
    %2979 = vmatpush1.msra.mxu0 %v2882
    %2980 = vmatprep.subr.mxu0 0.0
    %2981 = vmatpush1.msra.mxu0 %v2883
    %2982 = vmatprep.subr.mxu0 0.0
    %2983 = vmatpush1.msra.mxu0 %v2884
    %2984 = vmatprep.subr.mxu0 0.0
    %2985 = vmatpush1.msra.mxu0 %v2885
    %2986 = vmatprep.subr.mxu0 0.0
    %2987 = vmatpush1.msra.mxu0 %v2886
    %2988 = vmatprep.subr.mxu0 0.0
    %2989 = vmatpush1.msra.mxu0 %v2887
    %2990 = vmatprep.subr.mxu0 0.0
    %2991 = vmatpush1.msra.mxu0 %v2888
    %2992 = vmatprep.mubr.f32.mxu0 %v2854
    %2993 = vmatmul.mubr.f32.gmra.mrb[0].mxu0 %v2853
    %v2994 = vpop.f32.mrb[0].mxu0
    %v2995 = vadd.f32 %v2926, %v2994
    %v2996 = vpop.f32.mrb[0].mxu0
    %2997 = vdwg.mxu0
    %2998 = vmatprep.subr.mxu0 0.0
    %2999 = vmatpush1.msra.mxu0 %v2889
    %3000 = vmatprep.subr.mxu0 0.0
    %3001 = vmatpush1.msra.mxu0 %v2890
    %3002 = vmatprep.subr.mxu0 0.0
    %3003 = vmatpush1.msra.mxu0 %v2891
    %3004 = vmatprep.subr.mxu0 0.0
    %3005 = vmatpush1.msra.mxu0 %v2892
    %3006 = vmatprep.subr.mxu0 0.0
    %3007 = vmatpush1.msra.mxu0 %v2893
    %3008 = vmatprep.subr.mxu0 0.0
    %3009 = vmatpush1.msra.mxu0 %v2894
    %3010 = vmatprep.subr.mxu0 0.0
    %3011 = vmatpush1.msra.mxu0 %v2895
    %3012 = vmatprep.subr.mxu0 0.0
    %3013 = vmatpush1.msra.mxu0 %v2896
    %3014 = vmatprep.subr.mxu0 0.0
    %3015 = vmatpush1.msra.mxu0 %v2897
    %3016 = vmatprep.subr.mxu0 0.0
    %3017 = vmatpush1.msra.mxu0 %v2898
    %3018 = vmatprep.subr.mxu0 0.0
    %3019 = vmatpush1.msra.mxu0 %v2899
    %3020 = vmatprep.subr.mxu0 0.0
    %3021 = vmatpush1.msra.mxu0 %v2900
    %3022 = vmatprep.subr.mxu0 0.0
    %3023 = vmatpush1.msra.mxu0 %v2901
    %3024 = vmatprep.subr.mxu0 0.0
    %3025 = vmatpush1.msra.mxu0 %v2902
    %3026 = vmatprep.subr.mxu0 0.0
    %3027 = vmatpush1.msra.mxu0 %v2903
    %3028 = vmatprep.subr.mxu0 0.0
    %3029 = vmatpush1.msra.mxu0 %v2904
    %3030 = vmatprep.subr.mxu0 0.0
    %3031 = vmatpush1.msra.mxu0 %v2905
    %3032 = vmatprep.subr.mxu0 0.0
    %3033 = vmatpush1.msra.mxu0 %v2906
    %3034 = vmatprep.subr.mxu0 0.0
    %3035 = vmatpush1.msra.mxu0 %v2907
    %3036 = vmatprep.subr.mxu0 0.0
    %3037 = vmatpush1.msra.mxu0 %v2908
    %3038 = vmatprep.subr.mxu0 0.0
    %3039 = vmatpush1.msra.mxu0 %v2909
    %3040 = vmatprep.subr.mxu0 0.0
    %3041 = vmatpush1.msra.mxu0 %v2910
    %3042 = vmatprep.subr.mxu0 0.0
    %3043 = vmatpush1.msra.mxu0 %v2911
    %3044 = vmatprep.subr.mxu0 0.0
    %3045 = vmatpush1.msra.mxu0 %v2912
    %3046 = vmatprep.subr.mxu0 0.0
    %3047 = vmatpush1.msra.mxu0 %v2913
    %3048 = vmatprep.subr.mxu0 0.0
    %3049 = vmatpush1.msra.mxu0 %v2914
    %3050 = vmatprep.subr.mxu0 0.0
    %3051 = vmatpush1.msra.mxu0 %v2915
    %3052 = vmatprep.subr.mxu0 0.0
    %3053 = vmatpush1.msra.mxu0 %v2916
    %3054 = vmatprep.subr.mxu0 0.0
    %3055 = vmatpush1.msra.mxu0 %v2917
    %3056 = vmatprep.subr.mxu0 0.0
    %3057 = vmatpush1.msra.mxu0 %v2918
    %3058 = vmatprep.subr.mxu0 0.0
    %3059 = vmatpush1.msra.mxu0 %v2919
    %3060 = vmatprep.subr.mxu0 0.0
    %3061 = vmatpush1.msra.mxu0 %v2920
    %3062 = vmatprep.mubr.f32.mxu0 %v2856
    %3063 = vmatmul.mubr.f32.gmra.mrb[0].mxu0 %v2855
    %v3064 = vpop.f32.mrb[0].mxu0
    %v3065 = vadd.f32 %v2995, %v3064
    %v3066 = vpop.f32.mrb[0].mxu0
    %3067 = vdwg.mxu0
    %vm3068 = vcmask 64512
    %3069 = vst.msk [vmem:[%s6] sm:$0xff] %vm3068, %v3065
    // Predicated region
    $region42: #{timm_module_forward.1} parent=1 // pred_check
      _
    $region43: #{timm_module_forward.1} parent=1 // pred_check_branch
      %3071 = sbr.rel (0) target = $region45
    $region44: #{timm_module_forward.1} parent=1 // pred_region
      _
    $region45: #{timm_module_forward.1} parent=1 // pred_fallthru
      _
    // Predicated region
    $region46: #{timm_module_forward.1} parent=1 // pred_check
      _
    $region47: #{timm_module_forward.1} parent=1 // pred_check_branch
      %3073 = sbr.rel (0) target = $region49
    $region48: #{timm_module_forward.1} parent=1 // pred_region
      _
    $region49: #{timm_module_forward.1} parent=1 // pred_fallthru
      _
    %3074 = vsyncpa [#allocation3], 1
    %3075 = vsyncpa [#allocation5], 1
    %3076 = vsyncpa [#allocation8], 1

</llo_original>
